<compile_context>
chip_gen: v7x
topology: tpu7x:2x2x1
jax: 0.10.0
libtpu: 0.0.40
codegen_flags: <defaults>
</compile_context>

<pallas_src>
import math

import jax
import jax.numpy as jnp
from jax import lax
from jax.experimental import pallas as pl
from jax.experimental.pallas import tpu as pltpu


# -----------------------------------------------------------------------------
# Pallas kernel factory: all layers + both directions in ONE invocation.
#
# Gate-column layout (width H each):  [i_f, i_b, f_f, f_b, o_f, o_b, g_f, g_b]
# Combined hidden carry at step s:    h = [h_fwd(time s) | h_bwd(time T-1-s)]   (B, 2H)
# -----------------------------------------------------------------------------
def _make_bilstm_kernel(L, T, B, H):
    H2, H4, H6, H8 = 2 * H, 4 * H, 6 * H, 8 * H
    unroll = True if T <= 32 else 8          # full unroll for short sequences

    def kernel(*refs):
        if L > 1:
            (gx_ref, w_blk_ref, w_same_ref, w_swap_ref, b_rest_ref,
             out_f_ref, out_b_ref, hs_step, hs_rev, gates_buf) = refs
        else:
            gx_ref, w_blk_ref, out_f_ref, out_b_ref = refs
            hs_step = hs_rev = gates_buf = None

        def run_layer(gsrc_ref, w_blk_l, is_last):
            # gsrc_ref[s]  : (B, 8H) input projection for combined step s (bias folded)
            # w_blk_l      : (2H, 8H) block-diagonal recurrent weight (fwd | bwd)
            def step(s, carry):
                h, c = carry
                g = gsrc_ref[s] + jnp.dot(h, w_blk_l,
                                          preferred_element_type=jnp.float32)
                sg = jax.nn.sigmoid(g[:, :H6])          # [i_f i_b f_f f_b o_f o_b]
                gg = jnp.tanh(g[:, H6:])                # [g_f g_b]
                c = sg[:, H2:H4] * c + sg[:, :H2] * gg  # (B, 2H) combined cell state
                h = sg[:, H4:H6] * jnp.tanh(c)          # (B, 2H) combined hidden
                tb = T - 1 - s
                if is_last:
                    out_f_ref[s] = h[:, :H]             # forward hidden at time s
                    out_b_ref[tb] = h[:, H:]            # backward hidden at time T-1-s
                else:
                    hs_step[s] = h                      # step-ordered combined hidden
                    hs_rev[tb] = h                      # time-mirrored copy
                return h, c

            z = jnp.zeros((B, H2), jnp.float32)
            lax.fori_loop(0, T, step, (z, z), unroll=unroll)

        # layer 0: projection was hoisted to the wrapper (gx_ref already in VMEM)
        run_layer(gx_ref, w_blk_ref[0], L == 1)

        # layers 1..L-1: bulk input projection, then the recurrence
        for layer in range(1, L):
            hstep2 = hs_step[...].reshape(T * B, H2)
            hrev2 = hs_rev[...].reshape(T * B, H2)
            proj = (jnp.dot(hstep2, w_same_ref[layer - 1],
                            preferred_element_type=jnp.float32)
                    + jnp.dot(hrev2, w_swap_ref[layer - 1],
                              preferred_element_type=jnp.float32)
                    + b_rest_ref[layer - 1])
            gates_buf[...] = proj.reshape(T, B, H8)
            run_layer(gates_buf, w_blk_ref[layer], layer == L - 1)

    return kernel


def bilstm_encode_tbd(gx, w_blk, w_same=None, w_swap=None, b_rest=None):
    T, B, H8 = gx.shape
    L = w_blk.shape[0]
    H = H8 // 8
    kernel = _make_bilstm_kernel(L, T, B, H)

    out_shape = (jax.ShapeDtypeStruct((T, B, H), jnp.float32),
                 jax.ShapeDtypeStruct((T, B, H), jnp.float32))

    if L > 1:
        args = (gx, w_blk, w_same, w_swap, b_rest)
        scratch = [pltpu.VMEM((T, B, 2 * H), jnp.float32),   # hs_step
                   pltpu.VMEM((T, B, 2 * H), jnp.float32),   # hs_rev
                   pltpu.VMEM((T, B, 8 * H), jnp.float32)]   # gates of current layer
        extra_w = w_same.size + w_swap.size + b_rest.size
        extra_s = 2 * T * B * 2 * H + T * B * 8 * H
    else:
        args = (gx, w_blk)
        scratch = []
        extra_w = 0
        extra_s = 0

    in_specs = [pl.BlockSpec(memory_space=pltpu.MemorySpace.VMEM) for _ in args]
    out_specs = (pl.BlockSpec(memory_space=pltpu.MemorySpace.VMEM),
                 pl.BlockSpec(memory_space=pltpu.MemorySpace.VMEM))

    # Raise the scoped-VMEM limit (with headroom) only when the resident footprint needs it.
    resident = 4 * (gx.size + 2 * T * B * H + w_blk.size + extra_w + extra_s)
    needed = int(resident * 1.5) + (1 << 20)
    if needed > 16 * 1024 * 1024:
        cparams = pltpu.CompilerParams(
            vmem_limit_bytes=min(max(needed, 32 * 1024 * 1024), 128 * 1024 * 1024))
    else:
        cparams = pltpu.CompilerParams()

    return pl.pallas_call(
        kernel,
        out_shape=out_shape,
        in_specs=in_specs,
        out_specs=out_specs,
        scratch_shapes=scratch,
        compiler_params=cparams,
    )(*args)


# -----------------------------------------------------------------------------
# Parameter construction (deterministic, mirrors MultiLSTMEncode.__init__).
# Weights are pre-transposed / pre-fused / gate-repacked at init time.
# -----------------------------------------------------------------------------
def _place_cols(wf, wb):
    """wf, wb: (..., 4H) in PyTorch gate order [i, f, g, o] (either may be zeros).
    Returns (..., 8H) in layout [i_f, i_b, f_f, f_b, o_f, o_b, g_f, g_b]."""
    iF, fF, gF, oF = jnp.split(wf, 4, axis=-1)
    iB, fB, gB, oB = jnp.split(wb, 4, axis=-1)
    return jnp.concatenate([iF, iB, fF, fB, oF, oB, gF, gB], axis=-1)


def init_params(key, w_size, w_embed_dim, t_size, t_embed_dim,
                hidden_size, layer_num, scope=1.0):
    H = hidden_size // 2
    k = 1.0 / math.sqrt(H)
    keys = jax.random.split(key, 2 + layer_num * 8)

    w_embed = jax.random.uniform(keys[0], (w_size, w_embed_dim),
                                 jnp.float32, -scope, scope)
    t_embed = jax.random.uniform(keys[1], (t_size, t_embed_dim),
                                 jnp.float32, -scope, scope)

    zeros4 = jnp.zeros((H, 4 * H), jnp.float32)
    ki = 2
    raw = []
    w_blk_layers = []
    w_same_layers, w_swap_layers, b_rest_layers = [], [], []
    w_ih0 = b0 = None
    for layer in range(layer_num):
        d_in = (w_embed_dim + t_embed_dim) if layer == 0 else hidden_size
        per_dir = []
        for _direction in range(2):            # forward, backward
            w_ih = jax.random.uniform(keys[ki + 0], (4 * H, d_in), jnp.float32, -k, k)
            w_hh = jax.random.uniform(keys[ki + 1], (4 * H, H), jnp.float32, -k, k)
            b_ih = jax.random.uniform(keys[ki + 2], (4 * H,), jnp.float32, -k, k)
            b_hh = jax.random.uniform(keys[ki + 3], (4 * H,), jnp.float32, -k, k)
            ki += 4
            per_dir.append((w_ih, w_hh, b_ih + b_hh))   # fold biases (exact)
        raw.append(tuple(per_dir))
        (wf_ih, wf_hh, bf), (wb_ih, wb_hh, bb) = per_dir

        # block-diagonal recurrent weight: rows[:H] -> fwd slots, rows[H:] -> bwd slots
        w_blk = jnp.concatenate([_place_cols(wf_hh.T, zeros4),
                                 _place_cols(zeros4, wb_hh.T)], axis=0)      # (2H, 8H)
        w_blk_layers.append(w_blk)
        b_comb = _place_cols(bf[None, :], bb[None, :])                        # (1, 8H)

        if layer == 0:
            w_ih0 = _place_cols(wf_ih.T, wb_ih.T)                             # (D_in, 8H)
            b0 = b_comb
        else:
            wfT, wbT = wf_ih.T, wb_ih.T                                       # (2H, 4H)
            # proj_comb[s] = hs_step[s] @ w_same + hs_rev[s] @ w_swap
            w_same = jnp.concatenate([_place_cols(wfT[:H], zeros4),
                                      _place_cols(zeros4, wbT[H:])], axis=0)  # (2H, 8H)
            w_swap = jnp.concatenate([_place_cols(zeros4, wbT[:H]),
                                      _place_cols(wfT[H:], zeros4)], axis=0)  # (2H, 8H)
            w_same_layers.append(w_same)
            w_swap_layers.append(w_swap)
            b_rest_layers.append(b_comb)

    params = {
        "w_embed": w_embed,
        "t_embed": t_embed,
        "w_ih0": w_ih0,                         # (D_in, 8H), interleaved gate layout
        "b0": b0,                               # (1, 8H)
        "w_blk": jnp.stack(w_blk_layers),       # (L, 2H, 8H)
        "raw": tuple(raw),                      # unpacked weights, for the reference
    }
    if layer_num > 1:
        params["w_same"] = jnp.stack(w_same_layers)     # (L-1, 2H, 8H)
        params["w_swap"] = jnp.stack(w_swap_layers)     # (L-1, 2H, 8H)
        params["b_rest"] = jnp.stack(b_rest_layers)     # (L-1, 1, 8H)
    return params


# -----------------------------------------------------------------------------
# Forward pass: embed(words) ++ embed(tags) -> multi-layer BiLSTM -> encode
# -----------------------------------------------------------------------------
@jax.jit
def multi_lstm_encode(words, tags, params):
    # Embedding gathers stay in XLA; indices (not f32 activations) are transposed.
    w_emb = jnp.take(params["w_embed"], words.T, axis=0)     # (T, B, w_dim)
    t_emb = jnp.take(params["t_embed"], tags.T, axis=0)      # (T, B, t_dim)
    x = jnp.concatenate([w_emb, t_emb], axis=-1)             # (T, B, D_in)
    T, B, D = x.shape
    H8 = params["w_ih0"].shape[1]
    H = H8 // 8

    # Hoisted layer-0 input projection for BOTH directions: one big matmul.
    proj = jnp.dot(x.reshape(T * B, D), params["w_ih0"],
                   preferred_element_type=jnp.float32,
                   precision=lax.Precision.HIGHEST) + params["b0"]
    proj = proj.reshape(T, B, H8)

    # Combined-step gates: fwd slots from time s, bwd slots from time T-1-s.
    fwd_mask = jnp.tile(
        jnp.concatenate([jnp.ones((H,), jnp.bool_), jnp.zeros((H,), jnp.bool_)]), 4
    ).reshape(1, 1, H8)
    gx = jnp.where(fwd_mask, proj, proj[::-1])               # (T, B, 8H)

    out_f, out_b = bilstm_encode_tbd(
        gx, params["w_blk"], params.get("w_same"),
        params.get("w_swap"), params.get("b_rest"))
    enc = jnp.concatenate([out_f, out_b], axis=-1)           # (T, B, 2H)
    return jnp.transpose(enc, (1, 0, 2))                     # (B, T, hidden_size)


# -----------------------------------------------------------------------------
# Pure-JAX reference (standard per-direction LSTM on the RAW weights).
# -----------------------------------------------------------------------------
def reference_encode(words, tags, params):
    hp = lax.Precision.HIGHEST
    w_emb = params["w_embed"][words]                          # (B, T, w_dim)
    t_emb = params["t_embed"][tags]                           # (B, T, t_dim)
    inp = jnp.concatenate([w_emb, t_emb], axis=-1)            # (B, T, D)
    B, T, _ = inp.shape

    def run_dir(x_seq, w_ih, w_hh, b, reverse):
        Hh = w_hh.shape[1]
        h = jnp.zeros((B, Hh), jnp.float32)
        c = jnp.zeros((B, Hh), jnp.float32)
        outs = [None] * T
        order = range(T - 1, -1, -1) if reverse else range(T)
        for t in order:
            g = (jnp.dot(x_seq[:, t], w_ih.T, precision=hp)
                 + jnp.dot(h, w_hh.T, precision=hp) + b)
            i = jax.nn.sigmoid(g[:, :Hh])
            f = jax.nn.sigmoid(g[:, Hh:2 * Hh])
            gg = jnp.tanh(g[:, 2 * Hh:3 * Hh])
            o = jax.nn.sigmoid(g[:, 3 * Hh:])
            c = f * c + i * gg
            h = o * jnp.tanh(c)
            outs[t] = h
        return jnp.stack(outs, axis=1)                        # (B, T, H)

    for (fw, bw) in params["raw"]:
        of = run_dir(inp, *fw, reverse=False)
        ob = run_dir(inp, *bw, reverse=True)
        inp = jnp.concatenate([of, ob], axis=-1)              # (B, T, 2H)
    return inp


if __name__ == "__main__":
    # small, forward-consistent shapes
    w_size, t_size = 50, 20
    w_embed_dim, t_embed_dim = 16, 16
    hidden_size = 32          # per-direction H = 16, 8H = 128 (lane-aligned gate width)
    layer_num = 2
    batch, seq = 2, 8

    key = jax.random.PRNGKey(0)
    k_params, k_words, k_tags = jax.random.split(key, 3)

    params = init_params(k_params, w_size, w_embed_dim, t_size, t_embed_dim,
                         hidden_size, layer_num, scope=1.0)

    words = jax.random.randint(k_words, (batch, seq), 0, w_size, dtype=jnp.int32)
    tags = jax.random.randint(k_tags, (batch, seq), 0, t_size, dtype=jnp.int32)

    encode = multi_lstm_encode(words, tags, params)
    encode = jax.block_until_ready(encode)

    assert encode.shape == (batch, seq, hidden_size), encode.shape
    assert encode.dtype == jnp.float32
    assert bool(jnp.all(jnp.isfinite(encode)))

    ref = reference_encode(words, tags, params)
    assert bool(jnp.allclose(encode, ref, atol=2e-3, rtol=2e-3)), \
        float(jnp.max(jnp.abs(encode - ref)))

    print("KERNEL_OK")
</pallas_src>

<mosaic_0001>
module attributes {stable_mosaic.version = 11 : i64} {
  func.func @kernel(%arg0: memref<8x2x128xf32, #tpu.memory_space<vmem>>, %arg1: memref<2x32x128xf32, #tpu.memory_space<vmem>>, %arg2: memref<1x32x128xf32, #tpu.memory_space<vmem>>, %arg3: memref<1x32x128xf32, #tpu.memory_space<vmem>>, %arg4: memref<1x1x128xf32, #tpu.memory_space<vmem>>, %arg5: memref<8x2x16xf32, #tpu.memory_space<vmem>>, %arg6: memref<8x2x16xf32, #tpu.memory_space<vmem>>, %arg7: memref<8x2x32xf32, #tpu.memory_space<vmem>>, %arg8: memref<8x2x32xf32, #tpu.memory_space<vmem>>, %arg9: memref<8x2x128xf32, #tpu.memory_space<vmem>>) attributes {dimension_semantics = [], scalar_prefetch = 0 : i64, scratch_operands = 3 : i64, tpu.core_type = #tpu.core_type<tc>} {
    %c0 = arith.constant 0 : index
    %c0_0 = arith.constant 0 : index
    %c0_1 = arith.constant 0 : index
    %0 = vector.load %arg1[%c0, %c0_0, %c0_1] : memref<2x32x128xf32, #tpu.memory_space<vmem>>, vector<1x32x128xf32>
    %1 = vector.shape_cast %0 : vector<1x32x128xf32> to vector<32x128xf32>
    %cst = arith.constant 0.000000e+00 : f32
    %2 = vector.broadcast %cst : f32 to vector<2x32xf32>
    %c0_i32 = arith.constant 0 : i32
    %3 = arith.index_cast %c0_i32 : i32 to index
    %c0_2 = arith.constant 0 : index
    %c0_3 = arith.constant 0 : index
    %4 = vector.load %arg0[%3, %c0_2, %c0_3] : memref<8x2x128xf32, #tpu.memory_space<vmem>>, vector<1x2x128xf32>
    %5 = vector.shape_cast %4 : vector<1x2x128xf32> to vector<2x128xf32>
    %cst_4 = arith.constant dense<0.000000e+00> : vector<2x128xf32>
    %6 = tpu.matmul %2, %1, %cst_4 {dimension_numbers = #tpu.dot_dimension_numbers<[1], [0], [0], [1], [0, 0, 1, 1], [], []>} : vector<2x32xf32>, vector<32x128xf32>, vector<2x128xf32> -> vector<2x128xf32>
    %7 = arith.addf %5, %6 : vector<2x128xf32>
    %8 = vector.extract_strided_slice %7 {offsets = [0, 0], sizes = [2, 96], strides = [1, 1]} : vector<2x128xf32> to vector<2x96xf32>
    %9 = arith.negf %8 : vector<2x96xf32>
    %10 = math.exp %9 : vector<2x96xf32>
    %cst_5 = arith.constant 1.000000e+00 : f32
    %11 = vector.broadcast %cst_5 : f32 to vector<2x96xf32>
    %12 = arith.addf %11, %10 : vector<2x96xf32>
    %13 = arith.divf %11, %12 : vector<2x96xf32>
    %14 = vector.extract_strided_slice %7 {offsets = [0, 96], sizes = [2, 32], strides = [1, 1]} : vector<2x128xf32> to vector<2x32xf32>
    %15 = math.tanh %14 : vector<2x32xf32>
    %16 = vector.extract_strided_slice %13 {offsets = [0, 32], sizes = [2, 32], strides = [1, 1]} : vector<2x96xf32> to vector<2x32xf32>
    %17 = arith.mulf %16, %2 : vector<2x32xf32>
    %18 = vector.extract_strided_slice %13 {offsets = [0, 0], sizes = [2, 32], strides = [1, 1]} : vector<2x96xf32> to vector<2x32xf32>
    %19 = arith.mulf %18, %15 : vector<2x32xf32>
    %20 = arith.addf %17, %19 : vector<2x32xf32>
    %21 = vector.extract_strided_slice %13 {offsets = [0, 64], sizes = [2, 32], strides = [1, 1]} : vector<2x96xf32> to vector<2x32xf32>
    %22 = math.tanh %20 : vector<2x32xf32>
    %23 = arith.mulf %21, %22 : vector<2x32xf32>
    %c7_i32 = arith.constant 7 : i32
    %24 = arith.subi %c7_i32, %c0_i32 : i32
    %25 = arith.index_cast %c0_i32 : i32 to index
    %c0_6 = arith.constant 0 : index
    %c0_7 = arith.constant 0 : index
    %26 = vector.load %arg7[%25, %c0_6, %c0_7] : memref<8x2x32xf32, #tpu.memory_space<vmem>>, vector<1x2x32xf32>
    %27 = vector.shape_cast %26 : vector<1x2x32xf32> to vector<2x32xf32>
    %28 = vector.shape_cast %23 : vector<2x32xf32> to vector<1x2x32xf32>
    tpu.vector_store %arg7[%25, %c0_6, %c0_7], %28 {strides = array<i32>} : memref<8x2x32xf32, #tpu.memory_space<vmem>>, vector<1x2x32xf32>,
    %29 = arith.index_cast %24 : i32 to index
    %c0_8 = arith.constant 0 : index
    %c0_9 = arith.constant 0 : index
    %30 = vector.load %arg8[%29, %c0_8, %c0_9] : memref<8x2x32xf32, #tpu.memory_space<vmem>>, vector<1x2x32xf32>
    %31 = vector.shape_cast %30 : vector<1x2x32xf32> to vector<2x32xf32>
    %32 = vector.shape_cast %23 : vector<2x32xf32> to vector<1x2x32xf32>
    tpu.vector_store %arg8[%29, %c0_8, %c0_9], %32 {strides = array<i32>} : memref<8x2x32xf32, #tpu.memory_space<vmem>>, vector<1x2x32xf32>,
    %c1_i32 = arith.constant 1 : i32
    %33 = arith.index_cast %c1_i32 : i32 to index
    %c0_10 = arith.constant 0 : index
    %c0_11 = arith.constant 0 : index
    %34 = vector.load %arg0[%33, %c0_10, %c0_11] : memref<8x2x128xf32, #tpu.memory_space<vmem>>, vector<1x2x128xf32>
    %35 = vector.shape_cast %34 : vector<1x2x128xf32> to vector<2x128xf32>
    %cst_12 = arith.constant dense<0.000000e+00> : vector<2x128xf32>
    %36 = tpu.matmul %23, %1, %cst_12 {dimension_numbers = #tpu.dot_dimension_numbers<[1], [0], [0], [1], [0, 0, 1, 1], [], []>} : vector<2x32xf32>, vector<32x128xf32>, vector<2x128xf32> -> vector<2x128xf32>
    %37 = arith.addf %35, %36 : vector<2x128xf32>
    %38 = vector.extract_strided_slice %37 {offsets = [0, 0], sizes = [2, 96], strides = [1, 1]} : vector<2x128xf32> to vector<2x96xf32>
    %39 = arith.negf %38 : vector<2x96xf32>
    %40 = math.exp %39 : vector<2x96xf32>
    %cst_13 = arith.constant 1.000000e+00 : f32
    %41 = vector.broadcast %cst_13 : f32 to vector<2x96xf32>
    %42 = arith.addf %41, %40 : vector<2x96xf32>
    %43 = arith.divf %41, %42 : vector<2x96xf32>
    %44 = vector.extract_strided_slice %37 {offsets = [0, 96], sizes = [2, 32], strides = [1, 1]} : vector<2x128xf32> to vector<2x32xf32>
    %45 = math.tanh %44 : vector<2x32xf32>
    %46 = vector.extract_strided_slice %43 {offsets = [0, 32], sizes = [2, 32], strides = [1, 1]} : vector<2x96xf32> to vector<2x32xf32>
    %47 = arith.mulf %46, %20 : vector<2x32xf32>
    %48 = vector.extract_strided_slice %43 {offsets = [0, 0], sizes = [2, 32], strides = [1, 1]} : vector<2x96xf32> to vector<2x32xf32>
    %49 = arith.mulf %48, %45 : vector<2x32xf32>
    %50 = arith.addf %47, %49 : vector<2x32xf32>
    %51 = vector.extract_strided_slice %43 {offsets = [0, 64], sizes = [2, 32], strides = [1, 1]} : vector<2x96xf32> to vector<2x32xf32>
    %52 = math.tanh %50 : vector<2x32xf32>
    %53 = arith.mulf %51, %52 : vector<2x32xf32>
    %c7_i32_14 = arith.constant 7 : i32
    %54 = arith.subi %c7_i32_14, %c1_i32 : i32
    %55 = arith.index_cast %c1_i32 : i32 to index
    %c0_15 = arith.constant 0 : index
    %c0_16 = arith.constant 0 : index
    %56 = vector.load %arg7[%55, %c0_15, %c0_16] : memref<8x2x32xf32, #tpu.memory_space<vmem>>, vector<1x2x32xf32>
    %57 = vector.shape_cast %56 : vector<1x2x32xf32> to vector<2x32xf32>
    %58 = vector.shape_cast %53 : vector<2x32xf32> to vector<1x2x32xf32>
    tpu.vector_store %arg7[%55, %c0_15, %c0_16], %58 {strides = array<i32>} : memref<8x2x32xf32, #tpu.memory_space<vmem>>, vector<1x2x32xf32>,
    %59 = arith.index_cast %54 : i32 to index
    %c0_17 = arith.constant 0 : index
    %c0_18 = arith.constant 0 : index
    %60 = vector.load %arg8[%59, %c0_17, %c0_18] : memref<8x2x32xf32, #tpu.memory_space<vmem>>, vector<1x2x32xf32>
    %61 = vector.shape_cast %60 : vector<1x2x32xf32> to vector<2x32xf32>
    %62 = vector.shape_cast %53 : vector<2x32xf32> to vector<1x2x32xf32>
    tpu.vector_store %arg8[%59, %c0_17, %c0_18], %62 {strides = array<i32>} : memref<8x2x32xf32, #tpu.memory_space<vmem>>, vector<1x2x32xf32>,
    %c2_i32 = arith.constant 2 : i32
    %63 = arith.index_cast %c2_i32 : i32 to index
    %c0_19 = arith.constant 0 : index
    %c0_20 = arith.constant 0 : index
    %64 = vector.load %arg0[%63, %c0_19, %c0_20] : memref<8x2x128xf32, #tpu.memory_space<vmem>>, vector<1x2x128xf32>
    %65 = vector.shape_cast %64 : vector<1x2x128xf32> to vector<2x128xf32>
    %cst_21 = arith.constant dense<0.000000e+00> : vector<2x128xf32>
    %66 = tpu.matmul %53, %1, %cst_21 {dimension_numbers = #tpu.dot_dimension_numbers<[1], [0], [0], [1], [0, 0, 1, 1], [], []>} : vector<2x32xf32>, vector<32x128xf32>, vector<2x128xf32> -> vector<2x128xf32>
    %67 = arith.addf %65, %66 : vector<2x128xf32>
    %68 = vector.extract_strided_slice %67 {offsets = [0, 0], sizes = [2, 96], strides = [1, 1]} : vector<2x128xf32> to vector<2x96xf32>
    %69 = arith.negf %68 : vector<2x96xf32>
    %70 = math.exp %69 : vector<2x96xf32>
    %cst_22 = arith.constant 1.000000e+00 : f32
    %71 = vector.broadcast %cst_22 : f32 to vector<2x96xf32>
    %72 = arith.addf %71, %70 : vector<2x96xf32>
    %73 = arith.divf %71, %72 : vector<2x96xf32>
    %74 = vector.extract_strided_slice %67 {offsets = [0, 96], sizes = [2, 32], strides = [1, 1]} : vector<2x128xf32> to vector<2x32xf32>
    %75 = math.tanh %74 : vector<2x32xf32>
    %76 = vector.extract_strided_slice %73 {offsets = [0, 32], sizes = [2, 32], strides = [1, 1]} : vector<2x96xf32> to vector<2x32xf32>
    %77 = arith.mulf %76, %50 : vector<2x32xf32>
    %78 = vector.extract_strided_slice %73 {offsets = [0, 0], sizes = [2, 32], strides = [1, 1]} : vector<2x96xf32> to vector<2x32xf32>
    %79 = arith.mulf %78, %75 : vector<2x32xf32>
    %80 = arith.addf %77, %79 : vector<2x32xf32>
    %81 = vector.extract_strided_slice %73 {offsets = [0, 64], sizes = [2, 32], strides = [1, 1]} : vector<2x96xf32> to vector<2x32xf32>
    %82 = math.tanh %80 : vector<2x32xf32>
    %83 = arith.mulf %81, %82 : vector<2x32xf32>
    %c7_i32_23 = arith.constant 7 : i32
    %84 = arith.subi %c7_i32_23, %c2_i32 : i32
    %85 = arith.index_cast %c2_i32 : i32 to index
    %c0_24 = arith.constant 0 : index
    %c0_25 = arith.constant 0 : index
    %86 = vector.load %arg7[%85, %c0_24, %c0_25] : memref<8x2x32xf32, #tpu.memory_space<vmem>>, vector<1x2x32xf32>
    %87 = vector.shape_cast %86 : vector<1x2x32xf32> to vector<2x32xf32>
    %88 = vector.shape_cast %83 : vector<2x32xf32> to vector<1x2x32xf32>
    tpu.vector_store %arg7[%85, %c0_24, %c0_25], %88 {strides = array<i32>} : memref<8x2x32xf32, #tpu.memory_space<vmem>>, vector<1x2x32xf32>,
    %89 = arith.index_cast %84 : i32 to index
    %c0_26 = arith.constant 0 : index
    %c0_27 = arith.constant 0 : index
    %90 = vector.load %arg8[%89, %c0_26, %c0_27] : memref<8x2x32xf32, #tpu.memory_space<vmem>>, vector<1x2x32xf32>
    %91 = vector.shape_cast %90 : vector<1x2x32xf32> to vector<2x32xf32>
    %92 = vector.shape_cast %83 : vector<2x32xf32> to vector<1x2x32xf32>
    tpu.vector_store %arg8[%89, %c0_26, %c0_27], %92 {strides = array<i32>} : memref<8x2x32xf32, #tpu.memory_space<vmem>>, vector<1x2x32xf32>,
    %c3_i32 = arith.constant 3 : i32
    %93 = arith.index_cast %c3_i32 : i32 to index
    %c0_28 = arith.constant 0 : index
    %c0_29 = arith.constant 0 : index
    %94 = vector.load %arg0[%93, %c0_28, %c0_29] : memref<8x2x128xf32, #tpu.memory_space<vmem>>, vector<1x2x128xf32>
    %95 = vector.shape_cast %94 : vector<1x2x128xf32> to vector<2x128xf32>
    %cst_30 = arith.constant dense<0.000000e+00> : vector<2x128xf32>
    %96 = tpu.matmul %83, %1, %cst_30 {dimension_numbers = #tpu.dot_dimension_numbers<[1], [0], [0], [1], [0, 0, 1, 1], [], []>} : vector<2x32xf32>, vector<32x128xf32>, vector<2x128xf32> -> vector<2x128xf32>
    %97 = arith.addf %95, %96 : vector<2x128xf32>
    %98 = vector.extract_strided_slice %97 {offsets = [0, 0], sizes = [2, 96], strides = [1, 1]} : vector<2x128xf32> to vector<2x96xf32>
    %99 = arith.negf %98 : vector<2x96xf32>
    %100 = math.exp %99 : vector<2x96xf32>
    %cst_31 = arith.constant 1.000000e+00 : f32
    %101 = vector.broadcast %cst_31 : f32 to vector<2x96xf32>
    %102 = arith.addf %101, %100 : vector<2x96xf32>
    %103 = arith.divf %101, %102 : vector<2x96xf32>
    %104 = vector.extract_strided_slice %97 {offsets = [0, 96], sizes = [2, 32], strides = [1, 1]} : vector<2x128xf32> to vector<2x32xf32>
    %105 = math.tanh %104 : vector<2x32xf32>
    %106 = vector.extract_strided_slice %103 {offsets = [0, 32], sizes = [2, 32], strides = [1, 1]} : vector<2x96xf32> to vector<2x32xf32>
    %107 = arith.mulf %106, %80 : vector<2x32xf32>
    %108 = vector.extract_strided_slice %103 {offsets = [0, 0], sizes = [2, 32], strides = [1, 1]} : vector<2x96xf32> to vector<2x32xf32>
    %109 = arith.mulf %108, %105 : vector<2x32xf32>
    %110 = arith.addf %107, %109 : vector<2x32xf32>
    %111 = vector.extract_strided_slice %103 {offsets = [0, 64], sizes = [2, 32], strides = [1, 1]} : vector<2x96xf32> to vector<2x32xf32>
    %112 = math.tanh %110 : vector<2x32xf32>
    %113 = arith.mulf %111, %112 : vector<2x32xf32>
    %c7_i32_32 = arith.constant 7 : i32
    %114 = arith.subi %c7_i32_32, %c3_i32 : i32
    %115 = arith.index_cast %c3_i32 : i32 to index
    %c0_33 = arith.constant 0 : index
    %c0_34 = arith.constant 0 : index
    %116 = vector.load %arg7[%115, %c0_33, %c0_34] : memref<8x2x32xf32, #tpu.memory_space<vmem>>, vector<1x2x32xf32>
    %117 = vector.shape_cast %116 : vector<1x2x32xf32> to vector<2x32xf32>
    %118 = vector.shape_cast %113 : vector<2x32xf32> to vector<1x2x32xf32>
    tpu.vector_store %arg7[%115, %c0_33, %c0_34], %118 {strides = array<i32>} : memref<8x2x32xf32, #tpu.memory_space<vmem>>, vector<1x2x32xf32>,
    %119 = arith.index_cast %114 : i32 to index
    %c0_35 = arith.constant 0 : index
    %c0_36 = arith.constant 0 : index
    %120 = vector.load %arg8[%119, %c0_35, %c0_36] : memref<8x2x32xf32, #tpu.memory_space<vmem>>, vector<1x2x32xf32>
    %121 = vector.shape_cast %120 : vector<1x2x32xf32> to vector<2x32xf32>
    %122 = vector.shape_cast %113 : vector<2x32xf32> to vector<1x2x32xf32>
    tpu.vector_store %arg8[%119, %c0_35, %c0_36], %122 {strides = array<i32>} : memref<8x2x32xf32, #tpu.memory_space<vmem>>, vector<1x2x32xf32>,
    %c4_i32 = arith.constant 4 : i32
    %123 = arith.index_cast %c4_i32 : i32 to index
    %c0_37 = arith.constant 0 : index
    %c0_38 = arith.constant 0 : index
    %124 = vector.load %arg0[%123, %c0_37, %c0_38] : memref<8x2x128xf32, #tpu.memory_space<vmem>>, vector<1x2x128xf32>
    %125 = vector.shape_cast %124 : vector<1x2x128xf32> to vector<2x128xf32>
    %cst_39 = arith.constant dense<0.000000e+00> : vector<2x128xf32>
    %126 = tpu.matmul %113, %1, %cst_39 {dimension_numbers = #tpu.dot_dimension_numbers<[1], [0], [0], [1], [0, 0, 1, 1], [], []>} : vector<2x32xf32>, vector<32x128xf32>, vector<2x128xf32> -> vector<2x128xf32>
    %127 = arith.addf %125, %126 : vector<2x128xf32>
    %128 = vector.extract_strided_slice %127 {offsets = [0, 0], sizes = [2, 96], strides = [1, 1]} : vector<2x128xf32> to vector<2x96xf32>
    %129 = arith.negf %128 : vector<2x96xf32>
    %130 = math.exp %129 : vector<2x96xf32>
    %cst_40 = arith.constant 1.000000e+00 : f32
    %131 = vector.broadcast %cst_40 : f32 to vector<2x96xf32>
    %132 = arith.addf %131, %130 : vector<2x96xf32>
    %133 = arith.divf %131, %132 : vector<2x96xf32>
    %134 = vector.extract_strided_slice %127 {offsets = [0, 96], sizes = [2, 32], strides = [1, 1]} : vector<2x128xf32> to vector<2x32xf32>
    %135 = math.tanh %134 : vector<2x32xf32>
    %136 = vector.extract_strided_slice %133 {offsets = [0, 32], sizes = [2, 32], strides = [1, 1]} : vector<2x96xf32> to vector<2x32xf32>
    %137 = arith.mulf %136, %110 : vector<2x32xf32>
    %138 = vector.extract_strided_slice %133 {offsets = [0, 0], sizes = [2, 32], strides = [1, 1]} : vector<2x96xf32> to vector<2x32xf32>
    %139 = arith.mulf %138, %135 : vector<2x32xf32>
    %140 = arith.addf %137, %139 : vector<2x32xf32>
    %141 = vector.extract_strided_slice %133 {offsets = [0, 64], sizes = [2, 32], strides = [1, 1]} : vector<2x96xf32> to vector<2x32xf32>
    %142 = math.tanh %140 : vector<2x32xf32>
    %143 = arith.mulf %141, %142 : vector<2x32xf32>
    %c7_i32_41 = arith.constant 7 : i32
    %144 = arith.subi %c7_i32_41, %c4_i32 : i32
    %145 = arith.index_cast %c4_i32 : i32 to index
    %c0_42 = arith.constant 0 : index
    %c0_43 = arith.constant 0 : index
    %146 = vector.load %arg7[%145, %c0_42, %c0_43] : memref<8x2x32xf32, #tpu.memory_space<vmem>>, vector<1x2x32xf32>
    %147 = vector.shape_cast %146 : vector<1x2x32xf32> to vector<2x32xf32>
    %148 = vector.shape_cast %143 : vector<2x32xf32> to vector<1x2x32xf32>
    tpu.vector_store %arg7[%145, %c0_42, %c0_43], %148 {strides = array<i32>} : memref<8x2x32xf32, #tpu.memory_space<vmem>>, vector<1x2x32xf32>,
    %149 = arith.index_cast %144 : i32 to index
    %c0_44 = arith.constant 0 : index
    %c0_45 = arith.constant 0 : index
    %150 = vector.load %arg8[%149, %c0_44, %c0_45] : memref<8x2x32xf32, #tpu.memory_space<vmem>>, vector<1x2x32xf32>
    %151 = vector.shape_cast %150 : vector<1x2x32xf32> to vector<2x32xf32>
    %152 = vector.shape_cast %143 : vector<2x32xf32> to vector<1x2x32xf32>
    tpu.vector_store %arg8[%149, %c0_44, %c0_45], %152 {strides = array<i32>} : memref<8x2x32xf32, #tpu.memory_space<vmem>>, vector<1x2x32xf32>,
    %c5_i32 = arith.constant 5 : i32
    %153 = arith.index_cast %c5_i32 : i32 to index
    %c0_46 = arith.constant 0 : index
    %c0_47 = arith.constant 0 : index
    %154 = vector.load %arg0[%153, %c0_46, %c0_47] : memref<8x2x128xf32, #tpu.memory_space<vmem>>, vector<1x2x128xf32>
    %155 = vector.shape_cast %154 : vector<1x2x128xf32> to vector<2x128xf32>
    %cst_48 = arith.constant dense<0.000000e+00> : vector<2x128xf32>
    %156 = tpu.matmul %143, %1, %cst_48 {dimension_numbers = #tpu.dot_dimension_numbers<[1], [0], [0], [1], [0, 0, 1, 1], [], []>} : vector<2x32xf32>, vector<32x128xf32>, vector<2x128xf32> -> vector<2x128xf32>
    %157 = arith.addf %155, %156 : vector<2x128xf32>
    %158 = vector.extract_strided_slice %157 {offsets = [0, 0], sizes = [2, 96], strides = [1, 1]} : vector<2x128xf32> to vector<2x96xf32>
    %159 = arith.negf %158 : vector<2x96xf32>
    %160 = math.exp %159 : vector<2x96xf32>
    %cst_49 = arith.constant 1.000000e+00 : f32
    %161 = vector.broadcast %cst_49 : f32 to vector<2x96xf32>
    %162 = arith.addf %161, %160 : vector<2x96xf32>
    %163 = arith.divf %161, %162 : vector<2x96xf32>
    %164 = vector.extract_strided_slice %157 {offsets = [0, 96], sizes = [2, 32], strides = [1, 1]} : vector<2x128xf32> to vector<2x32xf32>
    %165 = math.tanh %164 : vector<2x32xf32>
    %166 = vector.extract_strided_slice %163 {offsets = [0, 32], sizes = [2, 32], strides = [1, 1]} : vector<2x96xf32> to vector<2x32xf32>
    %167 = arith.mulf %166, %140 : vector<2x32xf32>
    %168 = vector.extract_strided_slice %163 {offsets = [0, 0], sizes = [2, 32], strides = [1, 1]} : vector<2x96xf32> to vector<2x32xf32>
    %169 = arith.mulf %168, %165 : vector<2x32xf32>
    %170 = arith.addf %167, %169 : vector<2x32xf32>
    %171 = vector.extract_strided_slice %163 {offsets = [0, 64], sizes = [2, 32], strides = [1, 1]} : vector<2x96xf32> to vector<2x32xf32>
    %172 = math.tanh %170 : vector<2x32xf32>
    %173 = arith.mulf %171, %172 : vector<2x32xf32>
    %c7_i32_50 = arith.constant 7 : i32
    %174 = arith.subi %c7_i32_50, %c5_i32 : i32
    %175 = arith.index_cast %c5_i32 : i32 to index
    %c0_51 = arith.constant 0 : index
    %c0_52 = arith.constant 0 : index
    %176 = vector.load %arg7[%175, %c0_51, %c0_52] : memref<8x2x32xf32, #tpu.memory_space<vmem>>, vector<1x2x32xf32>
    %177 = vector.shape_cast %176 : vector<1x2x32xf32> to vector<2x32xf32>
    %178 = vector.shape_cast %173 : vector<2x32xf32> to vector<1x2x32xf32>
    tpu.vector_store %arg7[%175, %c0_51, %c0_52], %178 {strides = array<i32>} : memref<8x2x32xf32, #tpu.memory_space<vmem>>, vector<1x2x32xf32>,
    %179 = arith.index_cast %174 : i32 to index
    %c0_53 = arith.constant 0 : index
    %c0_54 = arith.constant 0 : index
    %180 = vector.load %arg8[%179, %c0_53, %c0_54] : memref<8x2x32xf32, #tpu.memory_space<vmem>>, vector<1x2x32xf32>
    %181 = vector.shape_cast %180 : vector<1x2x32xf32> to vector<2x32xf32>
    %182 = vector.shape_cast %173 : vector<2x32xf32> to vector<1x2x32xf32>
    tpu.vector_store %arg8[%179, %c0_53, %c0_54], %182 {strides = array<i32>} : memref<8x2x32xf32, #tpu.memory_space<vmem>>, vector<1x2x32xf32>,
    %c6_i32 = arith.constant 6 : i32
    %183 = arith.index_cast %c6_i32 : i32 to index
    %c0_55 = arith.constant 0 : index
    %c0_56 = arith.constant 0 : index
    %184 = vector.load %arg0[%183, %c0_55, %c0_56] : memref<8x2x128xf32, #tpu.memory_space<vmem>>, vector<1x2x128xf32>
    %185 = vector.shape_cast %184 : vector<1x2x128xf32> to vector<2x128xf32>
    %cst_57 = arith.constant dense<0.000000e+00> : vector<2x128xf32>
    %186 = tpu.matmul %173, %1, %cst_57 {dimension_numbers = #tpu.dot_dimension_numbers<[1], [0], [0], [1], [0, 0, 1, 1], [], []>} : vector<2x32xf32>, vector<32x128xf32>, vector<2x128xf32> -> vector<2x128xf32>
    %187 = arith.addf %185, %186 : vector<2x128xf32>
    %188 = vector.extract_strided_slice %187 {offsets = [0, 0], sizes = [2, 96], strides = [1, 1]} : vector<2x128xf32> to vector<2x96xf32>
    %189 = arith.negf %188 : vector<2x96xf32>
    %190 = math.exp %189 : vector<2x96xf32>
    %cst_58 = arith.constant 1.000000e+00 : f32
    %191 = vector.broadcast %cst_58 : f32 to vector<2x96xf32>
    %192 = arith.addf %191, %190 : vector<2x96xf32>
    %193 = arith.divf %191, %192 : vector<2x96xf32>
    %194 = vector.extract_strided_slice %187 {offsets = [0, 96], sizes = [2, 32], strides = [1, 1]} : vector<2x128xf32> to vector<2x32xf32>
    %195 = math.tanh %194 : vector<2x32xf32>
    %196 = vector.extract_strided_slice %193 {offsets = [0, 32], sizes = [2, 32], strides = [1, 1]} : vector<2x96xf32> to vector<2x32xf32>
    %197 = arith.mulf %196, %170 : vector<2x32xf32>
    %198 = vector.extract_strided_slice %193 {offsets = [0, 0], sizes = [2, 32], strides = [1, 1]} : vector<2x96xf32> to vector<2x32xf32>
    %199 = arith.mulf %198, %195 : vector<2x32xf32>
    %200 = arith.addf %197, %199 : vector<2x32xf32>
    %201 = vector.extract_strided_slice %193 {offsets = [0, 64], sizes = [2, 32], strides = [1, 1]} : vector<2x96xf32> to vector<2x32xf32>
    %202 = math.tanh %200 : vector<2x32xf32>
    %203 = arith.mulf %201, %202 : vector<2x32xf32>
    %c7_i32_59 = arith.constant 7 : i32
    %204 = arith.subi %c7_i32_59, %c6_i32 : i32
    %205 = arith.index_cast %c6_i32 : i32 to index
    %c0_60 = arith.constant 0 : index
    %c0_61 = arith.constant 0 : index
    %206 = vector.load %arg7[%205, %c0_60, %c0_61] : memref<8x2x32xf32, #tpu.memory_space<vmem>>, vector<1x2x32xf32>
    %207 = vector.shape_cast %206 : vector<1x2x32xf32> to vector<2x32xf32>
    %208 = vector.shape_cast %203 : vector<2x32xf32> to vector<1x2x32xf32>
    tpu.vector_store %arg7[%205, %c0_60, %c0_61], %208 {strides = array<i32>} : memref<8x2x32xf32, #tpu.memory_space<vmem>>, vector<1x2x32xf32>,
    %209 = arith.index_cast %204 : i32 to index
    %c0_62 = arith.constant 0 : index
    %c0_63 = arith.constant 0 : index
    %210 = vector.load %arg8[%209, %c0_62, %c0_63] : memref<8x2x32xf32, #tpu.memory_space<vmem>>, vector<1x2x32xf32>
    %211 = vector.shape_cast %210 : vector<1x2x32xf32> to vector<2x32xf32>
    %212 = vector.shape_cast %203 : vector<2x32xf32> to vector<1x2x32xf32>
    tpu.vector_store %arg8[%209, %c0_62, %c0_63], %212 {strides = array<i32>} : memref<8x2x32xf32, #tpu.memory_space<vmem>>, vector<1x2x32xf32>,
    %c7_i32_64 = arith.constant 7 : i32
    %213 = arith.index_cast %c7_i32_64 : i32 to index
    %c0_65 = arith.constant 0 : index
    %c0_66 = arith.constant 0 : index
    %214 = vector.load %arg0[%213, %c0_65, %c0_66] : memref<8x2x128xf32, #tpu.memory_space<vmem>>, vector<1x2x128xf32>
    %215 = vector.shape_cast %214 : vector<1x2x128xf32> to vector<2x128xf32>
    %cst_67 = arith.constant dense<0.000000e+00> : vector<2x128xf32>
    %216 = tpu.matmul %203, %1, %cst_67 {dimension_numbers = #tpu.dot_dimension_numbers<[1], [0], [0], [1], [0, 0, 1, 1], [], []>} : vector<2x32xf32>, vector<32x128xf32>, vector<2x128xf32> -> vector<2x128xf32>
    %217 = arith.addf %215, %216 : vector<2x128xf32>
    %218 = vector.extract_strided_slice %217 {offsets = [0, 0], sizes = [2, 96], strides = [1, 1]} : vector<2x128xf32> to vector<2x96xf32>
    %219 = arith.negf %218 : vector<2x96xf32>
    %220 = math.exp %219 : vector<2x96xf32>
    %cst_68 = arith.constant 1.000000e+00 : f32
    %221 = vector.broadcast %cst_68 : f32 to vector<2x96xf32>
    %222 = arith.addf %221, %220 : vector<2x96xf32>
    %223 = arith.divf %221, %222 : vector<2x96xf32>
    %224 = vector.extract_strided_slice %217 {offsets = [0, 96], sizes = [2, 32], strides = [1, 1]} : vector<2x128xf32> to vector<2x32xf32>
    %225 = math.tanh %224 : vector<2x32xf32>
    %226 = vector.extract_strided_slice %223 {offsets = [0, 32], sizes = [2, 32], strides = [1, 1]} : vector<2x96xf32> to vector<2x32xf32>
    %227 = arith.mulf %226, %200 : vector<2x32xf32>
    %228 = vector.extract_strided_slice %223 {offsets = [0, 0], sizes = [2, 32], strides = [1, 1]} : vector<2x96xf32> to vector<2x32xf32>
    %229 = arith.mulf %228, %225 : vector<2x32xf32>
    %230 = arith.addf %227, %229 : vector<2x32xf32>
    %231 = vector.extract_strided_slice %223 {offsets = [0, 64], sizes = [2, 32], strides = [1, 1]} : vector<2x96xf32> to vector<2x32xf32>
    %232 = math.tanh %230 : vector<2x32xf32>
    %233 = arith.mulf %231, %232 : vector<2x32xf32>
    %c7_i32_69 = arith.constant 7 : i32
    %234 = arith.subi %c7_i32_69, %c7_i32_64 : i32
    %235 = arith.index_cast %c7_i32_64 : i32 to index
    %c0_70 = arith.constant 0 : index
    %c0_71 = arith.constant 0 : index
    %236 = vector.load %arg7[%235, %c0_70, %c0_71] : memref<8x2x32xf32, #tpu.memory_space<vmem>>, vector<1x2x32xf32>
    %237 = vector.shape_cast %236 : vector<1x2x32xf32> to vector<2x32xf32>
    %238 = vector.shape_cast %233 : vector<2x32xf32> to vector<1x2x32xf32>
    tpu.vector_store %arg7[%235, %c0_70, %c0_71], %238 {strides = array<i32>} : memref<8x2x32xf32, #tpu.memory_space<vmem>>, vector<1x2x32xf32>,
    %239 = arith.index_cast %234 : i32 to index
    %c0_72 = arith.constant 0 : index
    %c0_73 = arith.constant 0 : index
    %240 = vector.load %arg8[%239, %c0_72, %c0_73] : memref<8x2x32xf32, #tpu.memory_space<vmem>>, vector<1x2x32xf32>
    %241 = vector.shape_cast %240 : vector<1x2x32xf32> to vector<2x32xf32>
    %242 = vector.shape_cast %233 : vector<2x32xf32> to vector<1x2x32xf32>
    tpu.vector_store %arg8[%239, %c0_72, %c0_73], %242 {strides = array<i32>} : memref<8x2x32xf32, #tpu.memory_space<vmem>>, vector<1x2x32xf32>,
    %c8_i32 = arith.constant 8 : i32
    %c0_74 = arith.constant 0 : index
    %c0_75 = arith.constant 0 : index
    %c0_76 = arith.constant 0 : index
    %243 = vector.load %arg7[%c0_74, %c0_75, %c0_76] : memref<8x2x32xf32, #tpu.memory_space<vmem>>, vector<8x2x32xf32>
    %244 = vector.shape_cast %243 : vector<8x2x32xf32> to vector<16x32xf32>
    %c0_77 = arith.constant 0 : index
    %c0_78 = arith.constant 0 : index
    %c0_79 = arith.constant 0 : index
    %245 = vector.load %arg8[%c0_77, %c0_78, %c0_79] : memref<8x2x32xf32, #tpu.memory_space<vmem>>, vector<8x2x32xf32>
    %246 = vector.shape_cast %245 : vector<8x2x32xf32> to vector<16x32xf32>
    %c0_80 = arith.constant 0 : index
    %c0_81 = arith.constant 0 : index
    %c0_82 = arith.constant 0 : index
    %247 = vector.load %arg2[%c0_80, %c0_81, %c0_82] : memref<1x32x128xf32, #tpu.memory_space<vmem>>, vector<1x32x128xf32>
    %248 = vector.shape_cast %247 : vector<1x32x128xf32> to vector<32x128xf32>
    %cst_83 = arith.constant dense<0.000000e+00> : vector<16x128xf32>
    %249 = tpu.matmul %244, %248, %cst_83 {dimension_numbers = #tpu.dot_dimension_numbers<[1], [0], [0], [1], [0, 0, 1, 1], [], []>} : vector<16x32xf32>, vector<32x128xf32>, vector<16x128xf32> -> vector<16x128xf32>
    %c0_84 = arith.constant 0 : index
    %c0_85 = arith.constant 0 : index
    %c0_86 = arith.constant 0 : index
    %250 = vector.load %arg3[%c0_84, %c0_85, %c0_86] : memref<1x32x128xf32, #tpu.memory_space<vmem>>, vector<1x32x128xf32>
    %251 = vector.shape_cast %250 : vector<1x32x128xf32> to vector<32x128xf32>
    %cst_87 = arith.constant dense<0.000000e+00> : vector<16x128xf32>
    %252 = tpu.matmul %246, %251, %cst_87 {dimension_numbers = #tpu.dot_dimension_numbers<[1], [0], [0], [1], [0, 0, 1, 1], [], []>} : vector<16x32xf32>, vector<32x128xf32>, vector<16x128xf32> -> vector<16x128xf32>
    %253 = arith.addf %249, %252 : vector<16x128xf32>
    %c0_88 = arith.constant 0 : index
    %c0_89 = arith.constant 0 : index
    %c0_90 = arith.constant 0 : index
    %254 = vector.load %arg4[%c0_88, %c0_89, %c0_90] : memref<1x1x128xf32, #tpu.memory_space<vmem>>, vector<1x1x128xf32>
    %255 = vector.shape_cast %254 : vector<1x1x128xf32> to vector<1x128xf32>
    %256 = vector.broadcast %255 : vector<1x128xf32> to vector<16x128xf32>
    %257 = arith.addf %253, %256 : vector<16x128xf32>
    %258 = vector.shape_cast %257 : vector<16x128xf32> to vector<8x2x128xf32>
    %c0_91 = arith.constant 0 : index
    %c0_92 = arith.constant 0 : index
    %c0_93 = arith.constant 0 : index
    %259 = vector.load %arg9[%c0_91, %c0_92, %c0_93] : memref<8x2x128xf32, #tpu.memory_space<vmem>>, vector<8x2x128xf32>
    tpu.vector_store %arg9[%c0_91, %c0_92, %c0_93], %258 {strides = array<i32>} : memref<8x2x128xf32, #tpu.memory_space<vmem>>, vector<8x2x128xf32>,
    %c1 = arith.constant 1 : index
    %c0_94 = arith.constant 0 : index
    %c0_95 = arith.constant 0 : index
    %260 = vector.load %arg1[%c1, %c0_94, %c0_95] : memref<2x32x128xf32, #tpu.memory_space<vmem>>, vector<1x32x128xf32>
    %261 = vector.shape_cast %260 : vector<1x32x128xf32> to vector<32x128xf32>
    %cst_96 = arith.constant 0.000000e+00 : f32
    %262 = vector.broadcast %cst_96 : f32 to vector<2x32xf32>
    %c0_i32_97 = arith.constant 0 : i32
    %263 = arith.index_cast %c0_i32_97 : i32 to index
    %c0_98 = arith.constant 0 : index
    %c0_99 = arith.constant 0 : index
    %264 = vector.load %arg9[%263, %c0_98, %c0_99] : memref<8x2x128xf32, #tpu.memory_space<vmem>>, vector<1x2x128xf32>
    %265 = vector.shape_cast %264 : vector<1x2x128xf32> to vector<2x128xf32>
    %cst_100 = arith.constant dense<0.000000e+00> : vector<2x128xf32>
    %266 = tpu.matmul %262, %261, %cst_100 {dimension_numbers = #tpu.dot_dimension_numbers<[1], [0], [0], [1], [0, 0, 1, 1], [], []>} : vector<2x32xf32>, vector<32x128xf32>, vector<2x128xf32> -> vector<2x128xf32>
    %267 = arith.addf %265, %266 : vector<2x128xf32>
    %268 = vector.extract_strided_slice %267 {offsets = [0, 0], sizes = [2, 96], strides = [1, 1]} : vector<2x128xf32> to vector<2x96xf32>
    %269 = arith.negf %268 : vector<2x96xf32>
    %270 = math.exp %269 : vector<2x96xf32>
    %cst_101 = arith.constant 1.000000e+00 : f32
    %271 = vector.broadcast %cst_101 : f32 to vector<2x96xf32>
    %272 = arith.addf %271, %270 : vector<2x96xf32>
    %273 = arith.divf %271, %272 : vector<2x96xf32>
    %274 = vector.extract_strided_slice %267 {offsets = [0, 96], sizes = [2, 32], strides = [1, 1]} : vector<2x128xf32> to vector<2x32xf32>
    %275 = math.tanh %274 : vector<2x32xf32>
    %276 = vector.extract_strided_slice %273 {offsets = [0, 32], sizes = [2, 32], strides = [1, 1]} : vector<2x96xf32> to vector<2x32xf32>
    %277 = arith.mulf %276, %262 : vector<2x32xf32>
    %278 = vector.extract_strided_slice %273 {offsets = [0, 0], sizes = [2, 32], strides = [1, 1]} : vector<2x96xf32> to vector<2x32xf32>
    %279 = arith.mulf %278, %275 : vector<2x32xf32>
    %280 = arith.addf %277, %279 : vector<2x32xf32>
    %281 = vector.extract_strided_slice %273 {offsets = [0, 64], sizes = [2, 32], strides = [1, 1]} : vector<2x96xf32> to vector<2x32xf32>
    %282 = math.tanh %280 : vector<2x32xf32>
    %283 = arith.mulf %281, %282 : vector<2x32xf32>
    %c7_i32_102 = arith.constant 7 : i32
    %284 = arith.subi %c7_i32_102, %c0_i32_97 : i32
    %285 = vector.extract_strided_slice %283 {offsets = [0, 0], sizes = [2, 16], strides = [1, 1]} : vector<2x32xf32> to vector<2x16xf32>
    %286 = arith.index_cast %c0_i32_97 : i32 to index
    %c0_103 = arith.constant 0 : index
    %c0_104 = arith.constant 0 : index
    %287 = vector.load %arg5[%286, %c0_103, %c0_104] : memref<8x2x16xf32, #tpu.memory_space<vmem>>, vector<1x2x16xf32>
    %288 = vector.shape_cast %287 : vector<1x2x16xf32> to vector<2x16xf32>
    %289 = vector.shape_cast %285 : vector<2x16xf32> to vector<1x2x16xf32>
    tpu.vector_store %arg5[%286, %c0_103, %c0_104], %289 {strides = array<i32>} : memref<8x2x16xf32, #tpu.memory_space<vmem>>, vector<1x2x16xf32>,
    %290 = vector.extract_strided_slice %283 {offsets = [0, 16], sizes = [2, 16], strides = [1, 1]} : vector<2x32xf32> to vector<2x16xf32>
    %291 = arith.index_cast %284 : i32 to index
    %c0_105 = arith.constant 0 : index
    %c0_106 = arith.constant 0 : index
    %292 = vector.load %arg6[%291, %c0_105, %c0_106] : memref<8x2x16xf32, #tpu.memory_space<vmem>>, vector<1x2x16xf32>
    %293 = vector.shape_cast %292 : vector<1x2x16xf32> to vector<2x16xf32>
    %294 = vector.shape_cast %290 : vector<2x16xf32> to vector<1x2x16xf32>
    tpu.vector_store %arg6[%291, %c0_105, %c0_106], %294 {strides = array<i32>} : memref<8x2x16xf32, #tpu.memory_space<vmem>>, vector<1x2x16xf32>,
    %c1_i32_107 = arith.constant 1 : i32
    %295 = arith.index_cast %c1_i32_107 : i32 to index
    %c0_108 = arith.constant 0 : index
    %c0_109 = arith.constant 0 : index
    %296 = vector.load %arg9[%295, %c0_108, %c0_109] : memref<8x2x128xf32, #tpu.memory_space<vmem>>, vector<1x2x128xf32>
    %297 = vector.shape_cast %296 : vector<1x2x128xf32> to vector<2x128xf32>
    %cst_110 = arith.constant dense<0.000000e+00> : vector<2x128xf32>
    %298 = tpu.matmul %283, %261, %cst_110 {dimension_numbers = #tpu.dot_dimension_numbers<[1], [0], [0], [1], [0, 0, 1, 1], [], []>} : vector<2x32xf32>, vector<32x128xf32>, vector<2x128xf32> -> vector<2x128xf32>
    %299 = arith.addf %297, %298 : vector<2x128xf32>
    %300 = vector.extract_strided_slice %299 {offsets = [0, 0], sizes = [2, 96], strides = [1, 1]} : vector<2x128xf32> to vector<2x96xf32>
    %301 = arith.negf %300 : vector<2x96xf32>
    %302 = math.exp %301 : vector<2x96xf32>
    %cst_111 = arith.constant 1.000000e+00 : f32
    %303 = vector.broadcast %cst_111 : f32 to vector<2x96xf32>
    %304 = arith.addf %303, %302 : vector<2x96xf32>
    %305 = arith.divf %303, %304 : vector<2x96xf32>
    %306 = vector.extract_strided_slice %299 {offsets = [0, 96], sizes = [2, 32], strides = [1, 1]} : vector<2x128xf32> to vector<2x32xf32>
    %307 = math.tanh %306 : vector<2x32xf32>
    %308 = vector.extract_strided_slice %305 {offsets = [0, 32], sizes = [2, 32], strides = [1, 1]} : vector<2x96xf32> to vector<2x32xf32>
    %309 = arith.mulf %308, %280 : vector<2x32xf32>
    %310 = vector.extract_strided_slice %305 {offsets = [0, 0], sizes = [2, 32], strides = [1, 1]} : vector<2x96xf32> to vector<2x32xf32>
    %311 = arith.mulf %310, %307 : vector<2x32xf32>
    %312 = arith.addf %309, %311 : vector<2x32xf32>
    %313 = vector.extract_strided_slice %305 {offsets = [0, 64], sizes = [2, 32], strides = [1, 1]} : vector<2x96xf32> to vector<2x32xf32>
    %314 = math.tanh %312 : vector<2x32xf32>
    %315 = arith.mulf %313, %314 : vector<2x32xf32>
    %c7_i32_112 = arith.constant 7 : i32
    %316 = arith.subi %c7_i32_112, %c1_i32_107 : i32
    %317 = vector.extract_strided_slice %315 {offsets = [0, 0], sizes = [2, 16], strides = [1, 1]} : vector<2x32xf32> to vector<2x16xf32>
    %318 = arith.index_cast %c1_i32_107 : i32 to index
    %c0_113 = arith.constant 0 : index
    %c0_114 = arith.constant 0 : index
    %319 = vector.load %arg5[%318, %c0_113, %c0_114] : memref<8x2x16xf32, #tpu.memory_space<vmem>>, vector<1x2x16xf32>
    %320 = vector.shape_cast %319 : vector<1x2x16xf32> to vector<2x16xf32>
    %321 = vector.shape_cast %317 : vector<2x16xf32> to vector<1x2x16xf32>
    tpu.vector_store %arg5[%318, %c0_113, %c0_114], %321 {strides = array<i32>} : memref<8x2x16xf32, #tpu.memory_space<vmem>>, vector<1x2x16xf32>,
    %322 = vector.extract_strided_slice %315 {offsets = [0, 16], sizes = [2, 16], strides = [1, 1]} : vector<2x32xf32> to vector<2x16xf32>
    %323 = arith.index_cast %316 : i32 to index
    %c0_115 = arith.constant 0 : index
    %c0_116 = arith.constant 0 : index
    %324 = vector.load %arg6[%323, %c0_115, %c0_116] : memref<8x2x16xf32, #tpu.memory_space<vmem>>, vector<1x2x16xf32>
    %325 = vector.shape_cast %324 : vector<1x2x16xf32> to vector<2x16xf32>
    %326 = vector.shape_cast %322 : vector<2x16xf32> to vector<1x2x16xf32>
    tpu.vector_store %arg6[%323, %c0_115, %c0_116], %326 {strides = array<i32>} : memref<8x2x16xf32, #tpu.memory_space<vmem>>, vector<1x2x16xf32>,
    %c2_i32_117 = arith.constant 2 : i32
    %327 = arith.index_cast %c2_i32_117 : i32 to index
    %c0_118 = arith.constant 0 : index
    %c0_119 = arith.constant 0 : index
    %328 = vector.load %arg9[%327, %c0_118, %c0_119] : memref<8x2x128xf32, #tpu.memory_space<vmem>>, vector<1x2x128xf32>
    %329 = vector.shape_cast %328 : vector<1x2x128xf32> to vector<2x128xf32>
    %cst_120 = arith.constant dense<0.000000e+00> : vector<2x128xf32>
    %330 = tpu.matmul %315, %261, %cst_120 {dimension_numbers = #tpu.dot_dimension_numbers<[1], [0], [0], [1], [0, 0, 1, 1], [], []>} : vector<2x32xf32>, vector<32x128xf32>, vector<2x128xf32> -> vector<2x128xf32>
    %331 = arith.addf %329, %330 : vector<2x128xf32>
    %332 = vector.extract_strided_slice %331 {offsets = [0, 0], sizes = [2, 96], strides = [1, 1]} : vector<2x128xf32> to vector<2x96xf32>
    %333 = arith.negf %332 : vector<2x96xf32>
    %334 = math.exp %333 : vector<2x96xf32>
    %cst_121 = arith.constant 1.000000e+00 : f32
    %335 = vector.broadcast %cst_121 : f32 to vector<2x96xf32>
    %336 = arith.addf %335, %334 : vector<2x96xf32>
    %337 = arith.divf %335, %336 : vector<2x96xf32>
    %338 = vector.extract_strided_slice %331 {offsets = [0, 96], sizes = [2, 32], strides = [1, 1]} : vector<2x128xf32> to vector<2x32xf32>
    %339 = math.tanh %338 : vector<2x32xf32>
    %340 = vector.extract_strided_slice %337 {offsets = [0, 32], sizes = [2, 32], strides = [1, 1]} : vector<2x96xf32> to vector<2x32xf32>
    %341 = arith.mulf %340, %312 : vector<2x32xf32>
    %342 = vector.extract_strided_slice %337 {offsets = [0, 0], sizes = [2, 32], strides = [1, 1]} : vector<2x96xf32> to vector<2x32xf32>
    %343 = arith.mulf %342, %339 : vector<2x32xf32>
    %344 = arith.addf %341, %343 : vector<2x32xf32>
    %345 = vector.extract_strided_slice %337 {offsets = [0, 64], sizes = [2, 32], strides = [1, 1]} : vector<2x96xf32> to vector<2x32xf32>
    %346 = math.tanh %344 : vector<2x32xf32>
    %347 = arith.mulf %345, %346 : vector<2x32xf32>
    %c7_i32_122 = arith.constant 7 : i32
    %348 = arith.subi %c7_i32_122, %c2_i32_117 : i32
    %349 = vector.extract_strided_slice %347 {offsets = [0, 0], sizes = [2, 16], strides = [1, 1]} : vector<2x32xf32> to vector<2x16xf32>
    %350 = arith.index_cast %c2_i32_117 : i32 to index
    %c0_123 = arith.constant 0 : index
    %c0_124 = arith.constant 0 : index
    %351 = vector.load %arg5[%350, %c0_123, %c0_124] : memref<8x2x16xf32, #tpu.memory_space<vmem>>, vector<1x2x16xf32>
    %352 = vector.shape_cast %351 : vector<1x2x16xf32> to vector<2x16xf32>
    %353 = vector.shape_cast %349 : vector<2x16xf32> to vector<1x2x16xf32>
    tpu.vector_store %arg5[%350, %c0_123, %c0_124], %353 {strides = array<i32>} : memref<8x2x16xf32, #tpu.memory_space<vmem>>, vector<1x2x16xf32>,
    %354 = vector.extract_strided_slice %347 {offsets = [0, 16], sizes = [2, 16], strides = [1, 1]} : vector<2x32xf32> to vector<2x16xf32>
    %355 = arith.index_cast %348 : i32 to index
    %c0_125 = arith.constant 0 : index
    %c0_126 = arith.constant 0 : index
    %356 = vector.load %arg6[%355, %c0_125, %c0_126] : memref<8x2x16xf32, #tpu.memory_space<vmem>>, vector<1x2x16xf32>
    %357 = vector.shape_cast %356 : vector<1x2x16xf32> to vector<2x16xf32>
    %358 = vector.shape_cast %354 : vector<2x16xf32> to vector<1x2x16xf32>
    tpu.vector_store %arg6[%355, %c0_125, %c0_126], %358 {strides = array<i32>} : memref<8x2x16xf32, #tpu.memory_space<vmem>>, vector<1x2x16xf32>,
    %c3_i32_127 = arith.constant 3 : i32
    %359 = arith.index_cast %c3_i32_127 : i32 to index
    %c0_128 = arith.constant 0 : index
    %c0_129 = arith.constant 0 : index
    %360 = vector.load %arg9[%359, %c0_128, %c0_129] : memref<8x2x128xf32, #tpu.memory_space<vmem>>, vector<1x2x128xf32>
    %361 = vector.shape_cast %360 : vector<1x2x128xf32> to vector<2x128xf32>
    %cst_130 = arith.constant dense<0.000000e+00> : vector<2x128xf32>
    %362 = tpu.matmul %347, %261, %cst_130 {dimension_numbers = #tpu.dot_dimension_numbers<[1], [0], [0], [1], [0, 0, 1, 1], [], []>} : vector<2x32xf32>, vector<32x128xf32>, vector<2x128xf32> -> vector<2x128xf32>
    %363 = arith.addf %361, %362 : vector<2x128xf32>
    %364 = vector.extract_strided_slice %363 {offsets = [0, 0], sizes = [2, 96], strides = [1, 1]} : vector<2x128xf32> to vector<2x96xf32>
    %365 = arith.negf %364 : vector<2x96xf32>
    %366 = math.exp %365 : vector<2x96xf32>
    %cst_131 = arith.constant 1.000000e+00 : f32
    %367 = vector.broadcast %cst_131 : f32 to vector<2x96xf32>
    %368 = arith.addf %367, %366 : vector<2x96xf32>
    %369 = arith.divf %367, %368 : vector<2x96xf32>
    %370 = vector.extract_strided_slice %363 {offsets = [0, 96], sizes = [2, 32], strides = [1, 1]} : vector<2x128xf32> to vector<2x32xf32>
    %371 = math.tanh %370 : vector<2x32xf32>
    %372 = vector.extract_strided_slice %369 {offsets = [0, 32], sizes = [2, 32], strides = [1, 1]} : vector<2x96xf32> to vector<2x32xf32>
    %373 = arith.mulf %372, %344 : vector<2x32xf32>
    %374 = vector.extract_strided_slice %369 {offsets = [0, 0], sizes = [2, 32], strides = [1, 1]} : vector<2x96xf32> to vector<2x32xf32>
    %375 = arith.mulf %374, %371 : vector<2x32xf32>
    %376 = arith.addf %373, %375 : vector<2x32xf32>
    %377 = vector.extract_strided_slice %369 {offsets = [0, 64], sizes = [2, 32], strides = [1, 1]} : vector<2x96xf32> to vector<2x32xf32>
    %378 = math.tanh %376 : vector<2x32xf32>
    %379 = arith.mulf %377, %378 : vector<2x32xf32>
    %c7_i32_132 = arith.constant 7 : i32
    %380 = arith.subi %c7_i32_132, %c3_i32_127 : i32
    %381 = vector.extract_strided_slice %379 {offsets = [0, 0], sizes = [2, 16], strides = [1, 1]} : vector<2x32xf32> to vector<2x16xf32>
    %382 = arith.index_cast %c3_i32_127 : i32 to index
    %c0_133 = arith.constant 0 : index
    %c0_134 = arith.constant 0 : index
    %383 = vector.load %arg5[%382, %c0_133, %c0_134] : memref<8x2x16xf32, #tpu.memory_space<vmem>>, vector<1x2x16xf32>
    %384 = vector.shape_cast %383 : vector<1x2x16xf32> to vector<2x16xf32>
    %385 = vector.shape_cast %381 : vector<2x16xf32> to vector<1x2x16xf32>
    tpu.vector_store %arg5[%382, %c0_133, %c0_134], %385 {strides = array<i32>} : memref<8x2x16xf32, #tpu.memory_space<vmem>>, vector<1x2x16xf32>,
    %386 = vector.extract_strided_slice %379 {offsets = [0, 16], sizes = [2, 16], strides = [1, 1]} : vector<2x32xf32> to vector<2x16xf32>
    %387 = arith.index_cast %380 : i32 to index
    %c0_135 = arith.constant 0 : index
    %c0_136 = arith.constant 0 : index
    %388 = vector.load %arg6[%387, %c0_135, %c0_136] : memref<8x2x16xf32, #tpu.memory_space<vmem>>, vector<1x2x16xf32>
    %389 = vector.shape_cast %388 : vector<1x2x16xf32> to vector<2x16xf32>
    %390 = vector.shape_cast %386 : vector<2x16xf32> to vector<1x2x16xf32>
    tpu.vector_store %arg6[%387, %c0_135, %c0_136], %390 {strides = array<i32>} : memref<8x2x16xf32, #tpu.memory_space<vmem>>, vector<1x2x16xf32>,
    %c4_i32_137 = arith.constant 4 : i32
    %391 = arith.index_cast %c4_i32_137 : i32 to index
    %c0_138 = arith.constant 0 : index
    %c0_139 = arith.constant 0 : index
    %392 = vector.load %arg9[%391, %c0_138, %c0_139] : memref<8x2x128xf32, #tpu.memory_space<vmem>>, vector<1x2x128xf32>
    %393 = vector.shape_cast %392 : vector<1x2x128xf32> to vector<2x128xf32>
    %cst_140 = arith.constant dense<0.000000e+00> : vector<2x128xf32>
    %394 = tpu.matmul %379, %261, %cst_140 {dimension_numbers = #tpu.dot_dimension_numbers<[1], [0], [0], [1], [0, 0, 1, 1], [], []>} : vector<2x32xf32>, vector<32x128xf32>, vector<2x128xf32> -> vector<2x128xf32>
    %395 = arith.addf %393, %394 : vector<2x128xf32>
    %396 = vector.extract_strided_slice %395 {offsets = [0, 0], sizes = [2, 96], strides = [1, 1]} : vector<2x128xf32> to vector<2x96xf32>
    %397 = arith.negf %396 : vector<2x96xf32>
    %398 = math.exp %397 : vector<2x96xf32>
    %cst_141 = arith.constant 1.000000e+00 : f32
    %399 = vector.broadcast %cst_141 : f32 to vector<2x96xf32>
    %400 = arith.addf %399, %398 : vector<2x96xf32>
    %401 = arith.divf %399, %400 : vector<2x96xf32>
    %402 = vector.extract_strided_slice %395 {offsets = [0, 96], sizes = [2, 32], strides = [1, 1]} : vector<2x128xf32> to vector<2x32xf32>
    %403 = math.tanh %402 : vector<2x32xf32>
    %404 = vector.extract_strided_slice %401 {offsets = [0, 32], sizes = [2, 32], strides = [1, 1]} : vector<2x96xf32> to vector<2x32xf32>
    %405 = arith.mulf %404, %376 : vector<2x32xf32>
    %406 = vector.extract_strided_slice %401 {offsets = [0, 0], sizes = [2, 32], strides = [1, 1]} : vector<2x96xf32> to vector<2x32xf32>
    %407 = arith.mulf %406, %403 : vector<2x32xf32>
    %408 = arith.addf %405, %407 : vector<2x32xf32>
    %409 = vector.extract_strided_slice %401 {offsets = [0, 64], sizes = [2, 32], strides = [1, 1]} : vector<2x96xf32> to vector<2x32xf32>
    %410 = math.tanh %408 : vector<2x32xf32>
    %411 = arith.mulf %409, %410 : vector<2x32xf32>
    %c7_i32_142 = arith.constant 7 : i32
    %412 = arith.subi %c7_i32_142, %c4_i32_137 : i32
    %413 = vector.extract_strided_slice %411 {offsets = [0, 0], sizes = [2, 16], strides = [1, 1]} : vector<2x32xf32> to vector<2x16xf32>
    %414 = arith.index_cast %c4_i32_137 : i32 to index
    %c0_143 = arith.constant 0 : index
    %c0_144 = arith.constant 0 : index
    %415 = vector.load %arg5[%414, %c0_143, %c0_144] : memref<8x2x16xf32, #tpu.memory_space<vmem>>, vector<1x2x16xf32>
    %416 = vector.shape_cast %415 : vector<1x2x16xf32> to vector<2x16xf32>
    %417 = vector.shape_cast %413 : vector<2x16xf32> to vector<1x2x16xf32>
    tpu.vector_store %arg5[%414, %c0_143, %c0_144], %417 {strides = array<i32>} : memref<8x2x16xf32, #tpu.memory_space<vmem>>, vector<1x2x16xf32>,
    %418 = vector.extract_strided_slice %411 {offsets = [0, 16], sizes = [2, 16], strides = [1, 1]} : vector<2x32xf32> to vector<2x16xf32>
    %419 = arith.index_cast %412 : i32 to index
    %c0_145 = arith.constant 0 : index
    %c0_146 = arith.constant 0 : index
    %420 = vector.load %arg6[%419, %c0_145, %c0_146] : memref<8x2x16xf32, #tpu.memory_space<vmem>>, vector<1x2x16xf32>
    %421 = vector.shape_cast %420 : vector<1x2x16xf32> to vector<2x16xf32>
    %422 = vector.shape_cast %418 : vector<2x16xf32> to vector<1x2x16xf32>
    tpu.vector_store %arg6[%419, %c0_145, %c0_146], %422 {strides = array<i32>} : memref<8x2x16xf32, #tpu.memory_space<vmem>>, vector<1x2x16xf32>,
    %c5_i32_147 = arith.constant 5 : i32
    %423 = arith.index_cast %c5_i32_147 : i32 to index
    %c0_148 = arith.constant 0 : index
    %c0_149 = arith.constant 0 : index
    %424 = vector.load %arg9[%423, %c0_148, %c0_149] : memref<8x2x128xf32, #tpu.memory_space<vmem>>, vector<1x2x128xf32>
    %425 = vector.shape_cast %424 : vector<1x2x128xf32> to vector<2x128xf32>
    %cst_150 = arith.constant dense<0.000000e+00> : vector<2x128xf32>
    %426 = tpu.matmul %411, %261, %cst_150 {dimension_numbers = #tpu.dot_dimension_numbers<[1], [0], [0], [1], [0, 0, 1, 1], [], []>} : vector<2x32xf32>, vector<32x128xf32>, vector<2x128xf32> -> vector<2x128xf32>
    %427 = arith.addf %425, %426 : vector<2x128xf32>
    %428 = vector.extract_strided_slice %427 {offsets = [0, 0], sizes = [2, 96], strides = [1, 1]} : vector<2x128xf32> to vector<2x96xf32>
    %429 = arith.negf %428 : vector<2x96xf32>
    %430 = math.exp %429 : vector<2x96xf32>
    %cst_151 = arith.constant 1.000000e+00 : f32
    %431 = vector.broadcast %cst_151 : f32 to vector<2x96xf32>
    %432 = arith.addf %431, %430 : vector<2x96xf32>
    %433 = arith.divf %431, %432 : vector<2x96xf32>
    %434 = vector.extract_strided_slice %427 {offsets = [0, 96], sizes = [2, 32], strides = [1, 1]} : vector<2x128xf32> to vector<2x32xf32>
    %435 = math.tanh %434 : vector<2x32xf32>
    %436 = vector.extract_strided_slice %433 {offsets = [0, 32], sizes = [2, 32], strides = [1, 1]} : vector<2x96xf32> to vector<2x32xf32>
    %437 = arith.mulf %436, %408 : vector<2x32xf32>
    %438 = vector.extract_strided_slice %433 {offsets = [0, 0], sizes = [2, 32], strides = [1, 1]} : vector<2x96xf32> to vector<2x32xf32>
    %439 = arith.mulf %438, %435 : vector<2x32xf32>
    %440 = arith.addf %437, %439 : vector<2x32xf32>
    %441 = vector.extract_strided_slice %433 {offsets = [0, 64], sizes = [2, 32], strides = [1, 1]} : vector<2x96xf32> to vector<2x32xf32>
    %442 = math.tanh %440 : vector<2x32xf32>
    %443 = arith.mulf %441, %442 : vector<2x32xf32>
    %c7_i32_152 = arith.constant 7 : i32
    %444 = arith.subi %c7_i32_152, %c5_i32_147 : i32
    %445 = vector.extract_strided_slice %443 {offsets = [0, 0], sizes = [2, 16], strides = [1, 1]} : vector<2x32xf32> to vector<2x16xf32>
    %446 = arith.index_cast %c5_i32_147 : i32 to index
    %c0_153 = arith.constant 0 : index
    %c0_154 = arith.constant 0 : index
    %447 = vector.load %arg5[%446, %c0_153, %c0_154] : memref<8x2x16xf32, #tpu.memory_space<vmem>>, vector<1x2x16xf32>
    %448 = vector.shape_cast %447 : vector<1x2x16xf32> to vector<2x16xf32>
    %449 = vector.shape_cast %445 : vector<2x16xf32> to vector<1x2x16xf32>
    tpu.vector_store %arg5[%446, %c0_153, %c0_154], %449 {strides = array<i32>} : memref<8x2x16xf32, #tpu.memory_space<vmem>>, vector<1x2x16xf32>,
    %450 = vector.extract_strided_slice %443 {offsets = [0, 16], sizes = [2, 16], strides = [1, 1]} : vector<2x32xf32> to vector<2x16xf32>
    %451 = arith.index_cast %444 : i32 to index
    %c0_155 = arith.constant 0 : index
    %c0_156 = arith.constant 0 : index
    %452 = vector.load %arg6[%451, %c0_155, %c0_156] : memref<8x2x16xf32, #tpu.memory_space<vmem>>, vector<1x2x16xf32>
    %453 = vector.shape_cast %452 : vector<1x2x16xf32> to vector<2x16xf32>
    %454 = vector.shape_cast %450 : vector<2x16xf32> to vector<1x2x16xf32>
    tpu.vector_store %arg6[%451, %c0_155, %c0_156], %454 {strides = array<i32>} : memref<8x2x16xf32, #tpu.memory_space<vmem>>, vector<1x2x16xf32>,
    %c6_i32_157 = arith.constant 6 : i32
    %455 = arith.index_cast %c6_i32_157 : i32 to index
    %c0_158 = arith.constant 0 : index
    %c0_159 = arith.constant 0 : index
    %456 = vector.load %arg9[%455, %c0_158, %c0_159] : memref<8x2x128xf32, #tpu.memory_space<vmem>>, vector<1x2x128xf32>
    %457 = vector.shape_cast %456 : vector<1x2x128xf32> to vector<2x128xf32>
    %cst_160 = arith.constant dense<0.000000e+00> : vector<2x128xf32>
    %458 = tpu.matmul %443, %261, %cst_160 {dimension_numbers = #tpu.dot_dimension_numbers<[1], [0], [0], [1], [0, 0, 1, 1], [], []>} : vector<2x32xf32>, vector<32x128xf32>, vector<2x128xf32> -> vector<2x128xf32>
    %459 = arith.addf %457, %458 : vector<2x128xf32>
    %460 = vector.extract_strided_slice %459 {offsets = [0, 0], sizes = [2, 96], strides = [1, 1]} : vector<2x128xf32> to vector<2x96xf32>
    %461 = arith.negf %460 : vector<2x96xf32>
    %462 = math.exp %461 : vector<2x96xf32>
    %cst_161 = arith.constant 1.000000e+00 : f32
    %463 = vector.broadcast %cst_161 : f32 to vector<2x96xf32>
    %464 = arith.addf %463, %462 : vector<2x96xf32>
    %465 = arith.divf %463, %464 : vector<2x96xf32>
    %466 = vector.extract_strided_slice %459 {offsets = [0, 96], sizes = [2, 32], strides = [1, 1]} : vector<2x128xf32> to vector<2x32xf32>
    %467 = math.tanh %466 : vector<2x32xf32>
    %468 = vector.extract_strided_slice %465 {offsets = [0, 32], sizes = [2, 32], strides = [1, 1]} : vector<2x96xf32> to vector<2x32xf32>
    %469 = arith.mulf %468, %440 : vector<2x32xf32>
    %470 = vector.extract_strided_slice %465 {offsets = [0, 0], sizes = [2, 32], strides = [1, 1]} : vector<2x96xf32> to vector<2x32xf32>
    %471 = arith.mulf %470, %467 : vector<2x32xf32>
    %472 = arith.addf %469, %471 : vector<2x32xf32>
    %473 = vector.extract_strided_slice %465 {offsets = [0, 64], sizes = [2, 32], strides = [1, 1]} : vector<2x96xf32> to vector<2x32xf32>
    %474 = math.tanh %472 : vector<2x32xf32>
    %475 = arith.mulf %473, %474 : vector<2x32xf32>
    %c7_i32_162 = arith.constant 7 : i32
    %476 = arith.subi %c7_i32_162, %c6_i32_157 : i32
    %477 = vector.extract_strided_slice %475 {offsets = [0, 0], sizes = [2, 16], strides = [1, 1]} : vector<2x32xf32> to vector<2x16xf32>
    %478 = arith.index_cast %c6_i32_157 : i32 to index
    %c0_163 = arith.constant 0 : index
    %c0_164 = arith.constant 0 : index
    %479 = vector.load %arg5[%478, %c0_163, %c0_164] : memref<8x2x16xf32, #tpu.memory_space<vmem>>, vector<1x2x16xf32>
    %480 = vector.shape_cast %479 : vector<1x2x16xf32> to vector<2x16xf32>
    %481 = vector.shape_cast %477 : vector<2x16xf32> to vector<1x2x16xf32>
    tpu.vector_store %arg5[%478, %c0_163, %c0_164], %481 {strides = array<i32>} : memref<8x2x16xf32, #tpu.memory_space<vmem>>, vector<1x2x16xf32>,
    %482 = vector.extract_strided_slice %475 {offsets = [0, 16], sizes = [2, 16], strides = [1, 1]} : vector<2x32xf32> to vector<2x16xf32>
    %483 = arith.index_cast %476 : i32 to index
    %c0_165 = arith.constant 0 : index
    %c0_166 = arith.constant 0 : index
    %484 = vector.load %arg6[%483, %c0_165, %c0_166] : memref<8x2x16xf32, #tpu.memory_space<vmem>>, vector<1x2x16xf32>
    %485 = vector.shape_cast %484 : vector<1x2x16xf32> to vector<2x16xf32>
    %486 = vector.shape_cast %482 : vector<2x16xf32> to vector<1x2x16xf32>
    tpu.vector_store %arg6[%483, %c0_165, %c0_166], %486 {strides = array<i32>} : memref<8x2x16xf32, #tpu.memory_space<vmem>>, vector<1x2x16xf32>,
    %c7_i32_167 = arith.constant 7 : i32
    %487 = arith.index_cast %c7_i32_167 : i32 to index
    %c0_168 = arith.constant 0 : index
    %c0_169 = arith.constant 0 : index
    %488 = vector.load %arg9[%487, %c0_168, %c0_169] : memref<8x2x128xf32, #tpu.memory_space<vmem>>, vector<1x2x128xf32>
    %489 = vector.shape_cast %488 : vector<1x2x128xf32> to vector<2x128xf32>
    %cst_170 = arith.constant dense<0.000000e+00> : vector<2x128xf32>
    %490 = tpu.matmul %475, %261, %cst_170 {dimension_numbers = #tpu.dot_dimension_numbers<[1], [0], [0], [1], [0, 0, 1, 1], [], []>} : vector<2x32xf32>, vector<32x128xf32>, vector<2x128xf32> -> vector<2x128xf32>
    %491 = arith.addf %489, %490 : vector<2x128xf32>
    %492 = vector.extract_strided_slice %491 {offsets = [0, 0], sizes = [2, 96], strides = [1, 1]} : vector<2x128xf32> to vector<2x96xf32>
    %493 = arith.negf %492 : vector<2x96xf32>
    %494 = math.exp %493 : vector<2x96xf32>
    %cst_171 = arith.constant 1.000000e+00 : f32
    %495 = vector.broadcast %cst_171 : f32 to vector<2x96xf32>
    %496 = arith.addf %495, %494 : vector<2x96xf32>
    %497 = arith.divf %495, %496 : vector<2x96xf32>
    %498 = vector.extract_strided_slice %491 {offsets = [0, 96], sizes = [2, 32], strides = [1, 1]} : vector<2x128xf32> to vector<2x32xf32>
    %499 = math.tanh %498 : vector<2x32xf32>
    %500 = vector.extract_strided_slice %497 {offsets = [0, 32], sizes = [2, 32], strides = [1, 1]} : vector<2x96xf32> to vector<2x32xf32>
    %501 = arith.mulf %500, %472 : vector<2x32xf32>
    %502 = vector.extract_strided_slice %497 {offsets = [0, 0], sizes = [2, 32], strides = [1, 1]} : vector<2x96xf32> to vector<2x32xf32>
    %503 = arith.mulf %502, %499 : vector<2x32xf32>
    %504 = arith.addf %501, %503 : vector<2x32xf32>
    %505 = vector.extract_strided_slice %497 {offsets = [0, 64], sizes = [2, 32], strides = [1, 1]} : vector<2x96xf32> to vector<2x32xf32>
    %506 = math.tanh %504 : vector<2x32xf32>
    %507 = arith.mulf %505, %506 : vector<2x32xf32>
    %c7_i32_172 = arith.constant 7 : i32
    %508 = arith.subi %c7_i32_172, %c7_i32_167 : i32
    %509 = vector.extract_strided_slice %507 {offsets = [0, 0], sizes = [2, 16], strides = [1, 1]} : vector<2x32xf32> to vector<2x16xf32>
    %510 = arith.index_cast %c7_i32_167 : i32 to index
    %c0_173 = arith.constant 0 : index
    %c0_174 = arith.constant 0 : index
    %511 = vector.load %arg5[%510, %c0_173, %c0_174] : memref<8x2x16xf32, #tpu.memory_space<vmem>>, vector<1x2x16xf32>
    %512 = vector.shape_cast %511 : vector<1x2x16xf32> to vector<2x16xf32>
    %513 = vector.shape_cast %509 : vector<2x16xf32> to vector<1x2x16xf32>
    tpu.vector_store %arg5[%510, %c0_173, %c0_174], %513 {strides = array<i32>} : memref<8x2x16xf32, #tpu.memory_space<vmem>>, vector<1x2x16xf32>,
    %514 = vector.extract_strided_slice %507 {offsets = [0, 16], sizes = [2, 16], strides = [1, 1]} : vector<2x32xf32> to vector<2x16xf32>
    %515 = arith.index_cast %508 : i32 to index
    %c0_175 = arith.constant 0 : index
    %c0_176 = arith.constant 0 : index
    %516 = vector.load %arg6[%515, %c0_175, %c0_176] : memref<8x2x16xf32, #tpu.memory_space<vmem>>, vector<1x2x16xf32>
    %517 = vector.shape_cast %516 : vector<1x2x16xf32> to vector<2x16xf32>
    %518 = vector.shape_cast %514 : vector<2x16xf32> to vector<1x2x16xf32>
    tpu.vector_store %arg6[%515, %c0_175, %c0_176], %518 {strides = array<i32>} : memref<8x2x16xf32, #tpu.memory_space<vmem>>, vector<1x2x16xf32>,
    %c8_i32_177 = arith.constant 8 : i32
    return
  }
}

</mosaic_0001>

<llo_original>
// kernel: tile.6
$region0: #{tile.6}
  #allocation0 [shape = 's32[1]{0}', space=sflag, size = 0x4, scoped, tag = 'scoped memory for tile.6']
  %s0 = inlined_call_operand.vmem [shape: pred[32], index: 0, kind: input, shape index: {}]
  %s1 = inlined_call_operand.vmem [shape: pred[4,32], index: 1, kind: output, shape index: {}]
  // Predicated region
  $region2: #{tile.6} parent=0 // pred_check
    _
  $region3: #{tile.6} parent=0 // pred_check_branch
    %3 = sbr.rel (0) target = $region5
  $region4: #{tile.6} parent=0 // pred_region
    _
  $region5: #{tile.6} parent=0 // pred_fallthru
    _
  %v4 = vld [vmem:[%s0] ss:$0 sm:$0xff]
  %v6 = vshra.s32 %v4, 0
  %v7 = vand.u32 %v6, 255
  %v8 = vpack.c.b16 0, %v7
  %v9 = vpack.c.b8 0, %v8
  %11 = vst [vmem:[%s1] sm:$0x1] %v9

// kernel: multi_lstm_encode.1
$region0: #{multi_lstm_encode.1}
  #allocation0 [shape = 'u32[]', space=smem, size = 0x4, offset = 0x4, fixed_abs, tag = 'smem constant byte address 0x4 - core index']
  #allocation1 [shape = 'u32[144,128]{1,0:T(1,128)}', space=vmem, size = 0x12000, scoped, tag = 'internal scratch']
  #allocation2 [shape = 'f32[8,2,32]{2,1,0:T(2,128)}', space=vmem, size = 0x2000, scoped, tag = 'scratch operand']
  #allocation3 [shape = 'f32[8,2,32]{2,1,0:T(2,128)}', space=vmem, size = 0x2000, scoped, tag = 'scratch operand']
  #allocation4 [shape = 'f32[8,2,128]{2,1,0:T(2,128)}', space=vmem, size = 0x2000, scoped, tag = 'scratch operand']
  %s0 = inlined_call_operand.vmem [shape: f32[8,2,128], index: 0, kind: input, shape index: {}]
  %s1 = inlined_call_operand.vmem [shape: f32[2,32,128], index: 1, kind: input, shape index: {}]
  %s2 = inlined_call_operand.vmem [shape: f32[1,32,128], index: 2, kind: input, shape index: {}]
  %s3 = inlined_call_operand.vmem [shape: f32[1,32,128], index: 3, kind: input, shape index: {}]
  %s4 = inlined_call_operand.vmem [shape: f32[1,1,128], index: 4, kind: input, shape index: {}]
  %s5 = inlined_call_operand.vmem [shape: f32[8,2,16], index: 5, kind: output, shape index: {0}]
  %s6 = inlined_call_operand.vmem [shape: f32[8,2,16], index: 6, kind: output, shape index: {1}]
  %7 = xla_tuple %s5, %s6
  %s8 = sld [smem:[#allocation0]]
  $region38: #{multi_lstm_encode.1} parent=0
    _
  %s10 = ssub.s32 1, %s8
  %s11 = scalar_select 0, %s10, %s8
  // Predicated region
  $region2: #{multi_lstm_encode.1} parent=0 // pred_check
    _
  $region3: #{multi_lstm_encode.1} parent=0 // pred_check_branch
    %13 = sbr.rel (0) target = $region5
  $region4: #{multi_lstm_encode.1} parent=0 // pred_region
    _
  $region5: #{multi_lstm_encode.1} parent=0 // pred_fallthru
    _
  // Predicated region
  $region6: #{multi_lstm_encode.1} parent=0 // pred_check
    _
  $region7: #{multi_lstm_encode.1} parent=0 // pred_check_branch
    %15 = sbr.rel (0) target = $region9
  $region8: #{multi_lstm_encode.1} parent=0 // pred_region
    _
  $region9: #{multi_lstm_encode.1} parent=0 // pred_fallthru
    _
  // Predicated region
  $region10: #{multi_lstm_encode.1} parent=0 // pred_check
    _
  $region11: #{multi_lstm_encode.1} parent=0 // pred_check_branch
    %17 = sbr.rel (0) target = $region13
  $region12: #{multi_lstm_encode.1} parent=0 // pred_region
    _
  $region13: #{multi_lstm_encode.1} parent=0 // pred_fallthru
    _
  // Predicated region
  $region14: #{multi_lstm_encode.1} parent=0 // pred_check
    _
  $region15: #{multi_lstm_encode.1} parent=0 // pred_check_branch
    %19 = sbr.rel (0) target = $region17
  $region16: #{multi_lstm_encode.1} parent=0 // pred_region
    _
  $region17: #{multi_lstm_encode.1} parent=0 // pred_fallthru
    _
  // Predicated region
  $region18: #{multi_lstm_encode.1} parent=0 // pred_check
    _
  $region19: #{multi_lstm_encode.1} parent=0 // pred_check_branch
    %21 = sbr.rel (0) target = $region21
  $region20: #{multi_lstm_encode.1} parent=0 // pred_region
    _
  $region21: #{multi_lstm_encode.1} parent=0 // pred_fallthru
    _
  %v22 = vld [vmem:[%s1] sm:$0xff]
  %v23 = vld [vmem:[%s1 + $0x8] sm:$0xff]
  %v24 = vld [vmem:[%s1 + $0x10] sm:$0xff]
  %v25 = vld [vmem:[%s1 + $0x18] sm:$0xff]
  %v26 = vld [vmem:[%s0] sm:$0x3]
  %vm27 = vcmask 261120
  %v29 = vsel %vm27, 0.0, 0
  %31 = vmatprep.subr.mxu0 0.0
  %32 = vmatpush1.msra.mxu0 %v22
  %33 = vmatprep.subr.mxu0 0.0
  %34 = vmatpush1.msra.mxu0 %v23
  %35 = vmatprep.subr.mxu0 0.0
  %36 = vmatpush1.msra.mxu0 %v24
  %37 = vmatprep.subr.mxu0 0.0
  %38 = vmatpush1.msra.mxu0 %v25
  %39 = vmatprep.subr.mxu0 0.0
  %40 = vmatpush1.msra.mxu0 0.0
  %41 = vmatprep.subr.mxu0 0.0
  %42 = vmatpush1.msra.mxu0 0.0
  %43 = vmatprep.subr.mxu0 0.0
  %44 = vmatpush1.msra.mxu0 0.0
  %45 = vmatprep.subr.mxu0 0.0
  %46 = vmatpush1.msra.mxu0 0.0
  %47 = vmatprep.subr.mxu0 0.0
  %48 = vmatpush1.msra.mxu0 0.0
  %49 = vmatprep.subr.mxu0 0.0
  %50 = vmatpush1.msra.mxu0 0.0
  %51 = vmatprep.subr.mxu0 0.0
  %52 = vmatpush1.msra.mxu0 0.0
  %53 = vmatprep.subr.mxu0 0.0
  %54 = vmatpush1.msra.mxu0 0.0
  %55 = vmatprep.subr.mxu0 0.0
  %56 = vmatpush1.msra.mxu0 0.0
  %57 = vmatprep.subr.mxu0 0.0
  %58 = vmatpush1.msra.mxu0 0.0
  %59 = vmatprep.subr.mxu0 0.0
  %60 = vmatpush1.msra.mxu0 0.0
  %61 = vmatprep.subr.mxu0 0.0
  %62 = vmatpush1.msra.mxu0 0.0
  %63 = vmatprep.subr.mxu0 0.0
  %64 = vmatpush1.msra.mxu0 0.0
  %65 = vmatprep.subr.mxu0 0.0
  %66 = vmatpush1.msra.mxu0 0.0
  %67 = vmatprep.subr.mxu0 0.0
  %68 = vmatpush1.msra.mxu0 0.0
  %69 = vmatprep.subr.mxu0 0.0
  %70 = vmatpush1.msra.mxu0 0.0
  %71 = vmatprep.subr.mxu0 0.0
  %72 = vmatpush1.msra.mxu0 0.0
  %73 = vmatprep.subr.mxu0 0.0
  %74 = vmatpush1.msra.mxu0 0.0
  %75 = vmatprep.subr.mxu0 0.0
  %76 = vmatpush1.msra.mxu0 0.0
  %77 = vmatprep.subr.mxu0 0.0
  %78 = vmatpush1.msra.mxu0 0.0
  %79 = vmatprep.subr.mxu0 0.0
  %80 = vmatpush1.msra.mxu0 0.0
  %81 = vmatprep.subr.mxu0 0.0
  %82 = vmatpush1.msra.mxu0 0.0
  %83 = vmatprep.subr.mxu0 0.0
  %84 = vmatpush1.msra.mxu0 0.0
  %85 = vmatprep.subr.mxu0 0.0
  %86 = vmatpush1.msra.mxu0 0.0
  %87 = vmatprep.subr.mxu0 0.0
  %88 = vmatpush1.msra.mxu0 0.0
  %89 = vmatprep.subr.mxu0 0.0
  %90 = vmatpush1.msra.mxu0 0.0
  %91 = vmatprep.subr.mxu0 0.0
  %92 = vmatpush1.msra.mxu0 0.0
  %93 = vmatprep.subr.mxu0 0.0
  %94 = vmatpush1.msra.mxu0 0.0
  %95 = vmatprep.mubr.f32.mxu0 0.0
  %96 = vmatmul.mubr.f32.gmra.mrb[0].mxu0 %v29
  %v97 = vpop.f32.mrb[0].mxu0
  %v98 = vadd.f32 0.0, %v97
  %v99 = vpop.f32.mrb[0].mxu0
  %100 = vdwg.mxu0
  %v101 = vadd.f32 %v26, %v98
  %v102 = vxor.u32 %v101, 2147483648
  %v103 = vmul.f32 %v102, 1.442695
  %v104 = vpow.pop %v103
  %v105 = vadd.f32 %v104, 1.0
  %v106 = vrcp.pop %v105
  %v107 = vmul.f32 1.0, %v106
  %v108 = vtanh.pop %v101
  %v109 = vmul.f32 %v107, 0.0
  %111 = vrot.lane.b32.xlu0 %v108, 32
  %v112 = vpop.permute.xlu0 %111
  %v114 = vmul.f32 %v107, %v112
  %116 = vrot.lane.b32.xlu0 %v114, 32
  %v117 = vpop.permute.xlu0 %116
  %v119 = vadd.f32 %v109, %v117
  %v120 = vtanh.pop %v119
  %122 = vrot.lane.b32.xlu0 %v120, 32
  %v123 = vpop.permute.xlu0 %122
  %v125 = vmul.f32 %v107, %v123
  %127 = vrot.lane.b32.xlu0 %v125, 64
  %v128 = vpop.permute.xlu0 %127
  %vm130 = vcmask 254976
  %131 = vst.msk [vmem:[#allocation2] sm:$0x3] %vm130, %v128
  %s132 = scalar_lea.vmem [#allocation3], 14
  %133 = vst.msk [vmem:[%s132] sm:$0x3] %vm130, %v128
  %s134 = scalar_lea.vmem %s0, 2
  %v135 = vld [vmem:[%s134] sm:$0x3]
  %v136 = vsel %vm27, %v128, 0
  %138 = vmatprep.subr.mxu0 0.0
  %139 = vmatpush1.msra.mxu0 %v22
  %140 = vmatprep.subr.mxu0 0.0
  %141 = vmatpush1.msra.mxu0 %v23
  %142 = vmatprep.subr.mxu0 0.0
  %143 = vmatpush1.msra.mxu0 %v24
  %144 = vmatprep.subr.mxu0 0.0
  %145 = vmatpush1.msra.mxu0 %v25
  %146 = vmatprep.subr.mxu0 0.0
  %147 = vmatpush1.msra.mxu0 0.0
  %148 = vmatprep.subr.mxu0 0.0
  %149 = vmatpush1.msra.mxu0 0.0
  %150 = vmatprep.subr.mxu0 0.0
  %151 = vmatpush1.msra.mxu0 0.0
  %152 = vmatprep.subr.mxu0 0.0
  %153 = vmatpush1.msra.mxu0 0.0
  %154 = vmatprep.subr.mxu0 0.0
  %155 = vmatpush1.msra.mxu0 0.0
  %156 = vmatprep.subr.mxu0 0.0
  %157 = vmatpush1.msra.mxu0 0.0
  %158 = vmatprep.subr.mxu0 0.0
  %159 = vmatpush1.msra.mxu0 0.0
  %160 = vmatprep.subr.mxu0 0.0
  %161 = vmatpush1.msra.mxu0 0.0
  %162 = vmatprep.subr.mxu0 0.0
  %163 = vmatpush1.msra.mxu0 0.0
  %164 = vmatprep.subr.mxu0 0.0
  %165 = vmatpush1.msra.mxu0 0.0
  %166 = vmatprep.subr.mxu0 0.0
  %167 = vmatpush1.msra.mxu0 0.0
  %168 = vmatprep.subr.mxu0 0.0
  %169 = vmatpush1.msra.mxu0 0.0
  %170 = vmatprep.subr.mxu0 0.0
  %171 = vmatpush1.msra.mxu0 0.0
  %172 = vmatprep.subr.mxu0 0.0
  %173 = vmatpush1.msra.mxu0 0.0
  %174 = vmatprep.subr.mxu0 0.0
  %175 = vmatpush1.msra.mxu0 0.0
  %176 = vmatprep.subr.mxu0 0.0
  %177 = vmatpush1.msra.mxu0 0.0
  %178 = vmatprep.subr.mxu0 0.0
  %179 = vmatpush1.msra.mxu0 0.0
  %180 = vmatprep.subr.mxu0 0.0
  %181 = vmatpush1.msra.mxu0 0.0
  %182 = vmatprep.subr.mxu0 0.0
  %183 = vmatpush1.msra.mxu0 0.0
  %184 = vmatprep.subr.mxu0 0.0
  %185 = vmatpush1.msra.mxu0 0.0
  %186 = vmatprep.subr.mxu0 0.0
  %187 = vmatpush1.msra.mxu0 0.0
  %188 = vmatprep.subr.mxu0 0.0
  %189 = vmatpush1.msra.mxu0 0.0
  %190 = vmatprep.subr.mxu0 0.0
  %191 = vmatpush1.msra.mxu0 0.0
  %192 = vmatprep.subr.mxu0 0.0
  %193 = vmatpush1.msra.mxu0 0.0
  %194 = vmatprep.subr.mxu0 0.0
  %195 = vmatpush1.msra.mxu0 0.0
  %196 = vmatprep.subr.mxu0 0.0
  %197 = vmatpush1.msra.mxu0 0.0
  %198 = vmatprep.subr.mxu0 0.0
  %199 = vmatpush1.msra.mxu0 0.0
  %200 = vmatprep.subr.mxu0 0.0
  %201 = vmatpush1.msra.mxu0 0.0
  %202 = vmatprep.mubr.f32.mxu0 0.0
  %203 = vmatmul.mubr.f32.gmra.mrb[0].mxu0 %v136
  %v204 = vpop.f32.mrb[0].mxu0
  %v205 = vadd.f32 0.0, %v204
  %v206 = vpop.f32.mrb[0].mxu0
  %207 = vdwg.mxu0
  %v208 = vadd.f32 %v135, %v205
  %v209 = vxor.u32 %v208, 2147483648
  %v210 = vmul.f32 %v209, 1.442695
  %v211 = vpow.pop %v210
  %v212 = vadd.f32 %v211, 1.0
  %v213 = vrcp.pop %v212
  %v214 = vmul.f32 1.0, %v213
  %v215 = vtanh.pop %v208
  %v216 = vmul.f32 %v214, %v119
  %218 = vrot.lane.b32.xlu0 %v215, 32
  %v219 = vpop.permute.xlu0 %218
  %v221 = vmul.f32 %v214, %v219
  %223 = vrot.lane.b32.xlu0 %v221, 32
  %v224 = vpop.permute.xlu0 %223
  %v226 = vadd.f32 %v216, %v224
  %v227 = vtanh.pop %v226
  %229 = vrot.lane.b32.xlu0 %v227, 32
  %v230 = vpop.permute.xlu0 %229
  %v232 = vmul.f32 %v214, %v230
  %234 = vrot.lane.b32.xlu0 %v232, 64
  %v235 = vpop.permute.xlu0 %234
  %s237 = scalar_lea.vmem [#allocation2], 2
  %238 = vst.msk [vmem:[%s237] sm:$0x3] %vm130, %v235
  %s239 = scalar_lea.vmem [#allocation3], 12
  %240 = vst.msk [vmem:[%s239] sm:$0x3] %vm130, %v235
  %s241 = scalar_lea.vmem %s0, 4
  %v242 = vld [vmem:[%s241] sm:$0x3]
  %v243 = vsel %vm27, %v235, 0
  %245 = vmatprep.subr.mxu0 0.0
  %246 = vmatpush1.msra.mxu0 %v22
  %247 = vmatprep.subr.mxu0 0.0
  %248 = vmatpush1.msra.mxu0 %v23
  %249 = vmatprep.subr.mxu0 0.0
  %250 = vmatpush1.msra.mxu0 %v24
  %251 = vmatprep.subr.mxu0 0.0
  %252 = vmatpush1.msra.mxu0 %v25
  %253 = vmatprep.subr.mxu0 0.0
  %254 = vmatpush1.msra.mxu0 0.0
  %255 = vmatprep.subr.mxu0 0.0
  %256 = vmatpush1.msra.mxu0 0.0
  %257 = vmatprep.subr.mxu0 0.0
  %258 = vmatpush1.msra.mxu0 0.0
  %259 = vmatprep.subr.mxu0 0.0
  %260 = vmatpush1.msra.mxu0 0.0
  %261 = vmatprep.subr.mxu0 0.0
  %262 = vmatpush1.msra.mxu0 0.0
  %263 = vmatprep.subr.mxu0 0.0
  %264 = vmatpush1.msra.mxu0 0.0
  %265 = vmatprep.subr.mxu0 0.0
  %266 = vmatpush1.msra.mxu0 0.0
  %267 = vmatprep.subr.mxu0 0.0
  %268 = vmatpush1.msra.mxu0 0.0
  %269 = vmatprep.subr.mxu0 0.0
  %270 = vmatpush1.msra.mxu0 0.0
  %271 = vmatprep.subr.mxu0 0.0
  %272 = vmatpush1.msra.mxu0 0.0
  %273 = vmatprep.subr.mxu0 0.0
  %274 = vmatpush1.msra.mxu0 0.0
  %275 = vmatprep.subr.mxu0 0.0
  %276 = vmatpush1.msra.mxu0 0.0
  %277 = vmatprep.subr.mxu0 0.0
  %278 = vmatpush1.msra.mxu0 0.0
  %279 = vmatprep.subr.mxu0 0.0
  %280 = vmatpush1.msra.mxu0 0.0
  %281 = vmatprep.subr.mxu0 0.0
  %282 = vmatpush1.msra.mxu0 0.0
  %283 = vmatprep.subr.mxu0 0.0
  %284 = vmatpush1.msra.mxu0 0.0
  %285 = vmatprep.subr.mxu0 0.0
  %286 = vmatpush1.msra.mxu0 0.0
  %287 = vmatprep.subr.mxu0 0.0
  %288 = vmatpush1.msra.mxu0 0.0
  %289 = vmatprep.subr.mxu0 0.0
  %290 = vmatpush1.msra.mxu0 0.0
  %291 = vmatprep.subr.mxu0 0.0
  %292 = vmatpush1.msra.mxu0 0.0
  %293 = vmatprep.subr.mxu0 0.0
  %294 = vmatpush1.msra.mxu0 0.0
  %295 = vmatprep.subr.mxu0 0.0
  %296 = vmatpush1.msra.mxu0 0.0
  %297 = vmatprep.subr.mxu0 0.0
  %298 = vmatpush1.msra.mxu0 0.0
  %299 = vmatprep.subr.mxu0 0.0
  %300 = vmatpush1.msra.mxu0 0.0
  %301 = vmatprep.subr.mxu0 0.0
  %302 = vmatpush1.msra.mxu0 0.0
  %303 = vmatprep.subr.mxu0 0.0
  %304 = vmatpush1.msra.mxu0 0.0
  %305 = vmatprep.subr.mxu0 0.0
  %306 = vmatpush1.msra.mxu0 0.0
  %307 = vmatprep.subr.mxu0 0.0
  %308 = vmatpush1.msra.mxu0 0.0
  %309 = vmatprep.mubr.f32.mxu0 0.0
  %310 = vmatmul.mubr.f32.gmra.mrb[0].mxu0 %v243
  %v311 = vpop.f32.mrb[0].mxu0
  %v312 = vadd.f32 0.0, %v311
  %v313 = vpop.f32.mrb[0].mxu0
  %314 = vdwg.mxu0
  %v315 = vadd.f32 %v242, %v312
  %v316 = vxor.u32 %v315, 2147483648
  %v317 = vmul.f32 %v316, 1.442695
  %v318 = vpow.pop %v317
  %v319 = vadd.f32 %v318, 1.0
  %v320 = vrcp.pop %v319
  %v321 = vmul.f32 1.0, %v320
  %v322 = vtanh.pop %v315
  %v323 = vmul.f32 %v321, %v226
  %325 = vrot.lane.b32.xlu0 %v322, 32
  %v326 = vpop.permute.xlu0 %325
  %v328 = vmul.f32 %v321, %v326
  %330 = vrot.lane.b32.xlu0 %v328, 32
  %v331 = vpop.permute.xlu0 %330
  %v333 = vadd.f32 %v323, %v331
  %v334 = vtanh.pop %v333
  %336 = vrot.lane.b32.xlu0 %v334, 32
  %v337 = vpop.permute.xlu0 %336
  %v339 = vmul.f32 %v321, %v337
  %341 = vrot.lane.b32.xlu0 %v339, 64
  %v342 = vpop.permute.xlu0 %341
  %s344 = scalar_lea.vmem [#allocation2], 4
  %345 = vst.msk [vmem:[%s344] sm:$0x3] %vm130, %v342
  %s346 = scalar_lea.vmem [#allocation3], 10
  %347 = vst.msk [vmem:[%s346] sm:$0x3] %vm130, %v342
  %s348 = scalar_lea.vmem %s0, 6
  %v349 = vld [vmem:[%s348] sm:$0x3]
  %v350 = vsel %vm27, %v342, 0
  %352 = vmatprep.subr.mxu0 0.0
  %353 = vmatpush1.msra.mxu0 %v22
  %354 = vmatprep.subr.mxu0 0.0
  %355 = vmatpush1.msra.mxu0 %v23
  %356 = vmatprep.subr.mxu0 0.0
  %357 = vmatpush1.msra.mxu0 %v24
  %358 = vmatprep.subr.mxu0 0.0
  %359 = vmatpush1.msra.mxu0 %v25
  %360 = vmatprep.subr.mxu0 0.0
  %361 = vmatpush1.msra.mxu0 0.0
  %362 = vmatprep.subr.mxu0 0.0
  %363 = vmatpush1.msra.mxu0 0.0
  %364 = vmatprep.subr.mxu0 0.0
  %365 = vmatpush1.msra.mxu0 0.0
  %366 = vmatprep.subr.mxu0 0.0
  %367 = vmatpush1.msra.mxu0 0.0
  %368 = vmatprep.subr.mxu0 0.0
  %369 = vmatpush1.msra.mxu0 0.0
  %370 = vmatprep.subr.mxu0 0.0
  %371 = vmatpush1.msra.mxu0 0.0
  %372 = vmatprep.subr.mxu0 0.0
  %373 = vmatpush1.msra.mxu0 0.0
  %374 = vmatprep.subr.mxu0 0.0
  %375 = vmatpush1.msra.mxu0 0.0
  %376 = vmatprep.subr.mxu0 0.0
  %377 = vmatpush1.msra.mxu0 0.0
  %378 = vmatprep.subr.mxu0 0.0
  %379 = vmatpush1.msra.mxu0 0.0
  %380 = vmatprep.subr.mxu0 0.0
  %381 = vmatpush1.msra.mxu0 0.0
  %382 = vmatprep.subr.mxu0 0.0
  %383 = vmatpush1.msra.mxu0 0.0
  %384 = vmatprep.subr.mxu0 0.0
  %385 = vmatpush1.msra.mxu0 0.0
  %386 = vmatprep.subr.mxu0 0.0
  %387 = vmatpush1.msra.mxu0 0.0
  %388 = vmatprep.subr.mxu0 0.0
  %389 = vmatpush1.msra.mxu0 0.0
  %390 = vmatprep.subr.mxu0 0.0
  %391 = vmatpush1.msra.mxu0 0.0
  %392 = vmatprep.subr.mxu0 0.0
  %393 = vmatpush1.msra.mxu0 0.0
  %394 = vmatprep.subr.mxu0 0.0
  %395 = vmatpush1.msra.mxu0 0.0
  %396 = vmatprep.subr.mxu0 0.0
  %397 = vmatpush1.msra.mxu0 0.0
  %398 = vmatprep.subr.mxu0 0.0
  %399 = vmatpush1.msra.mxu0 0.0
  %400 = vmatprep.subr.mxu0 0.0
  %401 = vmatpush1.msra.mxu0 0.0
  %402 = vmatprep.subr.mxu0 0.0
  %403 = vmatpush1.msra.mxu0 0.0
  %404 = vmatprep.subr.mxu0 0.0
  %405 = vmatpush1.msra.mxu0 0.0
  %406 = vmatprep.subr.mxu0 0.0
  %407 = vmatpush1.msra.mxu0 0.0
  %408 = vmatprep.subr.mxu0 0.0
  %409 = vmatpush1.msra.mxu0 0.0
  %410 = vmatprep.subr.mxu0 0.0
  %411 = vmatpush1.msra.mxu0 0.0
  %412 = vmatprep.subr.mxu0 0.0
  %413 = vmatpush1.msra.mxu0 0.0
  %414 = vmatprep.subr.mxu0 0.0
  %415 = vmatpush1.msra.mxu0 0.0
  %416 = vmatprep.mubr.f32.mxu0 0.0
  %417 = vmatmul.mubr.f32.gmra.mrb[0].mxu0 %v350
  %v418 = vpop.f32.mrb[0].mxu0
  %v419 = vadd.f32 0.0, %v418
  %v420 = vpop.f32.mrb[0].mxu0
  %421 = vdwg.mxu0
  %v422 = vadd.f32 %v349, %v419
  %v423 = vxor.u32 %v422, 2147483648
  %v424 = vmul.f32 %v423, 1.442695
  %v425 = vpow.pop %v424
  %v426 = vadd.f32 %v425, 1.0
  %v427 = vrcp.pop %v426
  %v428 = vmul.f32 1.0, %v427
  %v429 = vtanh.pop %v422
  %v430 = vmul.f32 %v428, %v333
  %432 = vrot.lane.b32.xlu0 %v429, 32
  %v433 = vpop.permute.xlu0 %432
  %v435 = vmul.f32 %v428, %v433
  %437 = vrot.lane.b32.xlu0 %v435, 32
  %v438 = vpop.permute.xlu0 %437
  %v440 = vadd.f32 %v430, %v438
  %v441 = vtanh.pop %v440
  %443 = vrot.lane.b32.xlu0 %v441, 32
  %v444 = vpop.permute.xlu0 %443
  %v446 = vmul.f32 %v428, %v444
  %448 = vrot.lane.b32.xlu0 %v446, 64
  %v449 = vpop.permute.xlu0 %448
  %s451 = scalar_lea.vmem [#allocation2], 6
  %452 = vst.msk [vmem:[%s451] sm:$0x3] %vm130, %v449
  %s453 = scalar_lea.vmem [#allocation3], 8
  %454 = vst.msk [vmem:[%s453] sm:$0x3] %vm130, %v449
  %s455 = scalar_lea.vmem %s0, 8
  %v456 = vld [vmem:[%s455] sm:$0x3]
  %v457 = vsel %vm27, %v449, 0
  %459 = vmatprep.subr.mxu0 0.0
  %460 = vmatpush1.msra.mxu0 %v22
  %461 = vmatprep.subr.mxu0 0.0
  %462 = vmatpush1.msra.mxu0 %v23
  %463 = vmatprep.subr.mxu0 0.0
  %464 = vmatpush1.msra.mxu0 %v24
  %465 = vmatprep.subr.mxu0 0.0
  %466 = vmatpush1.msra.mxu0 %v25
  %467 = vmatprep.subr.mxu0 0.0
  %468 = vmatpush1.msra.mxu0 0.0
  %469 = vmatprep.subr.mxu0 0.0
  %470 = vmatpush1.msra.mxu0 0.0
  %471 = vmatprep.subr.mxu0 0.0
  %472 = vmatpush1.msra.mxu0 0.0
  %473 = vmatprep.subr.mxu0 0.0
  %474 = vmatpush1.msra.mxu0 0.0
  %475 = vmatprep.subr.mxu0 0.0
  %476 = vmatpush1.msra.mxu0 0.0
  %477 = vmatprep.subr.mxu0 0.0
  %478 = vmatpush1.msra.mxu0 0.0
  %479 = vmatprep.subr.mxu0 0.0
  %480 = vmatpush1.msra.mxu0 0.0
  %481 = vmatprep.subr.mxu0 0.0
  %482 = vmatpush1.msra.mxu0 0.0
  %483 = vmatprep.subr.mxu0 0.0
  %484 = vmatpush1.msra.mxu0 0.0
  %485 = vmatprep.subr.mxu0 0.0
  %486 = vmatpush1.msra.mxu0 0.0
  %487 = vmatprep.subr.mxu0 0.0
  %488 = vmatpush1.msra.mxu0 0.0
  %489 = vmatprep.subr.mxu0 0.0
  %490 = vmatpush1.msra.mxu0 0.0
  %491 = vmatprep.subr.mxu0 0.0
  %492 = vmatpush1.msra.mxu0 0.0
  %493 = vmatprep.subr.mxu0 0.0
  %494 = vmatpush1.msra.mxu0 0.0
  %495 = vmatprep.subr.mxu0 0.0
  %496 = vmatpush1.msra.mxu0 0.0
  %497 = vmatprep.subr.mxu0 0.0
  %498 = vmatpush1.msra.mxu0 0.0
  %499 = vmatprep.subr.mxu0 0.0
  %500 = vmatpush1.msra.mxu0 0.0
  %501 = vmatprep.subr.mxu0 0.0
  %502 = vmatpush1.msra.mxu0 0.0
  %503 = vmatprep.subr.mxu0 0.0
  %504 = vmatpush1.msra.mxu0 0.0
  %505 = vmatprep.subr.mxu0 0.0
  %506 = vmatpush1.msra.mxu0 0.0
  %507 = vmatprep.subr.mxu0 0.0
  %508 = vmatpush1.msra.mxu0 0.0
  %509 = vmatprep.subr.mxu0 0.0
  %510 = vmatpush1.msra.mxu0 0.0
  %511 = vmatprep.subr.mxu0 0.0
  %512 = vmatpush1.msra.mxu0 0.0
  %513 = vmatprep.subr.mxu0 0.0
  %514 = vmatpush1.msra.mxu0 0.0
  %515 = vmatprep.subr.mxu0 0.0
  %516 = vmatpush1.msra.mxu0 0.0
  %517 = vmatprep.subr.mxu0 0.0
  %518 = vmatpush1.msra.mxu0 0.0
  %519 = vmatprep.subr.mxu0 0.0
  %520 = vmatpush1.msra.mxu0 0.0
  %521 = vmatprep.subr.mxu0 0.0
  %522 = vmatpush1.msra.mxu0 0.0
  %523 = vmatprep.mubr.f32.mxu0 0.0
  %524 = vmatmul.mubr.f32.gmra.mrb[0].mxu0 %v457
  %v525 = vpop.f32.mrb[0].mxu0
  %v526 = vadd.f32 0.0, %v525
  %v527 = vpop.f32.mrb[0].mxu0
  %528 = vdwg.mxu0
  %v529 = vadd.f32 %v456, %v526
  %v530 = vxor.u32 %v529, 2147483648
  %v531 = vmul.f32 %v530, 1.442695
  %v532 = vpow.pop %v531
  %v533 = vadd.f32 %v532, 1.0
  %v534 = vrcp.pop %v533
  %v535 = vmul.f32 1.0, %v534
  %v536 = vtanh.pop %v529
  %v537 = vmul.f32 %v535, %v440
  %539 = vrot.lane.b32.xlu0 %v536, 32
  %v540 = vpop.permute.xlu0 %539
  %v542 = vmul.f32 %v535, %v540
  %544 = vrot.lane.b32.xlu0 %v542, 32
  %v545 = vpop.permute.xlu0 %544
  %v547 = vadd.f32 %v537, %v545
  %v548 = vtanh.pop %v547
  %550 = vrot.lane.b32.xlu0 %v548, 32
  %v551 = vpop.permute.xlu0 %550
  %v553 = vmul.f32 %v535, %v551
  %555 = vrot.lane.b32.xlu0 %v553, 64
  %v556 = vpop.permute.xlu0 %555
  %s558 = scalar_lea.vmem [#allocation2], 8
  %559 = vst.msk [vmem:[%s558] sm:$0x3] %vm130, %v556
  %s560 = scalar_lea.vmem [#allocation3], 6
  %561 = vst.msk [vmem:[%s560] sm:$0x3] %vm130, %v556
  %s562 = scalar_lea.vmem %s0, 10
  %v563 = vld [vmem:[%s562] sm:$0x3]
  %v564 = vsel %vm27, %v556, 0
  %566 = vmatprep.subr.mxu0 0.0
  %567 = vmatpush1.msra.mxu0 %v22
  %568 = vmatprep.subr.mxu0 0.0
  %569 = vmatpush1.msra.mxu0 %v23
  %570 = vmatprep.subr.mxu0 0.0
  %571 = vmatpush1.msra.mxu0 %v24
  %572 = vmatprep.subr.mxu0 0.0
  %573 = vmatpush1.msra.mxu0 %v25
  %574 = vmatprep.subr.mxu0 0.0
  %575 = vmatpush1.msra.mxu0 0.0
  %576 = vmatprep.subr.mxu0 0.0
  %577 = vmatpush1.msra.mxu0 0.0
  %578 = vmatprep.subr.mxu0 0.0
  %579 = vmatpush1.msra.mxu0 0.0
  %580 = vmatprep.subr.mxu0 0.0
  %581 = vmatpush1.msra.mxu0 0.0
  %582 = vmatprep.subr.mxu0 0.0
  %583 = vmatpush1.msra.mxu0 0.0
  %584 = vmatprep.subr.mxu0 0.0
  %585 = vmatpush1.msra.mxu0 0.0
  %586 = vmatprep.subr.mxu0 0.0
  %587 = vmatpush1.msra.mxu0 0.0
  %588 = vmatprep.subr.mxu0 0.0
  %589 = vmatpush1.msra.mxu0 0.0
  %590 = vmatprep.subr.mxu0 0.0
  %591 = vmatpush1.msra.mxu0 0.0
  %592 = vmatprep.subr.mxu0 0.0
  %593 = vmatpush1.msra.mxu0 0.0
  %594 = vmatprep.subr.mxu0 0.0
  %595 = vmatpush1.msra.mxu0 0.0
  %596 = vmatprep.subr.mxu0 0.0
  %597 = vmatpush1.msra.mxu0 0.0
  %598 = vmatprep.subr.mxu0 0.0
  %599 = vmatpush1.msra.mxu0 0.0
  %600 = vmatprep.subr.mxu0 0.0
  %601 = vmatpush1.msra.mxu0 0.0
  %602 = vmatprep.subr.mxu0 0.0
  %603 = vmatpush1.msra.mxu0 0.0
  %604 = vmatprep.subr.mxu0 0.0
  %605 = vmatpush1.msra.mxu0 0.0
  %606 = vmatprep.subr.mxu0 0.0
  %607 = vmatpush1.msra.mxu0 0.0
  %608 = vmatprep.subr.mxu0 0.0
  %609 = vmatpush1.msra.mxu0 0.0
  %610 = vmatprep.subr.mxu0 0.0
  %611 = vmatpush1.msra.mxu0 0.0
  %612 = vmatprep.subr.mxu0 0.0
  %613 = vmatpush1.msra.mxu0 0.0
  %614 = vmatprep.subr.mxu0 0.0
  %615 = vmatpush1.msra.mxu0 0.0
  %616 = vmatprep.subr.mxu0 0.0
  %617 = vmatpush1.msra.mxu0 0.0
  %618 = vmatprep.subr.mxu0 0.0
  %619 = vmatpush1.msra.mxu0 0.0
  %620 = vmatprep.subr.mxu0 0.0
  %621 = vmatpush1.msra.mxu0 0.0
  %622 = vmatprep.subr.mxu0 0.0
  %623 = vmatpush1.msra.mxu0 0.0
  %624 = vmatprep.subr.mxu0 0.0
  %625 = vmatpush1.msra.mxu0 0.0
  %626 = vmatprep.subr.mxu0 0.0
  %627 = vmatpush1.msra.mxu0 0.0
  %628 = vmatprep.subr.mxu0 0.0
  %629 = vmatpush1.msra.mxu0 0.0
  %630 = vmatprep.mubr.f32.mxu0 0.0
  %631 = vmatmul.mubr.f32.gmra.mrb[0].mxu0 %v564
  %v632 = vpop.f32.mrb[0].mxu0
  %v633 = vadd.f32 0.0, %v632
  %v634 = vpop.f32.mrb[0].mxu0
  %635 = vdwg.mxu0
  %v636 = vadd.f32 %v563, %v633
  %v637 = vxor.u32 %v636, 2147483648
  %v638 = vmul.f32 %v637, 1.442695
  %v639 = vpow.pop %v638
  %v640 = vadd.f32 %v639, 1.0
  %v641 = vrcp.pop %v640
  %v642 = vmul.f32 1.0, %v641
  %v643 = vtanh.pop %v636
  %v644 = vmul.f32 %v642, %v547
  %646 = vrot.lane.b32.xlu0 %v643, 32
  %v647 = vpop.permute.xlu0 %646
  %v649 = vmul.f32 %v642, %v647
  %651 = vrot.lane.b32.xlu0 %v649, 32
  %v652 = vpop.permute.xlu0 %651
  %v654 = vadd.f32 %v644, %v652
  %v655 = vtanh.pop %v654
  %657 = vrot.lane.b32.xlu0 %v655, 32
  %v658 = vpop.permute.xlu0 %657
  %v660 = vmul.f32 %v642, %v658
  %662 = vrot.lane.b32.xlu0 %v660, 64
  %v663 = vpop.permute.xlu0 %662
  %s665 = scalar_lea.vmem [#allocation2], 10
  %666 = vst.msk [vmem:[%s665] sm:$0x3] %vm130, %v663
  %s667 = scalar_lea.vmem [#allocation3], 4
  %668 = vst.msk [vmem:[%s667] sm:$0x3] %vm130, %v663
  %s669 = scalar_lea.vmem %s0, 12
  %v670 = vld [vmem:[%s669] sm:$0x3]
  %v671 = vsel %vm27, %v663, 0
  %673 = vmatprep.subr.mxu0 0.0
  %674 = vmatpush1.msra.mxu0 %v22
  %675 = vmatprep.subr.mxu0 0.0
  %676 = vmatpush1.msra.mxu0 %v23
  %677 = vmatprep.subr.mxu0 0.0
  %678 = vmatpush1.msra.mxu0 %v24
  %679 = vmatprep.subr.mxu0 0.0
  %680 = vmatpush1.msra.mxu0 %v25
  %681 = vmatprep.subr.mxu0 0.0
  %682 = vmatpush1.msra.mxu0 0.0
  %683 = vmatprep.subr.mxu0 0.0
  %684 = vmatpush1.msra.mxu0 0.0
  %685 = vmatprep.subr.mxu0 0.0
  %686 = vmatpush1.msra.mxu0 0.0
  %687 = vmatprep.subr.mxu0 0.0
  %688 = vmatpush1.msra.mxu0 0.0
  %689 = vmatprep.subr.mxu0 0.0
  %690 = vmatpush1.msra.mxu0 0.0
  %691 = vmatprep.subr.mxu0 0.0
  %692 = vmatpush1.msra.mxu0 0.0
  %693 = vmatprep.subr.mxu0 0.0
  %694 = vmatpush1.msra.mxu0 0.0
  %695 = vmatprep.subr.mxu0 0.0
  %696 = vmatpush1.msra.mxu0 0.0
  %697 = vmatprep.subr.mxu0 0.0
  %698 = vmatpush1.msra.mxu0 0.0
  %699 = vmatprep.subr.mxu0 0.0
  %700 = vmatpush1.msra.mxu0 0.0
  %701 = vmatprep.subr.mxu0 0.0
  %702 = vmatpush1.msra.mxu0 0.0
  %703 = vmatprep.subr.mxu0 0.0
  %704 = vmatpush1.msra.mxu0 0.0
  %705 = vmatprep.subr.mxu0 0.0
  %706 = vmatpush1.msra.mxu0 0.0
  %707 = vmatprep.subr.mxu0 0.0
  %708 = vmatpush1.msra.mxu0 0.0
  %709 = vmatprep.subr.mxu0 0.0
  %710 = vmatpush1.msra.mxu0 0.0
  %711 = vmatprep.subr.mxu0 0.0
  %712 = vmatpush1.msra.mxu0 0.0
  %713 = vmatprep.subr.mxu0 0.0
  %714 = vmatpush1.msra.mxu0 0.0
  %715 = vmatprep.subr.mxu0 0.0
  %716 = vmatpush1.msra.mxu0 0.0
  %717 = vmatprep.subr.mxu0 0.0
  %718 = vmatpush1.msra.mxu0 0.0
  %719 = vmatprep.subr.mxu0 0.0
  %720 = vmatpush1.msra.mxu0 0.0
  %721 = vmatprep.subr.mxu0 0.0
  %722 = vmatpush1.msra.mxu0 0.0
  %723 = vmatprep.subr.mxu0 0.0
  %724 = vmatpush1.msra.mxu0 0.0
  %725 = vmatprep.subr.mxu0 0.0
  %726 = vmatpush1.msra.mxu0 0.0
  %727 = vmatprep.subr.mxu0 0.0
  %728 = vmatpush1.msra.mxu0 0.0
  %729 = vmatprep.subr.mxu0 0.0
  %730 = vmatpush1.msra.mxu0 0.0
  %731 = vmatprep.subr.mxu0 0.0
  %732 = vmatpush1.msra.mxu0 0.0
  %733 = vmatprep.subr.mxu0 0.0
  %734 = vmatpush1.msra.mxu0 0.0
  %735 = vmatprep.subr.mxu0 0.0
  %736 = vmatpush1.msra.mxu0 0.0
  %737 = vmatprep.mubr.f32.mxu0 0.0
  %738 = vmatmul.mubr.f32.gmra.mrb[0].mxu0 %v671
  %v739 = vpop.f32.mrb[0].mxu0
  %v740 = vadd.f32 0.0, %v739
  %v741 = vpop.f32.mrb[0].mxu0
  %742 = vdwg.mxu0
  %v743 = vadd.f32 %v670, %v740
  %v744 = vxor.u32 %v743, 2147483648
  %v745 = vmul.f32 %v744, 1.442695
  %v746 = vpow.pop %v745
  %v747 = vadd.f32 %v746, 1.0
  %v748 = vrcp.pop %v747
  %v749 = vmul.f32 1.0, %v748
  %v750 = vtanh.pop %v743
  %v751 = vmul.f32 %v749, %v654
  %753 = vrot.lane.b32.xlu0 %v750, 32
  %v754 = vpop.permute.xlu0 %753
  %v756 = vmul.f32 %v749, %v754
  %758 = vrot.lane.b32.xlu0 %v756, 32
  %v759 = vpop.permute.xlu0 %758
  %v761 = vadd.f32 %v751, %v759
  %v762 = vtanh.pop %v761
  %764 = vrot.lane.b32.xlu0 %v762, 32
  %v765 = vpop.permute.xlu0 %764
  %v767 = vmul.f32 %v749, %v765
  %769 = vrot.lane.b32.xlu0 %v767, 64
  %v770 = vpop.permute.xlu0 %769
  %s772 = scalar_lea.vmem [#allocation2], 12
  %773 = vst.msk [vmem:[%s772] sm:$0x3] %vm130, %v770
  %s774 = scalar_lea.vmem [#allocation3], 2
  %775 = vst.msk [vmem:[%s774] sm:$0x3] %vm130, %v770
  %s776 = scalar_lea.vmem %s0, 14
  %v777 = vld [vmem:[%s776] sm:$0x3]
  %v778 = vsel %vm27, %v770, 0
  %780 = vmatprep.subr.mxu0 0.0
  %781 = vmatpush1.msra.mxu0 %v22
  %782 = vmatprep.subr.mxu0 0.0
  %783 = vmatpush1.msra.mxu0 %v23
  %784 = vmatprep.subr.mxu0 0.0
  %785 = vmatpush1.msra.mxu0 %v24
  %786 = vmatprep.subr.mxu0 0.0
  %787 = vmatpush1.msra.mxu0 %v25
  %788 = vmatprep.subr.mxu0 0.0
  %789 = vmatpush1.msra.mxu0 0.0
  %790 = vmatprep.subr.mxu0 0.0
  %791 = vmatpush1.msra.mxu0 0.0
  %792 = vmatprep.subr.mxu0 0.0
  %793 = vmatpush1.msra.mxu0 0.0
  %794 = vmatprep.subr.mxu0 0.0
  %795 = vmatpush1.msra.mxu0 0.0
  %796 = vmatprep.subr.mxu0 0.0
  %797 = vmatpush1.msra.mxu0 0.0
  %798 = vmatprep.subr.mxu0 0.0
  %799 = vmatpush1.msra.mxu0 0.0
  %800 = vmatprep.subr.mxu0 0.0
  %801 = vmatpush1.msra.mxu0 0.0
  %802 = vmatprep.subr.mxu0 0.0
  %803 = vmatpush1.msra.mxu0 0.0
  %804 = vmatprep.subr.mxu0 0.0
  %805 = vmatpush1.msra.mxu0 0.0
  %806 = vmatprep.subr.mxu0 0.0
  %807 = vmatpush1.msra.mxu0 0.0
  %808 = vmatprep.subr.mxu0 0.0
  %809 = vmatpush1.msra.mxu0 0.0
  %810 = vmatprep.subr.mxu0 0.0
  %811 = vmatpush1.msra.mxu0 0.0
  %812 = vmatprep.subr.mxu0 0.0
  %813 = vmatpush1.msra.mxu0 0.0
  %814 = vmatprep.subr.mxu0 0.0
  %815 = vmatpush1.msra.mxu0 0.0
  %816 = vmatprep.subr.mxu0 0.0
  %817 = vmatpush1.msra.mxu0 0.0
  %818 = vmatprep.subr.mxu0 0.0
  %819 = vmatpush1.msra.mxu0 0.0
  %820 = vmatprep.subr.mxu0 0.0
  %821 = vmatpush1.msra.mxu0 0.0
  %822 = vmatprep.subr.mxu0 0.0
  %823 = vmatpush1.msra.mxu0 0.0
  %824 = vmatprep.subr.mxu0 0.0
  %825 = vmatpush1.msra.mxu0 0.0
  %826 = vmatprep.subr.mxu0 0.0
  %827 = vmatpush1.msra.mxu0 0.0
  %828 = vmatprep.subr.mxu0 0.0
  %829 = vmatpush1.msra.mxu0 0.0
  %830 = vmatprep.subr.mxu0 0.0
  %831 = vmatpush1.msra.mxu0 0.0
  %832 = vmatprep.subr.mxu0 0.0
  %833 = vmatpush1.msra.mxu0 0.0
  %834 = vmatprep.subr.mxu0 0.0
  %835 = vmatpush1.msra.mxu0 0.0
  %836 = vmatprep.subr.mxu0 0.0
  %837 = vmatpush1.msra.mxu0 0.0
  %838 = vmatprep.subr.mxu0 0.0
  %839 = vmatpush1.msra.mxu0 0.0
  %840 = vmatprep.subr.mxu0 0.0
  %841 = vmatpush1.msra.mxu0 0.0
  %842 = vmatprep.subr.mxu0 0.0
  %843 = vmatpush1.msra.mxu0 0.0
  %844 = vmatprep.mubr.f32.mxu0 0.0
  %845 = vmatmul.mubr.f32.gmra.mrb[0].mxu0 %v778
  %v846 = vpop.f32.mrb[0].mxu0
  %v847 = vadd.f32 0.0, %v846
  %v848 = vpop.f32.mrb[0].mxu0
  %849 = vdwg.mxu0
  %v850 = vadd.f32 %v777, %v847
  %v851 = vxor.u32 %v850, 2147483648
  %v852 = vmul.f32 %v851, 1.442695
  %v853 = vpow.pop %v852
  %v854 = vadd.f32 %v853, 1.0
  %v855 = vrcp.pop %v854
  %v856 = vmul.f32 1.0, %v855
  %v857 = vtanh.pop %v850
  %v858 = vmul.f32 %v856, %v761
  %860 = vrot.lane.b32.xlu0 %v857, 32
  %v861 = vpop.permute.xlu0 %860
  %v863 = vmul.f32 %v856, %v861
  %865 = vrot.lane.b32.xlu0 %v863, 32
  %v866 = vpop.permute.xlu0 %865
  %v868 = vadd.f32 %v858, %v866
  %v869 = vtanh.pop %v868
  %871 = vrot.lane.b32.xlu0 %v869, 32
  %v872 = vpop.permute.xlu0 %871
  %v874 = vmul.f32 %v856, %v872
  %876 = vrot.lane.b32.xlu0 %v874, 64
  %v877 = vpop.permute.xlu0 %876
  %s879 = scalar_lea.vmem [#allocation2], 14
  %880 = vst.msk [vmem:[%s879] sm:$0x3] %vm130, %v877
  %881 = vst.msk [vmem:[#allocation3] sm:$0x3] %vm130, %v877
  %v882 = vld [vmem:[#allocation2] sm:$0x3]
  %v883 = vld [vmem:[#allocation2 + $0x2] sm:$0x3]
  %v884 = vld [vmem:[#allocation2 + $0x4] sm:$0x3]
  %v885 = vld [vmem:[#allocation2 + $0x6] sm:$0x3]
  %v886 = vld [vmem:[#allocation2 + $0x8] sm:$0x3]
  %v887 = vld [vmem:[#allocation2 + $0xa] sm:$0x3]
  %v888 = vld [vmem:[#allocation2 + $0xc] sm:$0x3]
  %v889 = vld [vmem:[#allocation2 + $0xe] sm:$0x3]
  %v890 = vld [vmem:[#allocation3] sm:$0x3]
  %v891 = vld [vmem:[#allocation3 + $0x2] sm:$0x3]
  %v892 = vld [vmem:[#allocation3 + $0x4] sm:$0x3]
  %v893 = vld [vmem:[#allocation3 + $0x6] sm:$0x3]
  %v894 = vld [vmem:[#allocation3 + $0x8] sm:$0x3]
  %v895 = vld [vmem:[#allocation3 + $0xa] sm:$0x3]
  %v896 = vld [vmem:[#allocation3 + $0xc] sm:$0x3]
  %v897 = vld [vmem:[#allocation3 + $0xe] sm:$0x3]
  %v898 = vld [vmem:[%s2] sm:$0xff]
  %v899 = vld [vmem:[%s2 + $0x8] sm:$0xff]
  %v900 = vld [vmem:[%s2 + $0x10] sm:$0xff]
  %v901 = vld [vmem:[%s2 + $0x18] sm:$0xff]
  %v902 = vld [vmem:[%s3] sm:$0xff]
  %v903 = vld [vmem:[%s3 + $0x8] sm:$0xff]
  %v904 = vld [vmem:[%s3 + $0x10] sm:$0xff]
  %v905 = vld [vmem:[%s3 + $0x18] sm:$0xff]
  %v914 = vcombine.low %v890, %v891
  %v915 = vcombine.low %v892, %v893
  %v917 = vunpack.c.l.s4 1983009808
  %v918 = vunpack.c.0.s8 %v917
  %v919 = vlaneseq
  %v920 = vshrl.u32 %v919, 7
  %v921 = vsub.s32 %v918, %v920
  %v922 = vrot.slane %v914, %v921
  %v924 = vunpack.c.l.s4 1983009808
  %v925 = vunpack.c.0.s8 %v924
  %v926 = vlaneseq
  %v927 = vshrl.u32 %v926, 7
  %v928 = vsub.s32 %v925, %v927
  %v929 = vrot.slane %v915, %v928
  %v930 = vcombine.low %v922, %v929
  %v931 = vcombine.low %v894, %v895
  %v932 = vcombine.low %v896, %v897
  %v934 = vunpack.c.l.s4 1983009808
  %v935 = vunpack.c.0.s8 %v934
  %v936 = vlaneseq
  %v937 = vshrl.u32 %v936, 7
  %v938 = vsub.s32 %v935, %v937
  %v939 = vrot.slane %v931, %v938
  %v941 = vunpack.c.l.s4 1983009808
  %v942 = vunpack.c.0.s8 %v941
  %v943 = vlaneseq
  %v944 = vshrl.u32 %v943, 7
  %v945 = vsub.s32 %v942, %v944
  %v946 = vrot.slane %v932, %v945
  %v947 = vcombine.low %v939, %v946
  %v948 = vsel %vm27, %v930, 0
  %v950 = vsel %vm27, %v947, 0
  %952 = vmatprep.subr.mxu0 0.0
  %953 = vmatpush1.msra.mxu0 %v902
  %954 = vmatprep.subr.mxu0 0.0
  %955 = vmatpush1.msra.mxu0 %v903
  %956 = vmatprep.subr.mxu0 0.0
  %957 = vmatpush1.msra.mxu0 %v904
  %958 = vmatprep.subr.mxu0 0.0
  %959 = vmatpush1.msra.mxu0 %v905
  %960 = vmatprep.subr.mxu0 0.0
  %961 = vmatpush1.msra.mxu0 0.0
  %962 = vmatprep.subr.mxu0 0.0
  %963 = vmatpush1.msra.mxu0 0.0
  %964 = vmatprep.subr.mxu0 0.0
  %965 = vmatpush1.msra.mxu0 0.0
  %966 = vmatprep.subr.mxu0 0.0
  %967 = vmatpush1.msra.mxu0 0.0
  %968 = vmatprep.subr.mxu0 0.0
  %969 = vmatpush1.msra.mxu0 0.0
  %970 = vmatprep.subr.mxu0 0.0
  %971 = vmatpush1.msra.mxu0 0.0
  %972 = vmatprep.subr.mxu0 0.0
  %973 = vmatpush1.msra.mxu0 0.0
  %974 = vmatprep.subr.mxu0 0.0
  %975 = vmatpush1.msra.mxu0 0.0
  %976 = vmatprep.subr.mxu0 0.0
  %977 = vmatpush1.msra.mxu0 0.0
  %978 = vmatprep.subr.mxu0 0.0
  %979 = vmatpush1.msra.mxu0 0.0
  %980 = vmatprep.subr.mxu0 0.0
  %981 = vmatpush1.msra.mxu0 0.0
  %982 = vmatprep.subr.mxu0 0.0
  %983 = vmatpush1.msra.mxu0 0.0
  %984 = vmatprep.subr.mxu0 0.0
  %985 = vmatpush1.msra.mxu0 0.0
  %986 = vmatprep.subr.mxu0 0.0
  %987 = vmatpush1.msra.mxu0 0.0
  %988 = vmatprep.subr.mxu0 0.0
  %989 = vmatpush1.msra.mxu0 0.0
  %990 = vmatprep.subr.mxu0 0.0
  %991 = vmatpush1.msra.mxu0 0.0
  %992 = vmatprep.subr.mxu0 0.0
  %993 = vmatpush1.msra.mxu0 0.0
  %994 = vmatprep.subr.mxu0 0.0
  %995 = vmatpush1.msra.mxu0 0.0
  %996 = vmatprep.subr.mxu0 0.0
  %997 = vmatpush1.msra.mxu0 0.0
  %998 = vmatprep.subr.mxu0 0.0
  %999 = vmatpush1.msra.mxu0 0.0
  %1000 = vmatprep.subr.mxu0 0.0
  %1001 = vmatpush1.msra.mxu0 0.0
  %1002 = vmatprep.subr.mxu0 0.0
  %1003 = vmatpush1.msra.mxu0 0.0
  %1004 = vmatprep.subr.mxu0 0.0
  %1005 = vmatpush1.msra.mxu0 0.0
  %1006 = vmatprep.subr.mxu0 0.0
  %1007 = vmatpush1.msra.mxu0 0.0
  %1008 = vmatprep.subr.mxu0 0.0
  %1009 = vmatpush1.msra.mxu0 0.0
  %1010 = vmatprep.subr.mxu0 0.0
  %1011 = vmatpush1.msra.mxu0 0.0
  %1012 = vmatprep.subr.mxu0 0.0
  %1013 = vmatpush1.msra.mxu0 0.0
  %1014 = vmatprep.subr.mxu0 0.0
  %1015 = vmatpush1.msra.mxu0 0.0
  %1016 = vmatprep.mubr.f32.mxu0 0.0
  %1017 = vmatmul.mubr.f32.gmra.mrb[0].mxu0 %v948
  %v1018 = vpop.f32.mrb[0].mxu0
  %v1019 = vadd.f32 0.0, %v1018
  %v1020 = vpop.f32.mrb[0].mxu0
  %1021 = vmatprep.mubr.f32.mxu0 0.0
  %1022 = vmatmul.mubr.f32.gmra.mrb[0].mxu0 %v950
  %v1023 = vpop.f32.mrb[0].mxu0
  %v1024 = vadd.f32 0.0, %v1023
  %v1025 = vpop.f32.mrb[0].mxu0
  %1026 = vdwg.mxu0
  %v1035 = vcombine.low %v882, %v883
  %v1036 = vcombine.low %v884, %v885
  %v1038 = vunpack.c.l.s4 1983009808
  %v1039 = vunpack.c.0.s8 %v1038
  %v1040 = vlaneseq
  %v1041 = vshrl.u32 %v1040, 7
  %v1042 = vsub.s32 %v1039, %v1041
  %v1043 = vrot.slane %v1035, %v1042
  %v1045 = vunpack.c.l.s4 1983009808
  %v1046 = vunpack.c.0.s8 %v1045
  %v1047 = vlaneseq
  %v1048 = vshrl.u32 %v1047, 7
  %v1049 = vsub.s32 %v1046, %v1048
  %v1050 = vrot.slane %v1036, %v1049
  %v1051 = vcombine.low %v1043, %v1050
  %v1052 = vcombine.low %v886, %v887
  %v1053 = vcombine.low %v888, %v889
  %v1055 = vunpack.c.l.s4 1983009808
  %v1056 = vunpack.c.0.s8 %v1055
  %v1057 = vlaneseq
  %v1058 = vshrl.u32 %v1057, 7
  %v1059 = vsub.s32 %v1056, %v1058
  %v1060 = vrot.slane %v1052, %v1059
  %v1062 = vunpack.c.l.s4 1983009808
  %v1063 = vunpack.c.0.s8 %v1062
  %v1064 = vlaneseq
  %v1065 = vshrl.u32 %v1064, 7
  %v1066 = vsub.s32 %v1063, %v1065
  %v1067 = vrot.slane %v1053, %v1066
  %v1068 = vcombine.low %v1060, %v1067
  %v1069 = vsel %vm27, %v1051, 0
  %v1071 = vsel %vm27, %v1068, 0
  %1073 = vmatprep.subr.mxu0 0.0
  %1074 = vmatpush1.msra.mxu0 %v898
  %1075 = vmatprep.subr.mxu0 0.0
  %1076 = vmatpush1.msra.mxu0 %v899
  %1077 = vmatprep.subr.mxu0 0.0
  %1078 = vmatpush1.msra.mxu0 %v900
  %1079 = vmatprep.subr.mxu0 0.0
  %1080 = vmatpush1.msra.mxu0 %v901
  %1081 = vmatprep.subr.mxu0 0.0
  %1082 = vmatpush1.msra.mxu0 0.0
  %1083 = vmatprep.subr.mxu0 0.0
  %1084 = vmatpush1.msra.mxu0 0.0
  %1085 = vmatprep.subr.mxu0 0.0
  %1086 = vmatpush1.msra.mxu0 0.0
  %1087 = vmatprep.subr.mxu0 0.0
  %1088 = vmatpush1.msra.mxu0 0.0
  %1089 = vmatprep.subr.mxu0 0.0
  %1090 = vmatpush1.msra.mxu0 0.0
  %1091 = vmatprep.subr.mxu0 0.0
  %1092 = vmatpush1.msra.mxu0 0.0
  %1093 = vmatprep.subr.mxu0 0.0
  %1094 = vmatpush1.msra.mxu0 0.0
  %1095 = vmatprep.subr.mxu0 0.0
  %1096 = vmatpush1.msra.mxu0 0.0
  %1097 = vmatprep.subr.mxu0 0.0
  %1098 = vmatpush1.msra.mxu0 0.0
  %1099 = vmatprep.subr.mxu0 0.0
  %1100 = vmatpush1.msra.mxu0 0.0
  %1101 = vmatprep.subr.mxu0 0.0
  %1102 = vmatpush1.msra.mxu0 0.0
  %1103 = vmatprep.subr.mxu0 0.0
  %1104 = vmatpush1.msra.mxu0 0.0
  %1105 = vmatprep.subr.mxu0 0.0
  %1106 = vmatpush1.msra.mxu0 0.0
  %1107 = vmatprep.subr.mxu0 0.0
  %1108 = vmatpush1.msra.mxu0 0.0
  %1109 = vmatprep.subr.mxu0 0.0
  %1110 = vmatpush1.msra.mxu0 0.0
  %1111 = vmatprep.subr.mxu0 0.0
  %1112 = vmatpush1.msra.mxu0 0.0
  %1113 = vmatprep.subr.mxu0 0.0
  %1114 = vmatpush1.msra.mxu0 0.0
  %1115 = vmatprep.subr.mxu0 0.0
  %1116 = vmatpush1.msra.mxu0 0.0
  %1117 = vmatprep.subr.mxu0 0.0
  %1118 = vmatpush1.msra.mxu0 0.0
  %1119 = vmatprep.subr.mxu0 0.0
  %1120 = vmatpush1.msra.mxu0 0.0
  %1121 = vmatprep.subr.mxu0 0.0
  %1122 = vmatpush1.msra.mxu0 0.0
  %1123 = vmatprep.subr.mxu0 0.0
  %1124 = vmatpush1.msra.mxu0 0.0
  %1125 = vmatprep.subr.mxu0 0.0
  %1126 = vmatpush1.msra.mxu0 0.0
  %1127 = vmatprep.subr.mxu0 0.0
  %1128 = vmatpush1.msra.mxu0 0.0
  %1129 = vmatprep.subr.mxu0 0.0
  %1130 = vmatpush1.msra.mxu0 0.0
  %1131 = vmatprep.subr.mxu0 0.0
  %1132 = vmatpush1.msra.mxu0 0.0
  %1133 = vmatprep.subr.mxu0 0.0
  %1134 = vmatpush1.msra.mxu0 0.0
  %1135 = vmatprep.subr.mxu0 0.0
  %1136 = vmatpush1.msra.mxu0 0.0
  %1137 = vmatprep.mubr.f32.mxu0 0.0
  %1138 = vmatmul.mubr.f32.gmra.mrb[0].mxu0 %v1069
  %v1139 = vpop.f32.mrb[0].mxu0
  %v1140 = vadd.f32 %v1019, %v1139
  %v1141 = vpop.f32.mrb[0].mxu0
  %1142 = vmatprep.mubr.f32.mxu0 0.0
  %1143 = vmatmul.mubr.f32.gmra.mrb[0].mxu0 %v1071
  %v1144 = vpop.f32.mrb[0].mxu0
  %v1145 = vadd.f32 %v1024, %v1144
  %v1146 = vpop.f32.mrb[0].mxu0
  %1147 = vdwg.mxu0
  %v1148 = vld [vmem:[%s4] sm:$0x1]
  %v1150 = vlaneseq
  %v1151 = vshrl.u32 %v1150, 7
  %v1152 = vsub.s32 0, %v1151
  %v1153 = vrot.slane %v1148, %v1152
  %v1155 = vadd.f32 %v1140, %v1153
  %v1156 = vadd.f32 %v1145, %v1153
  %v1159 = vcombine.high %v1155, %v1155
  %v1161 = vunpack.c.l.s4 1983009808
  %v1162 = vunpack.c.0.s8 %v1161
  %v1163 = vlaneseq
  %v1164 = vshrl.u32 %v1163, 7
  %v1165 = vsub.s32 %v1162, %v1164
  %v1166 = vrot.slane %v1155, %v1165
  %v1168 = vunpack.c.l.s4 1983009808
  %v1169 = vunpack.c.0.s8 %v1168
  %v1170 = vlaneseq
  %v1171 = vshrl.u32 %v1170, 7
  %v1172 = vsub.s32 %v1169, %v1171
  %v1173 = vrot.slane %v1159, %v1172
  %v1174 = vcombine.high %v1166, %v1166
  %v1175 = vcombine.high %v1173, %v1173
  %v1176 = vcombine.high %v1156, %v1156
  %v1178 = vunpack.c.l.s4 1983009808
  %v1179 = vunpack.c.0.s8 %v1178
  %v1180 = vlaneseq
  %v1181 = vshrl.u32 %v1180, 7
  %v1182 = vsub.s32 %v1179, %v1181
  %v1183 = vrot.slane %v1156, %v1182
  %v1185 = vunpack.c.l.s4 1983009808
  %v1186 = vunpack.c.0.s8 %v1185
  %v1187 = vlaneseq
  %v1188 = vshrl.u32 %v1187, 7
  %v1189 = vsub.s32 %v1186, %v1188
  %v1190 = vrot.slane %v1176, %v1189
  %v1191 = vcombine.high %v1183, %v1183
  %v1192 = vcombine.high %v1190, %v1190
  %1201 = vst [vmem:[#allocation4] sm:$0x3] %v1166
  %1202 = vst [vmem:[#allocation4 + $0x2] sm:$0x3] %v1174
  %1203 = vst [vmem:[#allocation4 + $0x4] sm:$0x3] %v1173
  %1204 = vst [vmem:[#allocation4 + $0x6] sm:$0x3] %v1175
  %1205 = vst [vmem:[#allocation4 + $0x8] sm:$0x3] %v1183
  %1206 = vst [vmem:[#allocation4 + $0xa] sm:$0x3] %v1191
  %1207 = vst [vmem:[#allocation4 + $0xc] sm:$0x3] %v1190
  %1208 = vst [vmem:[#allocation4 + $0xe] sm:$0x3] %v1192
  %s1209 = scalar_lea.vmem %s1, 32
  %v1210 = vld [vmem:[%s1209] sm:$0xff]
  %v1211 = vld [vmem:[%s1209 + $0x8] sm:$0xff]
  %v1212 = vld [vmem:[%s1209 + $0x10] sm:$0xff]
  %v1213 = vld [vmem:[%s1209 + $0x18] sm:$0xff]
  %v1214 = vld [vmem:[#allocation4] sm:$0x3]
  %1215 = vmatprep.subr.mxu0 0.0
  %1216 = vmatpush1.msra.mxu0 %v1210
  %1217 = vmatprep.subr.mxu0 0.0
  %1218 = vmatpush1.msra.mxu0 %v1211
  %1219 = vmatprep.subr.mxu0 0.0
  %1220 = vmatpush1.msra.mxu0 %v1212
  %1221 = vmatprep.subr.mxu0 0.0
  %1222 = vmatpush1.msra.mxu0 %v1213
  %1223 = vmatprep.subr.mxu0 0.0
  %1224 = vmatpush1.msra.mxu0 0.0
  %1225 = vmatprep.subr.mxu0 0.0
  %1226 = vmatpush1.msra.mxu0 0.0
  %1227 = vmatprep.subr.mxu0 0.0
  %1228 = vmatpush1.msra.mxu0 0.0
  %1229 = vmatprep.subr.mxu0 0.0
  %1230 = vmatpush1.msra.mxu0 0.0
  %1231 = vmatprep.subr.mxu0 0.0
  %1232 = vmatpush1.msra.mxu0 0.0
  %1233 = vmatprep.subr.mxu0 0.0
  %1234 = vmatpush1.msra.mxu0 0.0
  %1235 = vmatprep.subr.mxu0 0.0
  %1236 = vmatpush1.msra.mxu0 0.0
  %1237 = vmatprep.subr.mxu0 0.0
  %1238 = vmatpush1.msra.mxu0 0.0
  %1239 = vmatprep.subr.mxu0 0.0
  %1240 = vmatpush1.msra.mxu0 0.0
  %1241 = vmatprep.subr.mxu0 0.0
  %1242 = vmatpush1.msra.mxu0 0.0
  %1243 = vmatprep.subr.mxu0 0.0
  %1244 = vmatpush1.msra.mxu0 0.0
  %1245 = vmatprep.subr.mxu0 0.0
  %1246 = vmatpush1.msra.mxu0 0.0
  %1247 = vmatprep.subr.mxu0 0.0
  %1248 = vmatpush1.msra.mxu0 0.0
  %1249 = vmatprep.subr.mxu0 0.0
  %1250 = vmatpush1.msra.mxu0 0.0
  %1251 = vmatprep.subr.mxu0 0.0
  %1252 = vmatpush1.msra.mxu0 0.0
  %1253 = vmatprep.subr.mxu0 0.0
  %1254 = vmatpush1.msra.mxu0 0.0
  %1255 = vmatprep.subr.mxu0 0.0
  %1256 = vmatpush1.msra.mxu0 0.0
  %1257 = vmatprep.subr.mxu0 0.0
  %1258 = vmatpush1.msra.mxu0 0.0
  %1259 = vmatprep.subr.mxu0 0.0
  %1260 = vmatpush1.msra.mxu0 0.0
  %1261 = vmatprep.subr.mxu0 0.0
  %1262 = vmatpush1.msra.mxu0 0.0
  %1263 = vmatprep.subr.mxu0 0.0
  %1264 = vmatpush1.msra.mxu0 0.0
  %1265 = vmatprep.subr.mxu0 0.0
  %1266 = vmatpush1.msra.mxu0 0.0
  %1267 = vmatprep.subr.mxu0 0.0
  %1268 = vmatpush1.msra.mxu0 0.0
  %1269 = vmatprep.subr.mxu0 0.0
  %1270 = vmatpush1.msra.mxu0 0.0
  %1271 = vmatprep.subr.mxu0 0.0
  %1272 = vmatpush1.msra.mxu0 0.0
  %1273 = vmatprep.subr.mxu0 0.0
  %1274 = vmatpush1.msra.mxu0 0.0
  %1275 = vmatprep.subr.mxu0 0.0
  %1276 = vmatpush1.msra.mxu0 0.0
  %1277 = vmatprep.subr.mxu0 0.0
  %1278 = vmatpush1.msra.mxu0 0.0
  %1279 = vmatprep.mubr.f32.mxu0 0.0
  %1280 = vmatmul.mubr.f32.gmra.mrb[0].mxu0 %v29
  %v1281 = vpop.f32.mrb[0].mxu0
  %v1282 = vadd.f32 0.0, %v1281
  %v1283 = vpop.f32.mrb[0].mxu0
  %1284 = vdwg.mxu0
  %v1285 = vadd.f32 %v1214, %v1282
  %v1286 = vxor.u32 %v1285, 2147483648
  %v1287 = vmul.f32 %v1286, 1.442695
  %v1288 = vpow.pop %v1287
  %v1289 = vadd.f32 %v1288, 1.0
  %v1290 = vrcp.pop %v1289
  %v1291 = vmul.f32 1.0, %v1290
  %v1292 = vtanh.pop %v1285
  %v1293 = vmul.f32 %v1291, 0.0
  %1295 = vrot.lane.b32.xlu0 %v1292, 32
  %v1296 = vpop.permute.xlu0 %1295
  %v1298 = vmul.f32 %v1291, %v1296
  %1300 = vrot.lane.b32.xlu0 %v1298, 32
  %v1301 = vpop.permute.xlu0 %1300
  %v1303 = vadd.f32 %v1293, %v1301
  %v1304 = vtanh.pop %v1303
  %1306 = vrot.lane.b32.xlu0 %v1304, 32
  %v1307 = vpop.permute.xlu0 %1306
  %v1309 = vmul.f32 %v1291, %v1307
  %1311 = vrot.lane.b32.xlu0 %v1309, 64
  %v1312 = vpop.permute.xlu0 %1311
  %vm1314 = vcmask 123904
  %1315 = vst.msk [vmem:[%s5] sm:$0x3] %vm1314, %v1312
  %1316 = vrot.lane.b32.xlu0 %v1309, 48
  %v1317 = vpop.permute.xlu0 %1316
  %s1319 = scalar_lea.vmem %s6, 14
  %1320 = vst.msk [vmem:[%s1319] sm:$0x3] %vm1314, %v1317
  %s1321 = scalar_lea.vmem [#allocation4], 2
  %v1322 = vld [vmem:[%s1321] sm:$0x3]
  %v1323 = vsel %vm27, %v1312, 0
  %1325 = vmatprep.subr.mxu0 0.0
  %1326 = vmatpush1.msra.mxu0 %v1210
  %1327 = vmatprep.subr.mxu0 0.0
  %1328 = vmatpush1.msra.mxu0 %v1211
  %1329 = vmatprep.subr.mxu0 0.0
  %1330 = vmatpush1.msra.mxu0 %v1212
  %1331 = vmatprep.subr.mxu0 0.0
  %1332 = vmatpush1.msra.mxu0 %v1213
  %1333 = vmatprep.subr.mxu0 0.0
  %1334 = vmatpush1.msra.mxu0 0.0
  %1335 = vmatprep.subr.mxu0 0.0
  %1336 = vmatpush1.msra.mxu0 0.0
  %1337 = vmatprep.subr.mxu0 0.0
  %1338 = vmatpush1.msra.mxu0 0.0
  %1339 = vmatprep.subr.mxu0 0.0
  %1340 = vmatpush1.msra.mxu0 0.0
  %1341 = vmatprep.subr.mxu0 0.0
  %1342 = vmatpush1.msra.mxu0 0.0
  %1343 = vmatprep.subr.mxu0 0.0
  %1344 = vmatpush1.msra.mxu0 0.0
  %1345 = vmatprep.subr.mxu0 0.0
  %1346 = vmatpush1.msra.mxu0 0.0
  %1347 = vmatprep.subr.mxu0 0.0
  %1348 = vmatpush1.msra.mxu0 0.0
  %1349 = vmatprep.subr.mxu0 0.0
  %1350 = vmatpush1.msra.mxu0 0.0
  %1351 = vmatprep.subr.mxu0 0.0
  %1352 = vmatpush1.msra.mxu0 0.0
  %1353 = vmatprep.subr.mxu0 0.0
  %1354 = vmatpush1.msra.mxu0 0.0
  %1355 = vmatprep.subr.mxu0 0.0
  %1356 = vmatpush1.msra.mxu0 0.0
  %1357 = vmatprep.subr.mxu0 0.0
  %1358 = vmatpush1.msra.mxu0 0.0
  %1359 = vmatprep.subr.mxu0 0.0
  %1360 = vmatpush1.msra.mxu0 0.0
  %1361 = vmatprep.subr.mxu0 0.0
  %1362 = vmatpush1.msra.mxu0 0.0
  %1363 = vmatprep.subr.mxu0 0.0
  %1364 = vmatpush1.msra.mxu0 0.0
  %1365 = vmatprep.subr.mxu0 0.0
  %1366 = vmatpush1.msra.mxu0 0.0
  %1367 = vmatprep.subr.mxu0 0.0
  %1368 = vmatpush1.msra.mxu0 0.0
  %1369 = vmatprep.subr.mxu0 0.0
  %1370 = vmatpush1.msra.mxu0 0.0
  %1371 = vmatprep.subr.mxu0 0.0
  %1372 = vmatpush1.msra.mxu0 0.0
  %1373 = vmatprep.subr.mxu0 0.0
  %1374 = vmatpush1.msra.mxu0 0.0
  %1375 = vmatprep.subr.mxu0 0.0
  %1376 = vmatpush1.msra.mxu0 0.0
  %1377 = vmatprep.subr.mxu0 0.0
  %1378 = vmatpush1.msra.mxu0 0.0
  %1379 = vmatprep.subr.mxu0 0.0
  %1380 = vmatpush1.msra.mxu0 0.0
  %1381 = vmatprep.subr.mxu0 0.0
  %1382 = vmatpush1.msra.mxu0 0.0
  %1383 = vmatprep.subr.mxu0 0.0
  %1384 = vmatpush1.msra.mxu0 0.0
  %1385 = vmatprep.subr.mxu0 0.0
  %1386 = vmatpush1.msra.mxu0 0.0
  %1387 = vmatprep.subr.mxu0 0.0
  %1388 = vmatpush1.msra.mxu0 0.0
  %1389 = vmatprep.mubr.f32.mxu0 0.0
  %1390 = vmatmul.mubr.f32.gmra.mrb[0].mxu0 %v1323
  %v1391 = vpop.f32.mrb[0].mxu0
  %v1392 = vadd.f32 0.0, %v1391
  %v1393 = vpop.f32.mrb[0].mxu0
  %1394 = vdwg.mxu0
  %v1395 = vadd.f32 %v1322, %v1392
  %v1396 = vxor.u32 %v1395, 2147483648
  %v1397 = vmul.f32 %v1396, 1.442695
  %v1398 = vpow.pop %v1397
  %v1399 = vadd.f32 %v1398, 1.0
  %v1400 = vrcp.pop %v1399
  %v1401 = vmul.f32 1.0, %v1400
  %v1402 = vtanh.pop %v1395
  %v1403 = vmul.f32 %v1401, %v1303
  %1405 = vrot.lane.b32.xlu0 %v1402, 32
  %v1406 = vpop.permute.xlu0 %1405
  %v1408 = vmul.f32 %v1401, %v1406
  %1410 = vrot.lane.b32.xlu0 %v1408, 32
  %v1411 = vpop.permute.xlu0 %1410
  %v1413 = vadd.f32 %v1403, %v1411
  %v1414 = vtanh.pop %v1413
  %1416 = vrot.lane.b32.xlu0 %v1414, 32
  %v1417 = vpop.permute.xlu0 %1416
  %v1419 = vmul.f32 %v1401, %v1417
  %1421 = vrot.lane.b32.xlu0 %v1419, 64
  %v1422 = vpop.permute.xlu0 %1421
  %s1424 = scalar_lea.vmem %s5, 2
  %1425 = vst.msk [vmem:[%s1424] sm:$0x3] %vm1314, %v1422
  %1426 = vrot.lane.b32.xlu0 %v1419, 48
  %v1427 = vpop.permute.xlu0 %1426
  %s1429 = scalar_lea.vmem %s6, 12
  %1430 = vst.msk [vmem:[%s1429] sm:$0x3] %vm1314, %v1427
  %s1431 = scalar_lea.vmem [#allocation4], 4
  %v1432 = vld [vmem:[%s1431] sm:$0x3]
  %v1433 = vsel %vm27, %v1422, 0
  %1435 = vmatprep.subr.mxu0 0.0
  %1436 = vmatpush1.msra.mxu0 %v1210
  %1437 = vmatprep.subr.mxu0 0.0
  %1438 = vmatpush1.msra.mxu0 %v1211
  %1439 = vmatprep.subr.mxu0 0.0
  %1440 = vmatpush1.msra.mxu0 %v1212
  %1441 = vmatprep.subr.mxu0 0.0
  %1442 = vmatpush1.msra.mxu0 %v1213
  %1443 = vmatprep.subr.mxu0 0.0
  %1444 = vmatpush1.msra.mxu0 0.0
  %1445 = vmatprep.subr.mxu0 0.0
  %1446 = vmatpush1.msra.mxu0 0.0
  %1447 = vmatprep.subr.mxu0 0.0
  %1448 = vmatpush1.msra.mxu0 0.0
  %1449 = vmatprep.subr.mxu0 0.0
  %1450 = vmatpush1.msra.mxu0 0.0
  %1451 = vmatprep.subr.mxu0 0.0
  %1452 = vmatpush1.msra.mxu0 0.0
  %1453 = vmatprep.subr.mxu0 0.0
  %1454 = vmatpush1.msra.mxu0 0.0
  %1455 = vmatprep.subr.mxu0 0.0
  %1456 = vmatpush1.msra.mxu0 0.0
  %1457 = vmatprep.subr.mxu0 0.0
  %1458 = vmatpush1.msra.mxu0 0.0
  %1459 = vmatprep.subr.mxu0 0.0
  %1460 = vmatpush1.msra.mxu0 0.0
  %1461 = vmatprep.subr.mxu0 0.0
  %1462 = vmatpush1.msra.mxu0 0.0
  %1463 = vmatprep.subr.mxu0 0.0
  %1464 = vmatpush1.msra.mxu0 0.0
  %1465 = vmatprep.subr.mxu0 0.0
  %1466 = vmatpush1.msra.mxu0 0.0
  %1467 = vmatprep.subr.mxu0 0.0
  %1468 = vmatpush1.msra.mxu0 0.0
  %1469 = vmatprep.subr.mxu0 0.0
  %1470 = vmatpush1.msra.mxu0 0.0
  %1471 = vmatprep.subr.mxu0 0.0
  %1472 = vmatpush1.msra.mxu0 0.0
  %1473 = vmatprep.subr.mxu0 0.0
  %1474 = vmatpush1.msra.mxu0 0.0
  %1475 = vmatprep.subr.mxu0 0.0
  %1476 = vmatpush1.msra.mxu0 0.0
  %1477 = vmatprep.subr.mxu0 0.0
  %1478 = vmatpush1.msra.mxu0 0.0
  %1479 = vmatprep.subr.mxu0 0.0
  %1480 = vmatpush1.msra.mxu0 0.0
  %1481 = vmatprep.subr.mxu0 0.0
  %1482 = vmatpush1.msra.mxu0 0.0
  %1483 = vmatprep.subr.mxu0 0.0
  %1484 = vmatpush1.msra.mxu0 0.0
  %1485 = vmatprep.subr.mxu0 0.0
  %1486 = vmatpush1.msra.mxu0 0.0
  %1487 = vmatprep.subr.mxu0 0.0
  %1488 = vmatpush1.msra.mxu0 0.0
  %1489 = vmatprep.subr.mxu0 0.0
  %1490 = vmatpush1.msra.mxu0 0.0
  %1491 = vmatprep.subr.mxu0 0.0
  %1492 = vmatpush1.msra.mxu0 0.0
  %1493 = vmatprep.subr.mxu0 0.0
  %1494 = vmatpush1.msra.mxu0 0.0
  %1495 = vmatprep.subr.mxu0 0.0
  %1496 = vmatpush1.msra.mxu0 0.0
  %1497 = vmatprep.subr.mxu0 0.0
  %1498 = vmatpush1.msra.mxu0 0.0
  %1499 = vmatprep.mubr.f32.mxu0 0.0
  %1500 = vmatmul.mubr.f32.gmra.mrb[0].mxu0 %v1433
  %v1501 = vpop.f32.mrb[0].mxu0
  %v1502 = vadd.f32 0.0, %v1501
  %v1503 = vpop.f32.mrb[0].mxu0
  %1504 = vdwg.mxu0
  %v1505 = vadd.f32 %v1432, %v1502
  %v1506 = vxor.u32 %v1505, 2147483648
  %v1507 = vmul.f32 %v1506, 1.442695
  %v1508 = vpow.pop %v1507
  %v1509 = vadd.f32 %v1508, 1.0
  %v1510 = vrcp.pop %v1509
  %v1511 = vmul.f32 1.0, %v1510
  %v1512 = vtanh.pop %v1505
  %v1513 = vmul.f32 %v1511, %v1413
  %1515 = vrot.lane.b32.xlu0 %v1512, 32
  %v1516 = vpop.permute.xlu0 %1515
  %v1518 = vmul.f32 %v1511, %v1516
  %1520 = vrot.lane.b32.xlu0 %v1518, 32
  %v1521 = vpop.permute.xlu0 %1520
  %v1523 = vadd.f32 %v1513, %v1521
  %v1524 = vtanh.pop %v1523
  %1526 = vrot.lane.b32.xlu0 %v1524, 32
  %v1527 = vpop.permute.xlu0 %1526
  %v1529 = vmul.f32 %v1511, %v1527
  %1531 = vrot.lane.b32.xlu0 %v1529, 64
  %v1532 = vpop.permute.xlu0 %1531
  %s1534 = scalar_lea.vmem %s5, 4
  %1535 = vst.msk [vmem:[%s1534] sm:$0x3] %vm1314, %v1532
  %1536 = vrot.lane.b32.xlu0 %v1529, 48
  %v1537 = vpop.permute.xlu0 %1536
  %s1539 = scalar_lea.vmem %s6, 10
  %1540 = vst.msk [vmem:[%s1539] sm:$0x3] %vm1314, %v1537
  %s1541 = scalar_lea.vmem [#allocation4], 6
  %v1542 = vld [vmem:[%s1541] sm:$0x3]
  %v1543 = vsel %vm27, %v1532, 0
  %1545 = vmatprep.subr.mxu0 0.0
  %1546 = vmatpush1.msra.mxu0 %v1210
  %1547 = vmatprep.subr.mxu0 0.0
  %1548 = vmatpush1.msra.mxu0 %v1211
  %1549 = vmatprep.subr.mxu0 0.0
  %1550 = vmatpush1.msra.mxu0 %v1212
  %1551 = vmatprep.subr.mxu0 0.0
  %1552 = vmatpush1.msra.mxu0 %v1213
  %1553 = vmatprep.subr.mxu0 0.0
  %1554 = vmatpush1.msra.mxu0 0.0
  %1555 = vmatprep.subr.mxu0 0.0
  %1556 = vmatpush1.msra.mxu0 0.0
  %1557 = vmatprep.subr.mxu0 0.0
  %1558 = vmatpush1.msra.mxu0 0.0
  %1559 = vmatprep.subr.mxu0 0.0
  %1560 = vmatpush1.msra.mxu0 0.0
  %1561 = vmatprep.subr.mxu0 0.0
  %1562 = vmatpush1.msra.mxu0 0.0
  %1563 = vmatprep.subr.mxu0 0.0
  %1564 = vmatpush1.msra.mxu0 0.0
  %1565 = vmatprep.subr.mxu0 0.0
  %1566 = vmatpush1.msra.mxu0 0.0
  %1567 = vmatprep.subr.mxu0 0.0
  %1568 = vmatpush1.msra.mxu0 0.0
  %1569 = vmatprep.subr.mxu0 0.0
  %1570 = vmatpush1.msra.mxu0 0.0
  %1571 = vmatprep.subr.mxu0 0.0
  %1572 = vmatpush1.msra.mxu0 0.0
  %1573 = vmatprep.subr.mxu0 0.0
  %1574 = vmatpush1.msra.mxu0 0.0
  %1575 = vmatprep.subr.mxu0 0.0
  %1576 = vmatpush1.msra.mxu0 0.0
  %1577 = vmatprep.subr.mxu0 0.0
  %1578 = vmatpush1.msra.mxu0 0.0
  %1579 = vmatprep.subr.mxu0 0.0
  %1580 = vmatpush1.msra.mxu0 0.0
  %1581 = vmatprep.subr.mxu0 0.0
  %1582 = vmatpush1.msra.mxu0 0.0
  %1583 = vmatprep.subr.mxu0 0.0
  %1584 = vmatpush1.msra.mxu0 0.0
  %1585 = vmatprep.subr.mxu0 0.0
  %1586 = vmatpush1.msra.mxu0 0.0
  %1587 = vmatprep.subr.mxu0 0.0
  %1588 = vmatpush1.msra.mxu0 0.0
  %1589 = vmatprep.subr.mxu0 0.0
  %1590 = vmatpush1.msra.mxu0 0.0
  %1591 = vmatprep.subr.mxu0 0.0
  %1592 = vmatpush1.msra.mxu0 0.0
  %1593 = vmatprep.subr.mxu0 0.0
  %1594 = vmatpush1.msra.mxu0 0.0
  %1595 = vmatprep.subr.mxu0 0.0
  %1596 = vmatpush1.msra.mxu0 0.0
  %1597 = vmatprep.subr.mxu0 0.0
  %1598 = vmatpush1.msra.mxu0 0.0
  %1599 = vmatprep.subr.mxu0 0.0
  %1600 = vmatpush1.msra.mxu0 0.0
  %1601 = vmatprep.subr.mxu0 0.0
  %1602 = vmatpush1.msra.mxu0 0.0
  %1603 = vmatprep.subr.mxu0 0.0
  %1604 = vmatpush1.msra.mxu0 0.0
  %1605 = vmatprep.subr.mxu0 0.0
  %1606 = vmatpush1.msra.mxu0 0.0
  %1607 = vmatprep.subr.mxu0 0.0
  %1608 = vmatpush1.msra.mxu0 0.0
  %1609 = vmatprep.mubr.f32.mxu0 0.0
  %1610 = vmatmul.mubr.f32.gmra.mrb[0].mxu0 %v1543
  %v1611 = vpop.f32.mrb[0].mxu0
  %v1612 = vadd.f32 0.0, %v1611
  %v1613 = vpop.f32.mrb[0].mxu0
  %1614 = vdwg.mxu0
  %v1615 = vadd.f32 %v1542, %v1612
  %v1616 = vxor.u32 %v1615, 2147483648
  %v1617 = vmul.f32 %v1616, 1.442695
  %v1618 = vpow.pop %v1617
  %v1619 = vadd.f32 %v1618, 1.0
  %v1620 = vrcp.pop %v1619
  %v1621 = vmul.f32 1.0, %v1620
  %v1622 = vtanh.pop %v1615
  %v1623 = vmul.f32 %v1621, %v1523
  %1625 = vrot.lane.b32.xlu0 %v1622, 32
  %v1626 = vpop.permute.xlu0 %1625
  %v1628 = vmul.f32 %v1621, %v1626
  %1630 = vrot.lane.b32.xlu0 %v1628, 32
  %v1631 = vpop.permute.xlu0 %1630
  %v1633 = vadd.f32 %v1623, %v1631
  %v1634 = vtanh.pop %v1633
  %1636 = vrot.lane.b32.xlu0 %v1634, 32
  %v1637 = vpop.permute.xlu0 %1636
  %v1639 = vmul.f32 %v1621, %v1637
  %1641 = vrot.lane.b32.xlu0 %v1639, 64
  %v1642 = vpop.permute.xlu0 %1641
  %s1644 = scalar_lea.vmem %s5, 6
  %1645 = vst.msk [vmem:[%s1644] sm:$0x3] %vm1314, %v1642
  %1646 = vrot.lane.b32.xlu0 %v1639, 48
  %v1647 = vpop.permute.xlu0 %1646
  %s1649 = scalar_lea.vmem %s6, 8
  %1650 = vst.msk [vmem:[%s1649] sm:$0x3] %vm1314, %v1647
  %s1651 = scalar_lea.vmem [#allocation4], 8
  %v1652 = vld [vmem:[%s1651] sm:$0x3]
  %v1653 = vsel %vm27, %v1642, 0
  %1655 = vmatprep.subr.mxu0 0.0
  %1656 = vmatpush1.msra.mxu0 %v1210
  %1657 = vmatprep.subr.mxu0 0.0
  %1658 = vmatpush1.msra.mxu0 %v1211
  %1659 = vmatprep.subr.mxu0 0.0
  %1660 = vmatpush1.msra.mxu0 %v1212
  %1661 = vmatprep.subr.mxu0 0.0
  %1662 = vmatpush1.msra.mxu0 %v1213
  %1663 = vmatprep.subr.mxu0 0.0
  %1664 = vmatpush1.msra.mxu0 0.0
  %1665 = vmatprep.subr.mxu0 0.0
  %1666 = vmatpush1.msra.mxu0 0.0
  %1667 = vmatprep.subr.mxu0 0.0
  %1668 = vmatpush1.msra.mxu0 0.0
  %1669 = vmatprep.subr.mxu0 0.0
  %1670 = vmatpush1.msra.mxu0 0.0
  %1671 = vmatprep.subr.mxu0 0.0
  %1672 = vmatpush1.msra.mxu0 0.0
  %1673 = vmatprep.subr.mxu0 0.0
  %1674 = vmatpush1.msra.mxu0 0.0
  %1675 = vmatprep.subr.mxu0 0.0
  %1676 = vmatpush1.msra.mxu0 0.0
  %1677 = vmatprep.subr.mxu0 0.0
  %1678 = vmatpush1.msra.mxu0 0.0
  %1679 = vmatprep.subr.mxu0 0.0
  %1680 = vmatpush1.msra.mxu0 0.0
  %1681 = vmatprep.subr.mxu0 0.0
  %1682 = vmatpush1.msra.mxu0 0.0
  %1683 = vmatprep.subr.mxu0 0.0
  %1684 = vmatpush1.msra.mxu0 0.0
  %1685 = vmatprep.subr.mxu0 0.0
  %1686 = vmatpush1.msra.mxu0 0.0
  %1687 = vmatprep.subr.mxu0 0.0
  %1688 = vmatpush1.msra.mxu0 0.0
  %1689 = vmatprep.subr.mxu0 0.0
  %1690 = vmatpush1.msra.mxu0 0.0
  %1691 = vmatprep.subr.mxu0 0.0
  %1692 = vmatpush1.msra.mxu0 0.0
  %1693 = vmatprep.subr.mxu0 0.0
  %1694 = vmatpush1.msra.mxu0 0.0
  %1695 = vmatprep.subr.mxu0 0.0
  %1696 = vmatpush1.msra.mxu0 0.0
  %1697 = vmatprep.subr.mxu0 0.0
  %1698 = vmatpush1.msra.mxu0 0.0
  %1699 = vmatprep.subr.mxu0 0.0
  %1700 = vmatpush1.msra.mxu0 0.0
  %1701 = vmatprep.subr.mxu0 0.0
  %1702 = vmatpush1.msra.mxu0 0.0
  %1703 = vmatprep.subr.mxu0 0.0
  %1704 = vmatpush1.msra.mxu0 0.0
  %1705 = vmatprep.subr.mxu0 0.0
  %1706 = vmatpush1.msra.mxu0 0.0
  %1707 = vmatprep.subr.mxu0 0.0
  %1708 = vmatpush1.msra.mxu0 0.0
  %1709 = vmatprep.subr.mxu0 0.0
  %1710 = vmatpush1.msra.mxu0 0.0
  %1711 = vmatprep.subr.mxu0 0.0
  %1712 = vmatpush1.msra.mxu0 0.0
  %1713 = vmatprep.subr.mxu0 0.0
  %1714 = vmatpush1.msra.mxu0 0.0
  %1715 = vmatprep.subr.mxu0 0.0
  %1716 = vmatpush1.msra.mxu0 0.0
  %1717 = vmatprep.subr.mxu0 0.0
  %1718 = vmatpush1.msra.mxu0 0.0
  %1719 = vmatprep.mubr.f32.mxu0 0.0
  %1720 = vmatmul.mubr.f32.gmra.mrb[0].mxu0 %v1653
  %v1721 = vpop.f32.mrb[0].mxu0
  %v1722 = vadd.f32 0.0, %v1721
  %v1723 = vpop.f32.mrb[0].mxu0
  %1724 = vdwg.mxu0
  %v1725 = vadd.f32 %v1652, %v1722
  %v1726 = vxor.u32 %v1725, 2147483648
  %v1727 = vmul.f32 %v1726, 1.442695
  %v1728 = vpow.pop %v1727
  %v1729 = vadd.f32 %v1728, 1.0
  %v1730 = vrcp.pop %v1729
  %v1731 = vmul.f32 1.0, %v1730
  %v1732 = vtanh.pop %v1725
  %v1733 = vmul.f32 %v1731, %v1633
  %1735 = vrot.lane.b32.xlu0 %v1732, 32
  %v1736 = vpop.permute.xlu0 %1735
  %v1738 = vmul.f32 %v1731, %v1736
  %1740 = vrot.lane.b32.xlu0 %v1738, 32
  %v1741 = vpop.permute.xlu0 %1740
  %v1743 = vadd.f32 %v1733, %v1741
  %v1744 = vtanh.pop %v1743
  %1746 = vrot.lane.b32.xlu0 %v1744, 32
  %v1747 = vpop.permute.xlu0 %1746
  %v1749 = vmul.f32 %v1731, %v1747
  %1751 = vrot.lane.b32.xlu0 %v1749, 64
  %v1752 = vpop.permute.xlu0 %1751
  %s1754 = scalar_lea.vmem %s5, 8
  %1755 = vst.msk [vmem:[%s1754] sm:$0x3] %vm1314, %v1752
  %1756 = vrot.lane.b32.xlu0 %v1749, 48
  %v1757 = vpop.permute.xlu0 %1756
  %s1759 = scalar_lea.vmem %s6, 6
  %1760 = vst.msk [vmem:[%s1759] sm:$0x3] %vm1314, %v1757
  %s1761 = scalar_lea.vmem [#allocation4], 10
  %v1762 = vld [vmem:[%s1761] sm:$0x3]
  %v1763 = vsel %vm27, %v1752, 0
  %1765 = vmatprep.subr.mxu0 0.0
  %1766 = vmatpush1.msra.mxu0 %v1210
  %1767 = vmatprep.subr.mxu0 0.0
  %1768 = vmatpush1.msra.mxu0 %v1211
  %1769 = vmatprep.subr.mxu0 0.0
  %1770 = vmatpush1.msra.mxu0 %v1212
  %1771 = vmatprep.subr.mxu0 0.0
  %1772 = vmatpush1.msra.mxu0 %v1213
  %1773 = vmatprep.subr.mxu0 0.0
  %1774 = vmatpush1.msra.mxu0 0.0
  %1775 = vmatprep.subr.mxu0 0.0
  %1776 = vmatpush1.msra.mxu0 0.0
  %1777 = vmatprep.subr.mxu0 0.0
  %1778 = vmatpush1.msra.mxu0 0.0
  %1779 = vmatprep.subr.mxu0 0.0
  %1780 = vmatpush1.msra.mxu0 0.0
  %1781 = vmatprep.subr.mxu0 0.0
  %1782 = vmatpush1.msra.mxu0 0.0
  %1783 = vmatprep.subr.mxu0 0.0
  %1784 = vmatpush1.msra.mxu0 0.0
  %1785 = vmatprep.subr.mxu0 0.0
  %1786 = vmatpush1.msra.mxu0 0.0
  %1787 = vmatprep.subr.mxu0 0.0
  %1788 = vmatpush1.msra.mxu0 0.0
  %1789 = vmatprep.subr.mxu0 0.0
  %1790 = vmatpush1.msra.mxu0 0.0
  %1791 = vmatprep.subr.mxu0 0.0
  %1792 = vmatpush1.msra.mxu0 0.0
  %1793 = vmatprep.subr.mxu0 0.0
  %1794 = vmatpush1.msra.mxu0 0.0
  %1795 = vmatprep.subr.mxu0 0.0
  %1796 = vmatpush1.msra.mxu0 0.0
  %1797 = vmatprep.subr.mxu0 0.0
  %1798 = vmatpush1.msra.mxu0 0.0
  %1799 = vmatprep.subr.mxu0 0.0
  %1800 = vmatpush1.msra.mxu0 0.0
  %1801 = vmatprep.subr.mxu0 0.0
  %1802 = vmatpush1.msra.mxu0 0.0
  %1803 = vmatprep.subr.mxu0 0.0
  %1804 = vmatpush1.msra.mxu0 0.0
  %1805 = vmatprep.subr.mxu0 0.0
  %1806 = vmatpush1.msra.mxu0 0.0
  %1807 = vmatprep.subr.mxu0 0.0
  %1808 = vmatpush1.msra.mxu0 0.0
  %1809 = vmatprep.subr.mxu0 0.0
  %1810 = vmatpush1.msra.mxu0 0.0
  %1811 = vmatprep.subr.mxu0 0.0
  %1812 = vmatpush1.msra.mxu0 0.0
  %1813 = vmatprep.subr.mxu0 0.0
  %1814 = vmatpush1.msra.mxu0 0.0
  %1815 = vmatprep.subr.mxu0 0.0
  %1816 = vmatpush1.msra.mxu0 0.0
  %1817 = vmatprep.subr.mxu0 0.0
  %1818 = vmatpush1.msra.mxu0 0.0
  %1819 = vmatprep.subr.mxu0 0.0
  %1820 = vmatpush1.msra.mxu0 0.0
  %1821 = vmatprep.subr.mxu0 0.0
  %1822 = vmatpush1.msra.mxu0 0.0
  %1823 = vmatprep.subr.mxu0 0.0
  %1824 = vmatpush1.msra.mxu0 0.0
  %1825 = vmatprep.subr.mxu0 0.0
  %1826 = vmatpush1.msra.mxu0 0.0
  %1827 = vmatprep.subr.mxu0 0.0
  %1828 = vmatpush1.msra.mxu0 0.0
  %1829 = vmatprep.mubr.f32.mxu0 0.0
  %1830 = vmatmul.mubr.f32.gmra.mrb[0].mxu0 %v1763
  %v1831 = vpop.f32.mrb[0].mxu0
  %v1832 = vadd.f32 0.0, %v1831
  %v1833 = vpop.f32.mrb[0].mxu0
  %1834 = vdwg.mxu0
  %v1835 = vadd.f32 %v1762, %v1832
  %v1836 = vxor.u32 %v1835, 2147483648
  %v1837 = vmul.f32 %v1836, 1.442695
  %v1838 = vpow.pop %v1837
  %v1839 = vadd.f32 %v1838, 1.0
  %v1840 = vrcp.pop %v1839
  %v1841 = vmul.f32 1.0, %v1840
  %v1842 = vtanh.pop %v1835
  %v1843 = vmul.f32 %v1841, %v1743
  %1845 = vrot.lane.b32.xlu0 %v1842, 32
  %v1846 = vpop.permute.xlu0 %1845
  %v1848 = vmul.f32 %v1841, %v1846
  %1850 = vrot.lane.b32.xlu0 %v1848, 32
  %v1851 = vpop.permute.xlu0 %1850
  %v1853 = vadd.f32 %v1843, %v1851
  %v1854 = vtanh.pop %v1853
  %1856 = vrot.lane.b32.xlu0 %v1854, 32
  %v1857 = vpop.permute.xlu0 %1856
  %v1859 = vmul.f32 %v1841, %v1857
  %1861 = vrot.lane.b32.xlu0 %v1859, 64
  %v1862 = vpop.permute.xlu0 %1861
  %s1864 = scalar_lea.vmem %s5, 10
  %1865 = vst.msk [vmem:[%s1864] sm:$0x3] %vm1314, %v1862
  %1866 = vrot.lane.b32.xlu0 %v1859, 48
  %v1867 = vpop.permute.xlu0 %1866
  %s1869 = scalar_lea.vmem %s6, 4
  %1870 = vst.msk [vmem:[%s1869] sm:$0x3] %vm1314, %v1867
  %s1871 = scalar_lea.vmem [#allocation4], 12
  %v1872 = vld [vmem:[%s1871] sm:$0x3]
  %v1873 = vsel %vm27, %v1862, 0
  %1875 = vmatprep.subr.mxu0 0.0
  %1876 = vmatpush1.msra.mxu0 %v1210
  %1877 = vmatprep.subr.mxu0 0.0
  %1878 = vmatpush1.msra.mxu0 %v1211
  %1879 = vmatprep.subr.mxu0 0.0
  %1880 = vmatpush1.msra.mxu0 %v1212
  %1881 = vmatprep.subr.mxu0 0.0
  %1882 = vmatpush1.msra.mxu0 %v1213
  %1883 = vmatprep.subr.mxu0 0.0
  %1884 = vmatpush1.msra.mxu0 0.0
  %1885 = vmatprep.subr.mxu0 0.0
  %1886 = vmatpush1.msra.mxu0 0.0
  %1887 = vmatprep.subr.mxu0 0.0
  %1888 = vmatpush1.msra.mxu0 0.0
  %1889 = vmatprep.subr.mxu0 0.0
  %1890 = vmatpush1.msra.mxu0 0.0
  %1891 = vmatprep.subr.mxu0 0.0
  %1892 = vmatpush1.msra.mxu0 0.0
  %1893 = vmatprep.subr.mxu0 0.0
  %1894 = vmatpush1.msra.mxu0 0.0
  %1895 = vmatprep.subr.mxu0 0.0
  %1896 = vmatpush1.msra.mxu0 0.0
  %1897 = vmatprep.subr.mxu0 0.0
  %1898 = vmatpush1.msra.mxu0 0.0
  %1899 = vmatprep.subr.mxu0 0.0
  %1900 = vmatpush1.msra.mxu0 0.0
  %1901 = vmatprep.subr.mxu0 0.0
  %1902 = vmatpush1.msra.mxu0 0.0
  %1903 = vmatprep.subr.mxu0 0.0
  %1904 = vmatpush1.msra.mxu0 0.0
  %1905 = vmatprep.subr.mxu0 0.0
  %1906 = vmatpush1.msra.mxu0 0.0
  %1907 = vmatprep.subr.mxu0 0.0
  %1908 = vmatpush1.msra.mxu0 0.0
  %1909 = vmatprep.subr.mxu0 0.0
  %1910 = vmatpush1.msra.mxu0 0.0
  %1911 = vmatprep.subr.mxu0 0.0
  %1912 = vmatpush1.msra.mxu0 0.0
  %1913 = vmatprep.subr.mxu0 0.0
  %1914 = vmatpush1.msra.mxu0 0.0
  %1915 = vmatprep.subr.mxu0 0.0
  %1916 = vmatpush1.msra.mxu0 0.0
  %1917 = vmatprep.subr.mxu0 0.0
  %1918 = vmatpush1.msra.mxu0 0.0
  %1919 = vmatprep.subr.mxu0 0.0
  %1920 = vmatpush1.msra.mxu0 0.0
  %1921 = vmatprep.subr.mxu0 0.0
  %1922 = vmatpush1.msra.mxu0 0.0
  %1923 = vmatprep.subr.mxu0 0.0
  %1924 = vmatpush1.msra.mxu0 0.0
  %1925 = vmatprep.subr.mxu0 0.0
  %1926 = vmatpush1.msra.mxu0 0.0
  %1927 = vmatprep.subr.mxu0 0.0
  %1928 = vmatpush1.msra.mxu0 0.0
  %1929 = vmatprep.subr.mxu0 0.0
  %1930 = vmatpush1.msra.mxu0 0.0
  %1931 = vmatprep.subr.mxu0 0.0
  %1932 = vmatpush1.msra.mxu0 0.0
  %1933 = vmatprep.subr.mxu0 0.0
  %1934 = vmatpush1.msra.mxu0 0.0
  %1935 = vmatprep.subr.mxu0 0.0
  %1936 = vmatpush1.msra.mxu0 0.0
  %1937 = vmatprep.subr.mxu0 0.0
  %1938 = vmatpush1.msra.mxu0 0.0
  %1939 = vmatprep.mubr.f32.mxu0 0.0
  %1940 = vmatmul.mubr.f32.gmra.mrb[0].mxu0 %v1873
  %v1941 = vpop.f32.mrb[0].mxu0
  %v1942 = vadd.f32 0.0, %v1941
  %v1943 = vpop.f32.mrb[0].mxu0
  %1944 = vdwg.mxu0
  %v1945 = vadd.f32 %v1872, %v1942
  %v1946 = vxor.u32 %v1945, 2147483648
  %v1947 = vmul.f32 %v1946, 1.442695
  %v1948 = vpow.pop %v1947
  %v1949 = vadd.f32 %v1948, 1.0
  %v1950 = vrcp.pop %v1949
  %v1951 = vmul.f32 1.0, %v1950
  %v1952 = vtanh.pop %v1945
  %v1953 = vmul.f32 %v1951, %v1853
  %1955 = vrot.lane.b32.xlu0 %v1952, 32
  %v1956 = vpop.permute.xlu0 %1955
  %v1958 = vmul.f32 %v1951, %v1956
  %1960 = vrot.lane.b32.xlu0 %v1958, 32
  %v1961 = vpop.permute.xlu0 %1960
  %v1963 = vadd.f32 %v1953, %v1961
  %v1964 = vtanh.pop %v1963
  %1966 = vrot.lane.b32.xlu0 %v1964, 32
  %v1967 = vpop.permute.xlu0 %1966
  %v1969 = vmul.f32 %v1951, %v1967
  %1971 = vrot.lane.b32.xlu0 %v1969, 64
  %v1972 = vpop.permute.xlu0 %1971
  %s1974 = scalar_lea.vmem %s5, 12
  %1975 = vst.msk [vmem:[%s1974] sm:$0x3] %vm1314, %v1972
  %1976 = vrot.lane.b32.xlu0 %v1969, 48
  %v1977 = vpop.permute.xlu0 %1976
  %s1979 = scalar_lea.vmem %s6, 2
  %1980 = vst.msk [vmem:[%s1979] sm:$0x3] %vm1314, %v1977
  %s1981 = scalar_lea.vmem [#allocation4], 14
  %v1982 = vld [vmem:[%s1981] sm:$0x3]
  %v1983 = vsel %vm27, %v1972, 0
  %1985 = vmatprep.subr.mxu0 0.0
  %1986 = vmatpush1.msra.mxu0 %v1210
  %1987 = vmatprep.subr.mxu0 0.0
  %1988 = vmatpush1.msra.mxu0 %v1211
  %1989 = vmatprep.subr.mxu0 0.0
  %1990 = vmatpush1.msra.mxu0 %v1212
  %1991 = vmatprep.subr.mxu0 0.0
  %1992 = vmatpush1.msra.mxu0 %v1213
  %1993 = vmatprep.subr.mxu0 0.0
  %1994 = vmatpush1.msra.mxu0 0.0
  %1995 = vmatprep.subr.mxu0 0.0
  %1996 = vmatpush1.msra.mxu0 0.0
  %1997 = vmatprep.subr.mxu0 0.0
  %1998 = vmatpush1.msra.mxu0 0.0
  %1999 = vmatprep.subr.mxu0 0.0
  %2000 = vmatpush1.msra.mxu0 0.0
  %2001 = vmatprep.subr.mxu0 0.0
  %2002 = vmatpush1.msra.mxu0 0.0
  %2003 = vmatprep.subr.mxu0 0.0
  %2004 = vmatpush1.msra.mxu0 0.0
  %2005 = vmatprep.subr.mxu0 0.0
  %2006 = vmatpush1.msra.mxu0 0.0
  %2007 = vmatprep.subr.mxu0 0.0
  %2008 = vmatpush1.msra.mxu0 0.0
  %2009 = vmatprep.subr.mxu0 0.0
  %2010 = vmatpush1.msra.mxu0 0.0
  %2011 = vmatprep.subr.mxu0 0.0
  %2012 = vmatpush1.msra.mxu0 0.0
  %2013 = vmatprep.subr.mxu0 0.0
  %2014 = vmatpush1.msra.mxu0 0.0
  %2015 = vmatprep.subr.mxu0 0.0
  %2016 = vmatpush1.msra.mxu0 0.0
  %2017 = vmatprep.subr.mxu0 0.0
  %2018 = vmatpush1.msra.mxu0 0.0
  %2019 = vmatprep.subr.mxu0 0.0
  %2020 = vmatpush1.msra.mxu0 0.0
  %2021 = vmatprep.subr.mxu0 0.0
  %2022 = vmatpush1.msra.mxu0 0.0
  %2023 = vmatprep.subr.mxu0 0.0
  %2024 = vmatpush1.msra.mxu0 0.0
  %2025 = vmatprep.subr.mxu0 0.0
  %2026 = vmatpush1.msra.mxu0 0.0
  %2027 = vmatprep.subr.mxu0 0.0
  %2028 = vmatpush1.msra.mxu0 0.0
  %2029 = vmatprep.subr.mxu0 0.0
  %2030 = vmatpush1.msra.mxu0 0.0
  %2031 = vmatprep.subr.mxu0 0.0
  %2032 = vmatpush1.msra.mxu0 0.0
  %2033 = vmatprep.subr.mxu0 0.0
  %2034 = vmatpush1.msra.mxu0 0.0
  %2035 = vmatprep.subr.mxu0 0.0
  %2036 = vmatpush1.msra.mxu0 0.0
  %2037 = vmatprep.subr.mxu0 0.0
  %2038 = vmatpush1.msra.mxu0 0.0
  %2039 = vmatprep.subr.mxu0 0.0
  %2040 = vmatpush1.msra.mxu0 0.0
  %2041 = vmatprep.subr.mxu0 0.0
  %2042 = vmatpush1.msra.mxu0 0.0
  %2043 = vmatprep.subr.mxu0 0.0
  %2044 = vmatpush1.msra.mxu0 0.0
  %2045 = vmatprep.subr.mxu0 0.0
  %2046 = vmatpush1.msra.mxu0 0.0
  %2047 = vmatprep.subr.mxu0 0.0
  %2048 = vmatpush1.msra.mxu0 0.0
  %2049 = vmatprep.mubr.f32.mxu0 0.0
  %2050 = vmatmul.mubr.f32.gmra.mrb[0].mxu0 %v1983
  %v2051 = vpop.f32.mrb[0].mxu0
  %v2052 = vadd.f32 0.0, %v2051
  %v2053 = vpop.f32.mrb[0].mxu0
  %2054 = vdwg.mxu0
  %v2055 = vadd.f32 %v1982, %v2052
  %v2056 = vxor.u32 %v2055, 2147483648
  %v2057 = vmul.f32 %v2056, 1.442695
  %v2058 = vpow.pop %v2057
  %v2059 = vadd.f32 %v2058, 1.0
  %v2060 = vrcp.pop %v2059
  %v2061 = vmul.f32 1.0, %v2060
  %v2062 = vtanh.pop %v2055
  %v2063 = vmul.f32 %v2061, %v1963
  %2065 = vrot.lane.b32.xlu0 %v2062, 32
  %v2066 = vpop.permute.xlu0 %2065
  %v2068 = vmul.f32 %v2061, %v2066
  %2070 = vrot.lane.b32.xlu0 %v2068, 32
  %v2071 = vpop.permute.xlu0 %2070
  %v2073 = vadd.f32 %v2063, %v2071
  %v2074 = vtanh.pop %v2073
  %2076 = vrot.lane.b32.xlu0 %v2074, 32
  %v2077 = vpop.permute.xlu0 %2076
  %v2079 = vmul.f32 %v2061, %v2077
  %2081 = vrot.lane.b32.xlu0 %v2079, 64
  %v2082 = vpop.permute.xlu0 %2081
  %s2084 = scalar_lea.vmem %s5, 14
  %2085 = vst.msk [vmem:[%s2084] sm:$0x3] %vm1314, %v2082
  %2086 = vrot.lane.b32.xlu0 %v2079, 48
  %v2087 = vpop.permute.xlu0 %2086
  %2089 = vst.msk [vmem:[%s6] sm:$0x3] %vm1314, %v2087
  // Predicated region
  $region22: #{multi_lstm_encode.1} parent=0 // pred_check
    _
  $region23: #{multi_lstm_encode.1} parent=0 // pred_check_branch
    %2091 = sbr.rel (0) target = $region25
  $region24: #{multi_lstm_encode.1} parent=0 // pred_region
    _
  $region25: #{multi_lstm_encode.1} parent=0 // pred_fallthru
    _
  // Predicated region
  $region26: #{multi_lstm_encode.1} parent=0 // pred_check
    _
  $region27: #{multi_lstm_encode.1} parent=0 // pred_check_branch
    %2093 = sbr.rel (0) target = $region29
  $region28: #{multi_lstm_encode.1} parent=0 // pred_region
    _
  $region29: #{multi_lstm_encode.1} parent=0 // pred_fallthru
    _
  // Predicated region
  $region30: #{multi_lstm_encode.1} parent=0 // pred_check
    _
  $region31: #{multi_lstm_encode.1} parent=0 // pred_check_branch
    %2095 = sbr.rel (0) target = $region33
  $region32: #{multi_lstm_encode.1} parent=0 // pred_region
    _
  $region33: #{multi_lstm_encode.1} parent=0 // pred_fallthru
    _
  // Predicated region
  $region34: #{multi_lstm_encode.1} parent=0 // pred_check
    _
  $region35: #{multi_lstm_encode.1} parent=0 // pred_check_branch
    %2097 = sbr.rel (0) target = $region37
  $region36: #{multi_lstm_encode.1} parent=0 // pred_region
    _
  $region37: #{multi_lstm_encode.1} parent=0 // pred_fallthru
    _

</llo_original>
